<compile_context>
chip_gen: v7x
topology: tpu7x:2x2x1
jax: 0.10.0
libtpu: 0.0.40
codegen_flags: <defaults>
</compile_context>

<pallas_src>
import functools
import math

import jax
import jax.numpy as jnp
from jax.experimental import pallas as pl
from jax.experimental.pallas import tpu as pltpu


# ----------------------------------------------------------------------------
# Pallas kernel: one DecoderLayer step; grid = (num_layers,).
# The (B, T, D) activation is carried across layers in the resident out block.
# ----------------------------------------------------------------------------
def _decoder_stack_kernel(x_ref, enc_ref, la_bias_ref, pad_bias_ref,
                          wqkv1_ref, bqkv1_ref, wo1_ref, bo1_ref,
                          wq2_ref, bq2_ref, wkv2_ref, bkv2_ref, wo2_ref, bo2_ref,
                          fw1_ref, fb1_ref, fw2_ref, fb2_ref,
                          lng_ref, lnb_ref,
                          out_ref, attn1_ref, attn2_ref,
                          ctx_scr,
                          *, num_heads, head_dim, eps):
    layer = pl.program_id(0)
    B, T, D = out_ref.shape

    # First layer: seed the carried activation from the embedded input.
    # For layer > 0, out_ref already holds the previous layer's output
    # (constant block index across the layer axis => resident in VMEM).
    @pl.when(layer == 0)
    def _():
        out_ref[...] = x_ref[...]

    bf16 = jnp.bfloat16
    f32 = jnp.float32
    nt = (((1,), (1,)), ((), ()))   # contract last dims: q @ k^T without transpose

    # Hoist per-layer weight loads / LN params out of the batch loop.
    la_bias = la_bias_ref[...]                      # (T, T) additive causal bias
    wqkv1 = wqkv1_ref[0]; bqkv1 = bqkv1_ref[0]      # (D, 3D), (1, 3D)   (Q scaled)
    wo1 = wo1_ref[0];     bo1 = bo1_ref[0]          # (D, D),  (1, D)
    wq2 = wq2_ref[0];     bq2 = bq2_ref[0]          # (D, D),  (1, D)    (scaled)
    wkv2 = wkv2_ref[0];   bkv2 = bkv2_ref[0]        # (D, 2D), (1, 2D)
    wo2 = wo2_ref[0];     bo2 = bo2_ref[0]
    fw1 = fw1_ref[0];     fb1 = fb1_ref[0]          # (D, F),  (1, F)
    fw2 = fw2_ref[0];     fb2 = fb2_ref[0]          # (F, D),  (1, D)
    g1 = lng_ref[0, 0:1, :]; be1 = lnb_ref[0, 0:1, :]
    g2 = lng_ref[0, 1:2, :]; be2 = lnb_ref[0, 1:2, :]
    g3 = lng_ref[0, 2:3, :]; be3 = lnb_ref[0, 2:3, :]

    def layer_norm(v, g, b):
        mu = jnp.mean(v, axis=-1, keepdims=True)
        var = jnp.mean((v - mu) ** 2, axis=-1, keepdims=True)
        return (v - mu) * jax.lax.rsqrt(var + eps) * g + b

    def mha_heads(q, k, v, bias, attn_ref, b):
        # q: (Tq, D) f32 (1/sqrt(dh) already folded), k/v: (Tk, D) f32.
        # Per-head scores/softmax; context scattered into ctx_scr so the output
        # projection is a single full-K matmul afterwards.
        for h in range(num_heads):
            lo = h * head_dim
            hi = lo + head_dim
            qh = q[:, lo:hi].astype(bf16)                      # (Tq, dh)
            kh = k[:, lo:hi].astype(bf16)                      # (Tk, dh)
            vh = v[:, lo:hi].astype(bf16)                      # (Tk, dh)
            sc = jax.lax.dot_general(qh, kh, nt,
                                     preferred_element_type=f32) + bias
            m = jnp.max(sc, axis=-1, keepdims=True)
            e = jnp.exp(sc - m)
            s = jnp.sum(e, axis=-1, keepdims=True)
            p = e * pl.reciprocal(s, approx=True)              # softmax (EUP recip)
            attn_ref[0, b, h] = p
            ctx_scr[:, lo:hi] = jnp.dot(p.astype(bf16), vh,
                                        preferred_element_type=f32)

    for b in range(B):
        x = out_ref[b]                     # (T, D) f32 carried activation
        enc = enc_ref[b]                   # (S, D) bf16 encoder output
        pad_bias = pad_bias_ref[b]         # (1, S) additive padding bias

        # --- block 1: masked multi-head self attention + residual + LN1
        qkv = jnp.dot(x.astype(bf16), wqkv1,
                      preferred_element_type=f32) + bqkv1      # (T, 3D) fused QKV
        mha_heads(qkv[:, 0:D], qkv[:, D:2 * D], qkv[:, 2 * D:],
                  la_bias, attn1_ref, b)
        a1 = jnp.dot(ctx_scr[...].astype(bf16), wo1,
                     preferred_element_type=f32) + bo1         # one (T,D)@(D,D)
        s1 = layer_norm(x + a1, g1, be1)

        # --- block 2: cross attention to encoder output + residual + LN2
        q2 = jnp.dot(s1.astype(bf16), wq2,
                     preferred_element_type=f32) + bq2         # (T, D)
        kv = jnp.dot(enc, wkv2, preferred_element_type=f32) + bkv2  # (S, 2D) fused KV
        mha_heads(q2, kv[:, 0:D], kv[:, D:2 * D], pad_bias, attn2_ref, b)
        a2 = jnp.dot(ctx_scr[...].astype(bf16), wo2,
                     preferred_element_type=f32) + bo2
        s2 = layer_norm(s1 + a2, g2, be2)

        # --- position-wise FFN (ReLU) + residual + LN3 (dropout = identity)
        hid = jnp.maximum(
            jnp.dot(s2.astype(bf16), fw1, preferred_element_type=f32) + fb1, 0.0)
        ffn = jnp.dot(hid.astype(bf16), fw2, preferred_element_type=f32) + fb2
        out_ref[b] = layer_norm(s2 + ffn, g3, be3)


# ----------------------------------------------------------------------------
# Wrapper: one pallas_call for the entire decoder stack.
# ----------------------------------------------------------------------------
def decoder_stack_pallas(x, enc, la_mask, pad_mask, sp, num_heads, eps=1e-6):
    B, T, D = x.shape
    S = enc.shape[1]
    L = sp['mha1_w'].shape[0]
    H = num_heads
    F = sp['ffn_w1'].shape[-1]
    DH = D // H
    bf16 = jnp.bfloat16
    f32 = jnp.float32
    scale = 1.0 / math.sqrt(DH)

    # Additive mask biases precomputed once (no (B, T, S) broadcast DMA).
    la_bias = (1.0 - la_mask.astype(f32)) * (-1e9)                   # (T, T)
    pad_bias = ((1.0 - pad_mask.astype(f32)) * (-1e9))[:, None, :]   # (B, 1, S)

    # Host-side weight fusion: QKV concatenated, 1/sqrt(dh) folded into Wq/bq.
    w1, b1 = sp['mha1_w'], sp['mha1_b']
    w2, b2 = sp['mha2_w'], sp['mha2_b']
    wqkv1 = jnp.concatenate([w1[:, 0] * scale, w1[:, 1], w1[:, 2]],
                            axis=-1).astype(bf16)                    # (L, D, 3D)
    bqkv1 = jnp.concatenate([b1[:, 0] * scale, b1[:, 1], b1[:, 2]],
                            axis=-1)[:, None, :]                     # (L, 1, 3D)
    wo1 = w1[:, 3].astype(bf16)
    bo1 = b1[:, 3][:, None, :]
    wq2 = (w2[:, 0] * scale).astype(bf16)                            # (L, D, D)
    bq2 = (b2[:, 0] * scale)[:, None, :]
    wkv2 = jnp.concatenate([w2[:, 1], w2[:, 2]], axis=-1).astype(bf16)  # (L, D, 2D)
    bkv2 = jnp.concatenate([b2[:, 1], b2[:, 2]], axis=-1)[:, None, :]
    wo2 = w2[:, 3].astype(bf16)
    bo2 = b2[:, 3][:, None, :]

    kernel = functools.partial(_decoder_stack_kernel,
                               num_heads=H, head_dim=DH, eps=eps)

    def whole(shape):
        return pl.BlockSpec(shape, lambda l, n=len(shape): (0,) * n)

    def per_layer(shape):
        return pl.BlockSpec((1,) + shape, lambda l, n=len(shape): (l,) + (0,) * n)

    in_specs = [
        whole((B, T, D)),                                   # x (embedded + pos enc)
        whole((B, S, D)),                                   # encoder output (bf16)
        whole((T, T)),                                      # look-ahead mask bias
        whole((B, 1, S)),                                   # padding mask bias
        per_layer((D, 3 * D)), per_layer((1, 3 * D)),       # self-attn fused QKV
        per_layer((D, D)), per_layer((1, D)),               # self-attn Wo, bo
        per_layer((D, D)), per_layer((1, D)),               # cross-attn Wq, bq
        per_layer((D, 2 * D)), per_layer((1, 2 * D)),       # cross-attn fused KV
        per_layer((D, D)), per_layer((1, D)),               # cross-attn Wo, bo
        per_layer((D, F)), per_layer((1, F)),               # FFN layer 1
        per_layer((F, D)), per_layer((1, D)),               # FFN layer 2
        per_layer((3, D)), per_layer((3, D)),               # LayerNorm gamma / beta
    ]
    out_specs = [
        whole((B, T, D)),                                            # carried output
        pl.BlockSpec((1, B, H, T, T), lambda l: (l, 0, 0, 0, 0)),    # attn block1
        pl.BlockSpec((1, B, H, T, S), lambda l: (l, 0, 0, 0, 0)),    # attn block2
    ]
    out_shape = [
        jax.ShapeDtypeStruct((B, T, D), f32),
        jax.ShapeDtypeStruct((L, B, H, T, T), f32),
        jax.ShapeDtypeStruct((L, B, H, T, S), f32),
    ]

    out, attn1, attn2 = pl.pallas_call(
        kernel,
        grid=(L,),
        in_specs=in_specs,
        out_specs=out_specs,
        out_shape=out_shape,
        scratch_shapes=[pltpu.VMEM((T, D), f32)],   # per-head context scratch
        # Alias the embedded-input buffer with the decoder output (same shape
        # and dtype) to avoid an extra (B, T, D) HBM allocation.
        input_output_aliases={0: 0},
        compiler_params=pltpu.CompilerParams(
            dimension_semantics=("arbitrary",),
            vmem_limit_bytes=64 * 1024 * 1024),
    )(x, enc.astype(bf16), la_bias, pad_bias,
      wqkv1, bqkv1, wo1, bo1,
      wq2, bq2, wkv2, bkv2, wo2, bo2,
      sp['ffn_w1'].astype(bf16), sp['ffn_b1'],
      sp['ffn_w2'].astype(bf16), sp['ffn_b2'],
      sp['ln_g'], sp['ln_b'])
    return out, attn1, attn2


# ----------------------------------------------------------------------------
# Glue: positional encoding, params, full decoder forward.
# ----------------------------------------------------------------------------
def positional_encoding(max_pos, d_model):
    pos = jnp.arange(max_pos, dtype=jnp.float32)[:, None]
    i = jnp.arange(d_model, dtype=jnp.float32)[None, :]
    angle_rates = 1.0 / jnp.power(10000.0, (2.0 * jnp.floor(i / 2.0)) / d_model)
    angles = pos * angle_rates
    even = (jnp.arange(d_model) % 2) == 0
    return jnp.where(even[None, :], jnp.sin(angles), jnp.cos(angles))


def init_decoder_params(key, num_layers, num_heads, d_model, ff_dim, vocab):
    ks = jax.random.split(key, 12)
    L = num_layers

    def nrm(k, shape, scale=0.02):
        return jax.random.normal(k, shape, jnp.float32) * scale

    return {
        'embedding': nrm(ks[0], (vocab, d_model)),
        'stack': {
            'mha1_w': nrm(ks[1], (L, 4, d_model, d_model)),
            'mha1_b': nrm(ks[2], (L, 4, d_model)),
            'mha2_w': nrm(ks[3], (L, 4, d_model, d_model)),
            'mha2_b': nrm(ks[4], (L, 4, d_model)),
            'ffn_w1': nrm(ks[5], (L, d_model, ff_dim)),
            'ffn_b1': nrm(ks[6], (L, 1, ff_dim)),
            'ffn_w2': nrm(ks[7], (L, ff_dim, d_model)),
            'ffn_b2': nrm(ks[8], (L, 1, d_model)),
            'ln_g': 1.0 + nrm(ks[9], (L, 3, d_model)),
            'ln_b': nrm(ks[10], (L, 3, d_model)),
        },
    }


def decoder_forward(params, x_ids, enc_output, look_ahead_mask, padding_mask,
                    num_heads, pos_enc):
    # Embedding lookup + sqrt(d_model) scale + positional encoding (glue).
    # TODO(synk): dropout layers are identity (inference semantics).
    d_model = params['embedding'].shape[1]
    T = x_ids.shape[1]
    x = params['embedding'][x_ids] * math.sqrt(d_model)
    x = x + pos_enc[:T][None, :, :]
    out, attn1, attn2 = decoder_stack_pallas(x, enc_output, look_ahead_mask,
                                             padding_mask, params['stack'],
                                             num_heads)
    attention_weights = {}
    for i in range(attn1.shape[0]):
        attention_weights[f'decoder_layer{i + 1}_block1_self_att'] = attn1[i]
        attention_weights[f'decoder_layer{i + 1}_block2_decenc_att'] = attn2[i]
    return out, attention_weights


# ----------------------------------------------------------------------------
# Pure-JAX f32 reference (for correctness check).
# ----------------------------------------------------------------------------
def _ref_ln(v, g, b, eps=1e-6):
    mu = v.mean(-1, keepdims=True)
    var = ((v - mu) ** 2).mean(-1, keepdims=True)
    return (v - mu) * jax.lax.rsqrt(var + eps) * g + b


def _ref_mha(q_in, kv_in, mask4, w, b, H):
    D = q_in.shape[-1]
    DH = D // H
    q = q_in @ w[0] + b[0]
    k = kv_in @ w[1] + b[1]
    v = kv_in @ w[2] + b[2]
    B, Tq, _ = q.shape
    Tk = k.shape[1]
    qh = q.reshape(B, Tq, H, DH)
    kh = k.reshape(B, Tk, H, DH)
    vh = v.reshape(B, Tk, H, DH)
    sc = jnp.einsum('bqhd,bkhd->bhqk', qh, kh) / math.sqrt(DH)
    sc = sc + (1.0 - mask4) * (-1e9)
    p = jax.nn.softmax(sc, axis=-1)
    ctx = jnp.einsum('bhqk,bkhd->bqhd', p, vh).reshape(B, Tq, D)
    return ctx @ w[3] + b[3], p


def decoder_forward_ref(params, x_ids, enc_output, la_mask, pad_mask,
                        num_heads, pos_enc):
    sp = params['stack']
    d_model = params['embedding'].shape[1]
    T = x_ids.shape[1]
    x = params['embedding'][x_ids] * math.sqrt(d_model)
    x = x + pos_enc[:T][None, :, :]
    la4 = la_mask[None, None, :, :]
    pad4 = pad_mask[:, None, None, :]
    attn = {}
    for i in range(sp['mha1_w'].shape[0]):
        a1, p1 = _ref_mha(x, x, la4, sp['mha1_w'][i],
                          sp['mha1_b'][i][:, None, :], num_heads)
        s1 = _ref_ln(x + a1, sp['ln_g'][i, 0], sp['ln_b'][i, 0])
        a2, p2 = _ref_mha(s1, enc_output, pad4, sp['mha2_w'][i],
                          sp['mha2_b'][i][:, None, :], num_heads)
        s2 = _ref_ln(s1 + a2, sp['ln_g'][i, 1], sp['ln_b'][i, 1])
        h = jnp.maximum(s2 @ sp['ffn_w1'][i] + sp['ffn_b1'][i], 0.0)
        f = h @ sp['ffn_w2'][i] + sp['ffn_b2'][i]
        x = _ref_ln(s2 + f, sp['ln_g'][i, 2], sp['ln_b'][i, 2])
        attn[f'decoder_layer{i + 1}_block1_self_att'] = p1
        attn[f'decoder_layer{i + 1}_block2_decenc_att'] = p2
    return x, attn


# ----------------------------------------------------------------------------
if __name__ == "__main__":
    B, T, S = 2, 8, 8
    d_model, num_heads, ff_dim = 32, 4, 64
    vocab, max_pos, num_layers = 50, 32, 2

    key = jax.random.PRNGKey(0)
    kp, kx, ke = jax.random.split(key, 3)

    params = init_decoder_params(kp, num_layers, num_heads, d_model, ff_dim, vocab)
    x_ids = jax.random.randint(kx, (B, T), 0, vocab)                    # (B, T) token ids
    enc_output = jax.random.normal(ke, (B, S, d_model), jnp.float32)    # (B, S, D)
    look_ahead_mask = jnp.tril(jnp.ones((T, T), jnp.float32))           # 1 = attend (causal)
    padding_mask = jnp.ones((B, S), jnp.float32)                        # no padding
    pos_enc = positional_encoding(max_pos, d_model)

    out, attn = decoder_forward(params, x_ids, enc_output, look_ahead_mask,
                                padding_mask, num_heads, pos_enc)
    jax.block_until_ready(out)

    ref_out, ref_attn = decoder_forward_ref(params, x_ids, enc_output,
                                            look_ahead_mask, padding_mask,
                                            num_heads, pos_enc)

    assert out.shape == (B, T, d_model)
    assert attn['decoder_layer1_block1_self_att'].shape == (B, num_heads, T, T)
    assert attn['decoder_layer1_block2_decenc_att'].shape == (B, num_heads, T, S)
    # bf16 matmul operands + approx reciprocal vs f32 reference -> loose-ish tol.
    assert jnp.allclose(out, ref_out, atol=2e-2, rtol=2e-2), \
        float(jnp.max(jnp.abs(out - ref_out)))
    for k in attn:
        assert jnp.allclose(attn[k], ref_attn[k], atol=2e-2, rtol=2e-2), k

    print("KERNEL_OK")
</pallas_src>

<mosaic_0001>
module attributes {stable_mosaic.version = 11 : i64} {
  func.func @_decoder_stack_kernel(%arg0: i32, %arg1: memref<2x8x32xf32, #tpu.memory_space<vmem>>, %arg2: memref<2x8x32xbf16, #tpu.memory_space<vmem>>, %arg3: memref<8x8xf32, #tpu.memory_space<vmem>>, %arg4: memref<2x1x8xf32, #tpu.memory_space<vmem>>, %arg5: memref<1x32x96xbf16, #tpu.memory_space<vmem>>, %arg6: memref<1x1x96xf32, #tpu.memory_space<vmem>>, %arg7: memref<1x32x32xbf16, #tpu.memory_space<vmem>>, %arg8: memref<1x1x32xf32, #tpu.memory_space<vmem>>, %arg9: memref<1x32x32xbf16, #tpu.memory_space<vmem>>, %arg10: memref<1x1x32xf32, #tpu.memory_space<vmem>>, %arg11: memref<1x32x64xbf16, #tpu.memory_space<vmem>>, %arg12: memref<1x1x64xf32, #tpu.memory_space<vmem>>, %arg13: memref<1x32x32xbf16, #tpu.memory_space<vmem>>, %arg14: memref<1x1x32xf32, #tpu.memory_space<vmem>>, %arg15: memref<1x32x64xbf16, #tpu.memory_space<vmem>>, %arg16: memref<1x1x64xf32, #tpu.memory_space<vmem>>, %arg17: memref<1x64x32xbf16, #tpu.memory_space<vmem>>, %arg18: memref<1x1x32xf32, #tpu.memory_space<vmem>>, %arg19: memref<1x3x32xf32, #tpu.memory_space<vmem>>, %arg20: memref<1x3x32xf32, #tpu.memory_space<vmem>>, %arg21: memref<2x8x32xf32, #tpu.memory_space<vmem>>, %arg22: memref<1x2x4x8x8xf32, #tpu.memory_space<vmem>>, %arg23: memref<1x2x4x8x8xf32, #tpu.memory_space<vmem>>, %arg24: memref<8x32xf32, #tpu.memory_space<vmem>>) attributes {dimension_semantics = [#tpu.dimension_semantics<arbitrary>], iteration_bounds = array<i64: 2>, scalar_prefetch = 0 : i64, scratch_operands = 1 : i64, tpu.core_type = #tpu.core_type<tc>, window_params = [{pipeline_mode = #tpu.pipeline_mode<synchronous>, transform_indices = @transform_0, window_bounds = array<i64: 2, 8, 32>}, {pipeline_mode = #tpu.pipeline_mode<synchronous>, transform_indices = @transform_1, window_bounds = array<i64: 2, 8, 32>}, {pipeline_mode = #tpu.pipeline_mode<synchronous>, transform_indices = @transform_2, window_bounds = array<i64: 8, 8>}, {pipeline_mode = #tpu.pipeline_mode<synchronous>, transform_indices = @transform_3, window_bounds = array<i64: 2, 1, 8>}, {transform_indices = @transform_4, window_bounds = array<i64: 1, 32, 96>}, {transform_indices = @transform_5, window_bounds = array<i64: 1, 1, 96>}, {transform_indices = @transform_6, window_bounds = array<i64: 1, 32, 32>}, {transform_indices = @transform_7, window_bounds = array<i64: 1, 1, 32>}, {transform_indices = @transform_8, window_bounds = array<i64: 1, 32, 32>}, {transform_indices = @transform_9, window_bounds = array<i64: 1, 1, 32>}, {transform_indices = @transform_10, window_bounds = array<i64: 1, 32, 64>}, {transform_indices = @transform_11, window_bounds = array<i64: 1, 1, 64>}, {transform_indices = @transform_12, window_bounds = array<i64: 1, 32, 32>}, {transform_indices = @transform_13, window_bounds = array<i64: 1, 1, 32>}, {transform_indices = @transform_14, window_bounds = array<i64: 1, 32, 64>}, {transform_indices = @transform_15, window_bounds = array<i64: 1, 1, 64>}, {transform_indices = @transform_16, window_bounds = array<i64: 1, 64, 32>}, {transform_indices = @transform_17, window_bounds = array<i64: 1, 1, 32>}, {transform_indices = @transform_18, window_bounds = array<i64: 1, 3, 32>}, {transform_indices = @transform_19, window_bounds = array<i64: 1, 3, 32>}, {pipeline_mode = #tpu.pipeline_mode<synchronous>, transform_indices = @transform_20, window_bounds = array<i64: 2, 8, 32>}, {transform_indices = @transform_21, window_bounds = array<i64: 1, 2, 4, 8, 8>}, {transform_indices = @transform_22, window_bounds = array<i64: 1, 2, 4, 8, 8>}]} {
    %c0_i32 = arith.constant 0 : i32
    %0 = arith.cmpi eq, %arg0, %c0_i32 : i32
    %1 = arith.extui %0 : i1 to i32
    %c0_i32_0 = arith.constant 0 : i32
    %2 = arith.cmpi ne, %1, %c0_i32_0 : i32
    scf.if %2 {
      %c0_309 = arith.constant 0 : index
      %c0_310 = arith.constant 0 : index
      %c0_311 = arith.constant 0 : index
      %664 = vector.load %arg1[%c0_309, %c0_310, %c0_311] : memref<2x8x32xf32, #tpu.memory_space<vmem>>, vector<2x8x32xf32>
      %c0_312 = arith.constant 0 : index
      %c0_313 = arith.constant 0 : index
      %c0_314 = arith.constant 0 : index
      %665 = vector.load %arg21[%c0_312, %c0_313, %c0_314] : memref<2x8x32xf32, #tpu.memory_space<vmem>>, vector<2x8x32xf32>
      tpu.vector_store %arg21[%c0_312, %c0_313, %c0_314], %664 {strides = array<i32>} : memref<2x8x32xf32, #tpu.memory_space<vmem>>, vector<2x8x32xf32>,
    } else {
    }
    %c0 = arith.constant 0 : index
    %c0_1 = arith.constant 0 : index
    %3 = vector.load %arg3[%c0, %c0_1] : memref<8x8xf32, #tpu.memory_space<vmem>>, vector<8x8xf32>
    %c0_2 = arith.constant 0 : index
    %c0_3 = arith.constant 0 : index
    %c0_4 = arith.constant 0 : index
    %4 = vector.load %arg5[%c0_2, %c0_3, %c0_4] : memref<1x32x96xbf16, #tpu.memory_space<vmem>>, vector<1x32x96xbf16>
    %5 = vector.shape_cast %4 : vector<1x32x96xbf16> to vector<32x96xbf16>
    %c0_5 = arith.constant 0 : index
    %c0_6 = arith.constant 0 : index
    %c0_7 = arith.constant 0 : index
    %6 = vector.load %arg6[%c0_5, %c0_6, %c0_7] : memref<1x1x96xf32, #tpu.memory_space<vmem>>, vector<1x1x96xf32>
    %7 = vector.shape_cast %6 : vector<1x1x96xf32> to vector<1x96xf32>
    %c0_8 = arith.constant 0 : index
    %c0_9 = arith.constant 0 : index
    %c0_10 = arith.constant 0 : index
    %8 = vector.load %arg7[%c0_8, %c0_9, %c0_10] : memref<1x32x32xbf16, #tpu.memory_space<vmem>>, vector<1x32x32xbf16>
    %9 = vector.shape_cast %8 : vector<1x32x32xbf16> to vector<32x32xbf16>
    %c0_11 = arith.constant 0 : index
    %c0_12 = arith.constant 0 : index
    %c0_13 = arith.constant 0 : index
    %10 = vector.load %arg8[%c0_11, %c0_12, %c0_13] : memref<1x1x32xf32, #tpu.memory_space<vmem>>, vector<1x1x32xf32>
    %11 = vector.shape_cast %10 : vector<1x1x32xf32> to vector<1x32xf32>
    %c0_14 = arith.constant 0 : index
    %c0_15 = arith.constant 0 : index
    %c0_16 = arith.constant 0 : index
    %12 = vector.load %arg9[%c0_14, %c0_15, %c0_16] : memref<1x32x32xbf16, #tpu.memory_space<vmem>>, vector<1x32x32xbf16>
    %13 = vector.shape_cast %12 : vector<1x32x32xbf16> to vector<32x32xbf16>
    %c0_17 = arith.constant 0 : index
    %c0_18 = arith.constant 0 : index
    %c0_19 = arith.constant 0 : index
    %14 = vector.load %arg10[%c0_17, %c0_18, %c0_19] : memref<1x1x32xf32, #tpu.memory_space<vmem>>, vector<1x1x32xf32>
    %15 = vector.shape_cast %14 : vector<1x1x32xf32> to vector<1x32xf32>
    %c0_20 = arith.constant 0 : index
    %c0_21 = arith.constant 0 : index
    %c0_22 = arith.constant 0 : index
    %16 = vector.load %arg11[%c0_20, %c0_21, %c0_22] : memref<1x32x64xbf16, #tpu.memory_space<vmem>>, vector<1x32x64xbf16>
    %17 = vector.shape_cast %16 : vector<1x32x64xbf16> to vector<32x64xbf16>
    %c0_23 = arith.constant 0 : index
    %c0_24 = arith.constant 0 : index
    %c0_25 = arith.constant 0 : index
    %18 = vector.load %arg12[%c0_23, %c0_24, %c0_25] : memref<1x1x64xf32, #tpu.memory_space<vmem>>, vector<1x1x64xf32>
    %19 = vector.shape_cast %18 : vector<1x1x64xf32> to vector<1x64xf32>
    %c0_26 = arith.constant 0 : index
    %c0_27 = arith.constant 0 : index
    %c0_28 = arith.constant 0 : index
    %20 = vector.load %arg13[%c0_26, %c0_27, %c0_28] : memref<1x32x32xbf16, #tpu.memory_space<vmem>>, vector<1x32x32xbf16>
    %21 = vector.shape_cast %20 : vector<1x32x32xbf16> to vector<32x32xbf16>
    %c0_29 = arith.constant 0 : index
    %c0_30 = arith.constant 0 : index
    %c0_31 = arith.constant 0 : index
    %22 = vector.load %arg14[%c0_29, %c0_30, %c0_31] : memref<1x1x32xf32, #tpu.memory_space<vmem>>, vector<1x1x32xf32>
    %23 = vector.shape_cast %22 : vector<1x1x32xf32> to vector<1x32xf32>
    %c0_32 = arith.constant 0 : index
    %c0_33 = arith.constant 0 : index
    %c0_34 = arith.constant 0 : index
    %24 = vector.load %arg15[%c0_32, %c0_33, %c0_34] : memref<1x32x64xbf16, #tpu.memory_space<vmem>>, vector<1x32x64xbf16>
    %25 = vector.shape_cast %24 : vector<1x32x64xbf16> to vector<32x64xbf16>
    %c0_35 = arith.constant 0 : index
    %c0_36 = arith.constant 0 : index
    %c0_37 = arith.constant 0 : index
    %26 = vector.load %arg16[%c0_35, %c0_36, %c0_37] : memref<1x1x64xf32, #tpu.memory_space<vmem>>, vector<1x1x64xf32>
    %27 = vector.shape_cast %26 : vector<1x1x64xf32> to vector<1x64xf32>
    %c0_38 = arith.constant 0 : index
    %c0_39 = arith.constant 0 : index
    %c0_40 = arith.constant 0 : index
    %28 = vector.load %arg17[%c0_38, %c0_39, %c0_40] : memref<1x64x32xbf16, #tpu.memory_space<vmem>>, vector<1x64x32xbf16>
    %29 = vector.shape_cast %28 : vector<1x64x32xbf16> to vector<64x32xbf16>
    %c0_41 = arith.constant 0 : index
    %c0_42 = arith.constant 0 : index
    %c0_43 = arith.constant 0 : index
    %30 = vector.load %arg18[%c0_41, %c0_42, %c0_43] : memref<1x1x32xf32, #tpu.memory_space<vmem>>, vector<1x1x32xf32>
    %31 = vector.shape_cast %30 : vector<1x1x32xf32> to vector<1x32xf32>
    %c0_44 = arith.constant 0 : index
    %c0_45 = arith.constant 0 : index
    %c0_46 = arith.constant 0 : index
    %32 = vector.load %arg19[%c0_44, %c0_45, %c0_46] : memref<1x3x32xf32, #tpu.memory_space<vmem>>, vector<1x1x32xf32>
    %33 = vector.shape_cast %32 : vector<1x1x32xf32> to vector<1x32xf32>
    %c0_47 = arith.constant 0 : index
    %c0_48 = arith.constant 0 : index
    %c0_49 = arith.constant 0 : index
    %34 = vector.load %arg20[%c0_47, %c0_48, %c0_49] : memref<1x3x32xf32, #tpu.memory_space<vmem>>, vector<1x1x32xf32>
    %35 = vector.shape_cast %34 : vector<1x1x32xf32> to vector<1x32xf32>
    %c0_50 = arith.constant 0 : index
    %c1 = arith.constant 1 : index
    %c0_51 = arith.constant 0 : index
    %36 = vector.load %arg19[%c0_50, %c1, %c0_51] : memref<1x3x32xf32, #tpu.memory_space<vmem>>, vector<1x1x32xf32>
    %37 = vector.shape_cast %36 : vector<1x1x32xf32> to vector<1x32xf32>
    %c0_52 = arith.constant 0 : index
    %c1_53 = arith.constant 1 : index
    %c0_54 = arith.constant 0 : index
    %38 = vector.load %arg20[%c0_52, %c1_53, %c0_54] : memref<1x3x32xf32, #tpu.memory_space<vmem>>, vector<1x1x32xf32>
    %39 = vector.shape_cast %38 : vector<1x1x32xf32> to vector<1x32xf32>
    %c0_55 = arith.constant 0 : index
    %c2 = arith.constant 2 : index
    %c0_56 = arith.constant 0 : index
    %40 = vector.load %arg19[%c0_55, %c2, %c0_56] : memref<1x3x32xf32, #tpu.memory_space<vmem>>, vector<1x1x32xf32>
    %41 = vector.shape_cast %40 : vector<1x1x32xf32> to vector<1x32xf32>
    %c0_57 = arith.constant 0 : index
    %c2_58 = arith.constant 2 : index
    %c0_59 = arith.constant 0 : index
    %42 = vector.load %arg20[%c0_57, %c2_58, %c0_59] : memref<1x3x32xf32, #tpu.memory_space<vmem>>, vector<1x1x32xf32>
    %43 = vector.shape_cast %42 : vector<1x1x32xf32> to vector<1x32xf32>
    %c0_60 = arith.constant 0 : index
    %c0_61 = arith.constant 0 : index
    %c0_62 = arith.constant 0 : index
    %44 = vector.load %arg21[%c0_60, %c0_61, %c0_62] : memref<2x8x32xf32, #tpu.memory_space<vmem>>, vector<1x8x32xf32>
    %45 = vector.shape_cast %44 : vector<1x8x32xf32> to vector<8x32xf32>
    %c0_63 = arith.constant 0 : index
    %c0_64 = arith.constant 0 : index
    %c0_65 = arith.constant 0 : index
    %46 = vector.load %arg2[%c0_63, %c0_64, %c0_65] : memref<2x8x32xbf16, #tpu.memory_space<vmem>>, vector<1x8x32xbf16>
    %47 = vector.shape_cast %46 : vector<1x8x32xbf16> to vector<8x32xbf16>
    %c0_66 = arith.constant 0 : index
    %c0_67 = arith.constant 0 : index
    %c0_68 = arith.constant 0 : index
    %48 = vector.load %arg4[%c0_66, %c0_67, %c0_68] : memref<2x1x8xf32, #tpu.memory_space<vmem>>, vector<1x1x8xf32>
    %49 = vector.shape_cast %48 : vector<1x1x8xf32> to vector<1x8xf32>
    %50 = arith.truncf %45 : vector<8x32xf32> to vector<8x32xbf16>
    %cst = arith.constant dense<0.000000e+00> : vector<8x96xf32>
    %51 = tpu.matmul %50, %5, %cst {dimension_numbers = #tpu.dot_dimension_numbers<[1], [0], [0], [1], [0, 0, 1, 1], [], []>} : vector<8x32xbf16>, vector<32x96xbf16>, vector<8x96xf32> -> vector<8x96xf32>
    %52 = vector.broadcast %7 : vector<1x96xf32> to vector<8x96xf32>
    %53 = arith.addf %51, %52 : vector<8x96xf32>
    %54 = vector.extract_strided_slice %53 {offsets = [0, 0], sizes = [8, 32], strides = [1, 1]} : vector<8x96xf32> to vector<8x32xf32>
    %55 = vector.extract_strided_slice %53 {offsets = [0, 32], sizes = [8, 32], strides = [1, 1]} : vector<8x96xf32> to vector<8x32xf32>
    %56 = vector.extract_strided_slice %53 {offsets = [0, 64], sizes = [8, 32], strides = [1, 1]} : vector<8x96xf32> to vector<8x32xf32>
    %57 = vector.extract_strided_slice %54 {offsets = [0, 0], sizes = [8, 8], strides = [1, 1]} : vector<8x32xf32> to vector<8x8xf32>
    %58 = arith.truncf %57 : vector<8x8xf32> to vector<8x8xbf16>
    %59 = vector.extract_strided_slice %55 {offsets = [0, 0], sizes = [8, 8], strides = [1, 1]} : vector<8x32xf32> to vector<8x8xf32>
    %60 = arith.truncf %59 : vector<8x8xf32> to vector<8x8xbf16>
    %61 = vector.extract_strided_slice %56 {offsets = [0, 0], sizes = [8, 8], strides = [1, 1]} : vector<8x32xf32> to vector<8x8xf32>
    %62 = arith.truncf %61 : vector<8x8xf32> to vector<8x8xbf16>
    %cst_69 = arith.constant dense<0.000000e+00> : vector<8x8xf32>
    %63 = tpu.matmul %58, %60, %cst_69 {dimension_numbers = #tpu.dot_dimension_numbers<[1], [1], [0], [0], [0, 0, 1, 0], [], []>} : vector<8x8xbf16>, vector<8x8xbf16>, vector<8x8xf32> -> vector<8x8xf32>
    %64 = arith.addf %63, %3 : vector<8x8xf32>
    %cst_70 = arith.constant dense<0xFF800000> : vector<8xf32>
    %65 = vector.multi_reduction <maximumf>, %64, %cst_70 [1] : vector<8x8xf32> to vector<8xf32>
    %66 = vector.shape_cast %65 : vector<8xf32> to vector<8x1xf32>
    %67 = vector.broadcast %66 : vector<8x1xf32> to vector<8x8xf32>
    %68 = arith.subf %64, %67 : vector<8x8xf32>
    %69 = math.exp %68 : vector<8x8xf32>
    %cst_71 = arith.constant dense<0.000000e+00> : vector<8xf32>
    %70 = vector.multi_reduction <add>, %69, %cst_71 [1] : vector<8x8xf32> to vector<8xf32>
    %71 = vector.shape_cast %70 : vector<8xf32> to vector<8x1xf32>
    %72 = tpu.reciprocal %71 {approx = true} : vector<8x1xf32> -> vector<8x1xf32>
    %73 = vector.broadcast %72 : vector<8x1xf32> to vector<8x8xf32>
    %74 = arith.mulf %69, %73 : vector<8x8xf32>
    %c0_72 = arith.constant 0 : index
    %c0_73 = arith.constant 0 : index
    %c0_74 = arith.constant 0 : index
    %c0_75 = arith.constant 0 : index
    %c0_76 = arith.constant 0 : index
    %75 = vector.load %arg22[%c0_72, %c0_73, %c0_74, %c0_75, %c0_76] : memref<1x2x4x8x8xf32, #tpu.memory_space<vmem>>, vector<1x1x1x8x8xf32>
    %76 = vector.shape_cast %75 : vector<1x1x1x8x8xf32> to vector<8x8xf32>
    %77 = vector.shape_cast %74 : vector<8x8xf32> to vector<1x1x1x8x8xf32>
    tpu.vector_store %arg22[%c0_72, %c0_73, %c0_74, %c0_75, %c0_76], %77 {strides = array<i32>} : memref<1x2x4x8x8xf32, #tpu.memory_space<vmem>>, vector<1x1x1x8x8xf32>,
    %78 = arith.truncf %74 : vector<8x8xf32> to vector<8x8xbf16>
    %cst_77 = arith.constant dense<0.000000e+00> : vector<8x8xf32>
    %79 = tpu.matmul %78, %62, %cst_77 {dimension_numbers = #tpu.dot_dimension_numbers<[1], [0], [0], [1], [0, 0, 1, 1], [], []>} : vector<8x8xbf16>, vector<8x8xbf16>, vector<8x8xf32> -> vector<8x8xf32>
    %c0_78 = arith.constant 0 : index
    %c0_79 = arith.constant 0 : index
    %80 = vector.load %arg24[%c0_78, %c0_79] : memref<8x32xf32, #tpu.memory_space<vmem>>, vector<8x8xf32>
    tpu.vector_store %arg24[%c0_78, %c0_79], %79 {strides = array<i32>} : memref<8x32xf32, #tpu.memory_space<vmem>>, vector<8x8xf32>,
    %81 = vector.extract_strided_slice %54 {offsets = [0, 8], sizes = [8, 8], strides = [1, 1]} : vector<8x32xf32> to vector<8x8xf32>
    %82 = arith.truncf %81 : vector<8x8xf32> to vector<8x8xbf16>
    %83 = vector.extract_strided_slice %55 {offsets = [0, 8], sizes = [8, 8], strides = [1, 1]} : vector<8x32xf32> to vector<8x8xf32>
    %84 = arith.truncf %83 : vector<8x8xf32> to vector<8x8xbf16>
    %85 = vector.extract_strided_slice %56 {offsets = [0, 8], sizes = [8, 8], strides = [1, 1]} : vector<8x32xf32> to vector<8x8xf32>
    %86 = arith.truncf %85 : vector<8x8xf32> to vector<8x8xbf16>
    %cst_80 = arith.constant dense<0.000000e+00> : vector<8x8xf32>
    %87 = tpu.matmul %82, %84, %cst_80 {dimension_numbers = #tpu.dot_dimension_numbers<[1], [1], [0], [0], [0, 0, 1, 0], [], []>} : vector<8x8xbf16>, vector<8x8xbf16>, vector<8x8xf32> -> vector<8x8xf32>
    %88 = arith.addf %87, %3 : vector<8x8xf32>
    %cst_81 = arith.constant dense<0xFF800000> : vector<8xf32>
    %89 = vector.multi_reduction <maximumf>, %88, %cst_81 [1] : vector<8x8xf32> to vector<8xf32>
    %90 = vector.shape_cast %89 : vector<8xf32> to vector<8x1xf32>
    %91 = vector.broadcast %90 : vector<8x1xf32> to vector<8x8xf32>
    %92 = arith.subf %88, %91 : vector<8x8xf32>
    %93 = math.exp %92 : vector<8x8xf32>
    %cst_82 = arith.constant dense<0.000000e+00> : vector<8xf32>
    %94 = vector.multi_reduction <add>, %93, %cst_82 [1] : vector<8x8xf32> to vector<8xf32>
    %95 = vector.shape_cast %94 : vector<8xf32> to vector<8x1xf32>
    %96 = tpu.reciprocal %95 {approx = true} : vector<8x1xf32> -> vector<8x1xf32>
    %97 = vector.broadcast %96 : vector<8x1xf32> to vector<8x8xf32>
    %98 = arith.mulf %93, %97 : vector<8x8xf32>
    %c0_83 = arith.constant 0 : index
    %c0_84 = arith.constant 0 : index
    %c1_85 = arith.constant 1 : index
    %c0_86 = arith.constant 0 : index
    %c0_87 = arith.constant 0 : index
    %99 = vector.load %arg22[%c0_83, %c0_84, %c1_85, %c0_86, %c0_87] : memref<1x2x4x8x8xf32, #tpu.memory_space<vmem>>, vector<1x1x1x8x8xf32>
    %100 = vector.shape_cast %99 : vector<1x1x1x8x8xf32> to vector<8x8xf32>
    %101 = vector.shape_cast %98 : vector<8x8xf32> to vector<1x1x1x8x8xf32>
    tpu.vector_store %arg22[%c0_83, %c0_84, %c1_85, %c0_86, %c0_87], %101 {strides = array<i32>} : memref<1x2x4x8x8xf32, #tpu.memory_space<vmem>>, vector<1x1x1x8x8xf32>,
    %102 = arith.truncf %98 : vector<8x8xf32> to vector<8x8xbf16>
    %cst_88 = arith.constant dense<0.000000e+00> : vector<8x8xf32>
    %103 = tpu.matmul %102, %86, %cst_88 {dimension_numbers = #tpu.dot_dimension_numbers<[1], [0], [0], [1], [0, 0, 1, 1], [], []>} : vector<8x8xbf16>, vector<8x8xbf16>, vector<8x8xf32> -> vector<8x8xf32>
    %c0_89 = arith.constant 0 : index
    %c8 = arith.constant 8 : index
    %104 = vector.load %arg24[%c0_89, %c8] : memref<8x32xf32, #tpu.memory_space<vmem>>, vector<8x8xf32>
    tpu.vector_store %arg24[%c0_89, %c8], %103 {strides = array<i32>} : memref<8x32xf32, #tpu.memory_space<vmem>>, vector<8x8xf32>,
    %105 = vector.extract_strided_slice %54 {offsets = [0, 16], sizes = [8, 8], strides = [1, 1]} : vector<8x32xf32> to vector<8x8xf32>
    %106 = arith.truncf %105 : vector<8x8xf32> to vector<8x8xbf16>
    %107 = vector.extract_strided_slice %55 {offsets = [0, 16], sizes = [8, 8], strides = [1, 1]} : vector<8x32xf32> to vector<8x8xf32>
    %108 = arith.truncf %107 : vector<8x8xf32> to vector<8x8xbf16>
    %109 = vector.extract_strided_slice %56 {offsets = [0, 16], sizes = [8, 8], strides = [1, 1]} : vector<8x32xf32> to vector<8x8xf32>
    %110 = arith.truncf %109 : vector<8x8xf32> to vector<8x8xbf16>
    %cst_90 = arith.constant dense<0.000000e+00> : vector<8x8xf32>
    %111 = tpu.matmul %106, %108, %cst_90 {dimension_numbers = #tpu.dot_dimension_numbers<[1], [1], [0], [0], [0, 0, 1, 0], [], []>} : vector<8x8xbf16>, vector<8x8xbf16>, vector<8x8xf32> -> vector<8x8xf32>
    %112 = arith.addf %111, %3 : vector<8x8xf32>
    %cst_91 = arith.constant dense<0xFF800000> : vector<8xf32>
    %113 = vector.multi_reduction <maximumf>, %112, %cst_91 [1] : vector<8x8xf32> to vector<8xf32>
    %114 = vector.shape_cast %113 : vector<8xf32> to vector<8x1xf32>
    %115 = vector.broadcast %114 : vector<8x1xf32> to vector<8x8xf32>
    %116 = arith.subf %112, %115 : vector<8x8xf32>
    %117 = math.exp %116 : vector<8x8xf32>
    %cst_92 = arith.constant dense<0.000000e+00> : vector<8xf32>
    %118 = vector.multi_reduction <add>, %117, %cst_92 [1] : vector<8x8xf32> to vector<8xf32>
    %119 = vector.shape_cast %118 : vector<8xf32> to vector<8x1xf32>
    %120 = tpu.reciprocal %119 {approx = true} : vector<8x1xf32> -> vector<8x1xf32>
    %121 = vector.broadcast %120 : vector<8x1xf32> to vector<8x8xf32>
    %122 = arith.mulf %117, %121 : vector<8x8xf32>
    %c0_93 = arith.constant 0 : index
    %c0_94 = arith.constant 0 : index
    %c2_95 = arith.constant 2 : index
    %c0_96 = arith.constant 0 : index
    %c0_97 = arith.constant 0 : index
    %123 = vector.load %arg22[%c0_93, %c0_94, %c2_95, %c0_96, %c0_97] : memref<1x2x4x8x8xf32, #tpu.memory_space<vmem>>, vector<1x1x1x8x8xf32>
    %124 = vector.shape_cast %123 : vector<1x1x1x8x8xf32> to vector<8x8xf32>
    %125 = vector.shape_cast %122 : vector<8x8xf32> to vector<1x1x1x8x8xf32>
    tpu.vector_store %arg22[%c0_93, %c0_94, %c2_95, %c0_96, %c0_97], %125 {strides = array<i32>} : memref<1x2x4x8x8xf32, #tpu.memory_space<vmem>>, vector<1x1x1x8x8xf32>,
    %126 = arith.truncf %122 : vector<8x8xf32> to vector<8x8xbf16>
    %cst_98 = arith.constant dense<0.000000e+00> : vector<8x8xf32>
    %127 = tpu.matmul %126, %110, %cst_98 {dimension_numbers = #tpu.dot_dimension_numbers<[1], [0], [0], [1], [0, 0, 1, 1], [], []>} : vector<8x8xbf16>, vector<8x8xbf16>, vector<8x8xf32> -> vector<8x8xf32>
    %c0_99 = arith.constant 0 : index
    %c16 = arith.constant 16 : index
    %128 = vector.load %arg24[%c0_99, %c16] : memref<8x32xf32, #tpu.memory_space<vmem>>, vector<8x8xf32>
    tpu.vector_store %arg24[%c0_99, %c16], %127 {strides = array<i32>} : memref<8x32xf32, #tpu.memory_space<vmem>>, vector<8x8xf32>,
    %129 = vector.extract_strided_slice %54 {offsets = [0, 24], sizes = [8, 8], strides = [1, 1]} : vector<8x32xf32> to vector<8x8xf32>
    %130 = arith.truncf %129 : vector<8x8xf32> to vector<8x8xbf16>
    %131 = vector.extract_strided_slice %55 {offsets = [0, 24], sizes = [8, 8], strides = [1, 1]} : vector<8x32xf32> to vector<8x8xf32>
    %132 = arith.truncf %131 : vector<8x8xf32> to vector<8x8xbf16>
    %133 = vector.extract_strided_slice %56 {offsets = [0, 24], sizes = [8, 8], strides = [1, 1]} : vector<8x32xf32> to vector<8x8xf32>
    %134 = arith.truncf %133 : vector<8x8xf32> to vector<8x8xbf16>
    %cst_100 = arith.constant dense<0.000000e+00> : vector<8x8xf32>
    %135 = tpu.matmul %130, %132, %cst_100 {dimension_numbers = #tpu.dot_dimension_numbers<[1], [1], [0], [0], [0, 0, 1, 0], [], []>} : vector<8x8xbf16>, vector<8x8xbf16>, vector<8x8xf32> -> vector<8x8xf32>
    %136 = arith.addf %135, %3 : vector<8x8xf32>
    %cst_101 = arith.constant dense<0xFF800000> : vector<8xf32>
    %137 = vector.multi_reduction <maximumf>, %136, %cst_101 [1] : vector<8x8xf32> to vector<8xf32>
    %138 = vector.shape_cast %137 : vector<8xf32> to vector<8x1xf32>
    %139 = vector.broadcast %138 : vector<8x1xf32> to vector<8x8xf32>
    %140 = arith.subf %136, %139 : vector<8x8xf32>
    %141 = math.exp %140 : vector<8x8xf32>
    %cst_102 = arith.constant dense<0.000000e+00> : vector<8xf32>
    %142 = vector.multi_reduction <add>, %141, %cst_102 [1] : vector<8x8xf32> to vector<8xf32>
    %143 = vector.shape_cast %142 : vector<8xf32> to vector<8x1xf32>
    %144 = tpu.reciprocal %143 {approx = true} : vector<8x1xf32> -> vector<8x1xf32>
    %145 = vector.broadcast %144 : vector<8x1xf32> to vector<8x8xf32>
    %146 = arith.mulf %141, %145 : vector<8x8xf32>
    %c0_103 = arith.constant 0 : index
    %c0_104 = arith.constant 0 : index
    %c3 = arith.constant 3 : index
    %c0_105 = arith.constant 0 : index
    %c0_106 = arith.constant 0 : index
    %147 = vector.load %arg22[%c0_103, %c0_104, %c3, %c0_105, %c0_106] : memref<1x2x4x8x8xf32, #tpu.memory_space<vmem>>, vector<1x1x1x8x8xf32>
    %148 = vector.shape_cast %147 : vector<1x1x1x8x8xf32> to vector<8x8xf32>
    %149 = vector.shape_cast %146 : vector<8x8xf32> to vector<1x1x1x8x8xf32>
    tpu.vector_store %arg22[%c0_103, %c0_104, %c3, %c0_105, %c0_106], %149 {strides = array<i32>} : memref<1x2x4x8x8xf32, #tpu.memory_space<vmem>>, vector<1x1x1x8x8xf32>,
    %150 = arith.truncf %146 : vector<8x8xf32> to vector<8x8xbf16>
    %cst_107 = arith.constant dense<0.000000e+00> : vector<8x8xf32>
    %151 = tpu.matmul %150, %134, %cst_107 {dimension_numbers = #tpu.dot_dimension_numbers<[1], [0], [0], [1], [0, 0, 1, 1], [], []>} : vector<8x8xbf16>, vector<8x8xbf16>, vector<8x8xf32> -> vector<8x8xf32>
    %c0_108 = arith.constant 0 : index
    %c24 = arith.constant 24 : index
    %152 = vector.load %arg24[%c0_108, %c24] : memref<8x32xf32, #tpu.memory_space<vmem>>, vector<8x8xf32>
    tpu.vector_store %arg24[%c0_108, %c24], %151 {strides = array<i32>} : memref<8x32xf32, #tpu.memory_space<vmem>>, vector<8x8xf32>,
    %c0_109 = arith.constant 0 : index
    %c0_110 = arith.constant 0 : index
    %153 = vector.load %arg24[%c0_109, %c0_110] : memref<8x32xf32, #tpu.memory_space<vmem>>, vector<8x32xf32>
    %154 = arith.truncf %153 : vector<8x32xf32> to vector<8x32xbf16>
    %cst_111 = arith.constant dense<0.000000e+00> : vector<8x32xf32>
    %155 = tpu.matmul %154, %9, %cst_111 {dimension_numbers = #tpu.dot_dimension_numbers<[1], [0], [0], [1], [0, 0, 1, 1], [], []>} : vector<8x32xbf16>, vector<32x32xbf16>, vector<8x32xf32> -> vector<8x32xf32>
    %156 = vector.broadcast %11 : vector<1x32xf32> to vector<8x32xf32>
    %157 = arith.addf %155, %156 : vector<8x32xf32>
    %158 = arith.addf %45, %157 : vector<8x32xf32>
    %cst_112 = arith.constant dense<0.000000e+00> : vector<8xf32>
    %159 = vector.multi_reduction <add>, %158, %cst_112 [1] : vector<8x32xf32> to vector<8xf32>
    %160 = vector.shape_cast %159 : vector<8xf32> to vector<8x1xf32>
    %cst_113 = arith.constant 3.200000e+01 : f32
    %161 = vector.broadcast %cst_113 : f32 to vector<8x1xf32>
    %162 = arith.divf %160, %161 : vector<8x1xf32>
    %163 = vector.broadcast %162 : vector<8x1xf32> to vector<8x32xf32>
    %164 = arith.subf %158, %163 : vector<8x32xf32>
    %165 = arith.mulf %164, %164 : vector<8x32xf32>
    %cst_114 = arith.constant dense<0.000000e+00> : vector<8xf32>
    %166 = vector.multi_reduction <add>, %165, %cst_114 [1] : vector<8x32xf32> to vector<8xf32>
    %167 = vector.shape_cast %166 : vector<8xf32> to vector<8x1xf32>
    %cst_115 = arith.constant 3.200000e+01 : f32
    %168 = vector.broadcast %cst_115 : f32 to vector<8x1xf32>
    %169 = arith.divf %167, %168 : vector<8x1xf32>
    %170 = vector.broadcast %162 : vector<8x1xf32> to vector<8x32xf32>
    %171 = arith.subf %158, %170 : vector<8x32xf32>
    %cst_116 = arith.constant 9.99999997E-7 : f32
    %172 = vector.broadcast %cst_116 : f32 to vector<8x1xf32>
    %173 = arith.addf %169, %172 : vector<8x1xf32>
    %174 = math.rsqrt %173 : vector<8x1xf32>
    %175 = vector.broadcast %174 : vector<8x1xf32> to vector<8x32xf32>
    %176 = arith.mulf %171, %175 : vector<8x32xf32>
    %177 = vector.broadcast %33 : vector<1x32xf32> to vector<8x32xf32>
    %178 = arith.mulf %176, %177 : vector<8x32xf32>
    %179 = vector.broadcast %35 : vector<1x32xf32> to vector<8x32xf32>
    %180 = arith.addf %178, %179 : vector<8x32xf32>
    %181 = arith.truncf %180 : vector<8x32xf32> to vector<8x32xbf16>
    %cst_117 = arith.constant dense<0.000000e+00> : vector<8x32xf32>
    %182 = tpu.matmul %181, %13, %cst_117 {dimension_numbers = #tpu.dot_dimension_numbers<[1], [0], [0], [1], [0, 0, 1, 1], [], []>} : vector<8x32xbf16>, vector<32x32xbf16>, vector<8x32xf32> -> vector<8x32xf32>
    %183 = vector.broadcast %15 : vector<1x32xf32> to vector<8x32xf32>
    %184 = arith.addf %182, %183 : vector<8x32xf32>
    %cst_118 = arith.constant dense<0.000000e+00> : vector<8x64xf32>
    %185 = tpu.matmul %47, %17, %cst_118 {dimension_numbers = #tpu.dot_dimension_numbers<[1], [0], [0], [1], [0, 0, 1, 1], [], []>} : vector<8x32xbf16>, vector<32x64xbf16>, vector<8x64xf32> -> vector<8x64xf32>
    %186 = vector.broadcast %19 : vector<1x64xf32> to vector<8x64xf32>
    %187 = arith.addf %185, %186 : vector<8x64xf32>
    %188 = vector.extract_strided_slice %187 {offsets = [0, 0], sizes = [8, 32], strides = [1, 1]} : vector<8x64xf32> to vector<8x32xf32>
    %189 = vector.extract_strided_slice %187 {offsets = [0, 32], sizes = [8, 32], strides = [1, 1]} : vector<8x64xf32> to vector<8x32xf32>
    %190 = vector.extract_strided_slice %184 {offsets = [0, 0], sizes = [8, 8], strides = [1, 1]} : vector<8x32xf32> to vector<8x8xf32>
    %191 = arith.truncf %190 : vector<8x8xf32> to vector<8x8xbf16>
    %192 = vector.extract_strided_slice %188 {offsets = [0, 0], sizes = [8, 8], strides = [1, 1]} : vector<8x32xf32> to vector<8x8xf32>
    %193 = arith.truncf %192 : vector<8x8xf32> to vector<8x8xbf16>
    %194 = vector.extract_strided_slice %189 {offsets = [0, 0], sizes = [8, 8], strides = [1, 1]} : vector<8x32xf32> to vector<8x8xf32>
    %195 = arith.truncf %194 : vector<8x8xf32> to vector<8x8xbf16>
    %cst_119 = arith.constant dense<0.000000e+00> : vector<8x8xf32>
    %196 = tpu.matmul %191, %193, %cst_119 {dimension_numbers = #tpu.dot_dimension_numbers<[1], [1], [0], [0], [0, 0, 1, 0], [], []>} : vector<8x8xbf16>, vector<8x8xbf16>, vector<8x8xf32> -> vector<8x8xf32>
    %197 = vector.broadcast %49 : vector<1x8xf32> to vector<8x8xf32>
    %198 = arith.addf %196, %197 : vector<8x8xf32>
    %cst_120 = arith.constant dense<0xFF800000> : vector<8xf32>
    %199 = vector.multi_reduction <maximumf>, %198, %cst_120 [1] : vector<8x8xf32> to vector<8xf32>
    %200 = vector.shape_cast %199 : vector<8xf32> to vector<8x1xf32>
    %201 = vector.broadcast %200 : vector<8x1xf32> to vector<8x8xf32>
    %202 = arith.subf %198, %201 : vector<8x8xf32>
    %203 = math.exp %202 : vector<8x8xf32>
    %cst_121 = arith.constant dense<0.000000e+00> : vector<8xf32>
    %204 = vector.multi_reduction <add>, %203, %cst_121 [1] : vector<8x8xf32> to vector<8xf32>
    %205 = vector.shape_cast %204 : vector<8xf32> to vector<8x1xf32>
    %206 = tpu.reciprocal %205 {approx = true} : vector<8x1xf32> -> vector<8x1xf32>
    %207 = vector.broadcast %206 : vector<8x1xf32> to vector<8x8xf32>
    %208 = arith.mulf %203, %207 : vector<8x8xf32>
    %c0_122 = arith.constant 0 : index
    %c0_123 = arith.constant 0 : index
    %c0_124 = arith.constant 0 : index
    %c0_125 = arith.constant 0 : index
    %c0_126 = arith.constant 0 : index
    %209 = vector.load %arg23[%c0_122, %c0_123, %c0_124, %c0_125, %c0_126] : memref<1x2x4x8x8xf32, #tpu.memory_space<vmem>>, vector<1x1x1x8x8xf32>
    %210 = vector.shape_cast %209 : vector<1x1x1x8x8xf32> to vector<8x8xf32>
    %211 = vector.shape_cast %208 : vector<8x8xf32> to vector<1x1x1x8x8xf32>
    tpu.vector_store %arg23[%c0_122, %c0_123, %c0_124, %c0_125, %c0_126], %211 {strides = array<i32>} : memref<1x2x4x8x8xf32, #tpu.memory_space<vmem>>, vector<1x1x1x8x8xf32>,
    %212 = arith.truncf %208 : vector<8x8xf32> to vector<8x8xbf16>
    %cst_127 = arith.constant dense<0.000000e+00> : vector<8x8xf32>
    %213 = tpu.matmul %212, %195, %cst_127 {dimension_numbers = #tpu.dot_dimension_numbers<[1], [0], [0], [1], [0, 0, 1, 1], [], []>} : vector<8x8xbf16>, vector<8x8xbf16>, vector<8x8xf32> -> vector<8x8xf32>
    %c0_128 = arith.constant 0 : index
    %c0_129 = arith.constant 0 : index
    %214 = vector.load %arg24[%c0_128, %c0_129] : memref<8x32xf32, #tpu.memory_space<vmem>>, vector<8x8xf32>
    tpu.vector_store %arg24[%c0_128, %c0_129], %213 {strides = array<i32>} : memref<8x32xf32, #tpu.memory_space<vmem>>, vector<8x8xf32>,
    %215 = vector.extract_strided_slice %184 {offsets = [0, 8], sizes = [8, 8], strides = [1, 1]} : vector<8x32xf32> to vector<8x8xf32>
    %216 = arith.truncf %215 : vector<8x8xf32> to vector<8x8xbf16>
    %217 = vector.extract_strided_slice %188 {offsets = [0, 8], sizes = [8, 8], strides = [1, 1]} : vector<8x32xf32> to vector<8x8xf32>
    %218 = arith.truncf %217 : vector<8x8xf32> to vector<8x8xbf16>
    %219 = vector.extract_strided_slice %189 {offsets = [0, 8], sizes = [8, 8], strides = [1, 1]} : vector<8x32xf32> to vector<8x8xf32>
    %220 = arith.truncf %219 : vector<8x8xf32> to vector<8x8xbf16>
    %cst_130 = arith.constant dense<0.000000e+00> : vector<8x8xf32>
    %221 = tpu.matmul %216, %218, %cst_130 {dimension_numbers = #tpu.dot_dimension_numbers<[1], [1], [0], [0], [0, 0, 1, 0], [], []>} : vector<8x8xbf16>, vector<8x8xbf16>, vector<8x8xf32> -> vector<8x8xf32>
    %222 = vector.broadcast %49 : vector<1x8xf32> to vector<8x8xf32>
    %223 = arith.addf %221, %222 : vector<8x8xf32>
    %cst_131 = arith.constant dense<0xFF800000> : vector<8xf32>
    %224 = vector.multi_reduction <maximumf>, %223, %cst_131 [1] : vector<8x8xf32> to vector<8xf32>
    %225 = vector.shape_cast %224 : vector<8xf32> to vector<8x1xf32>
    %226 = vector.broadcast %225 : vector<8x1xf32> to vector<8x8xf32>
    %227 = arith.subf %223, %226 : vector<8x8xf32>
    %228 = math.exp %227 : vector<8x8xf32>
    %cst_132 = arith.constant dense<0.000000e+00> : vector<8xf32>
    %229 = vector.multi_reduction <add>, %228, %cst_132 [1] : vector<8x8xf32> to vector<8xf32>
    %230 = vector.shape_cast %229 : vector<8xf32> to vector<8x1xf32>
    %231 = tpu.reciprocal %230 {approx = true} : vector<8x1xf32> -> vector<8x1xf32>
    %232 = vector.broadcast %231 : vector<8x1xf32> to vector<8x8xf32>
    %233 = arith.mulf %228, %232 : vector<8x8xf32>
    %c0_133 = arith.constant 0 : index
    %c0_134 = arith.constant 0 : index
    %c1_135 = arith.constant 1 : index
    %c0_136 = arith.constant 0 : index
    %c0_137 = arith.constant 0 : index
    %234 = vector.load %arg23[%c0_133, %c0_134, %c1_135, %c0_136, %c0_137] : memref<1x2x4x8x8xf32, #tpu.memory_space<vmem>>, vector<1x1x1x8x8xf32>
    %235 = vector.shape_cast %234 : vector<1x1x1x8x8xf32> to vector<8x8xf32>
    %236 = vector.shape_cast %233 : vector<8x8xf32> to vector<1x1x1x8x8xf32>
    tpu.vector_store %arg23[%c0_133, %c0_134, %c1_135, %c0_136, %c0_137], %236 {strides = array<i32>} : memref<1x2x4x8x8xf32, #tpu.memory_space<vmem>>, vector<1x1x1x8x8xf32>,
    %237 = arith.truncf %233 : vector<8x8xf32> to vector<8x8xbf16>
    %cst_138 = arith.constant dense<0.000000e+00> : vector<8x8xf32>
    %238 = tpu.matmul %237, %220, %cst_138 {dimension_numbers = #tpu.dot_dimension_numbers<[1], [0], [0], [1], [0, 0, 1, 1], [], []>} : vector<8x8xbf16>, vector<8x8xbf16>, vector<8x8xf32> -> vector<8x8xf32>
    %c0_139 = arith.constant 0 : index
    %c8_140 = arith.constant 8 : index
    %239 = vector.load %arg24[%c0_139, %c8_140] : memref<8x32xf32, #tpu.memory_space<vmem>>, vector<8x8xf32>
    tpu.vector_store %arg24[%c0_139, %c8_140], %238 {strides = array<i32>} : memref<8x32xf32, #tpu.memory_space<vmem>>, vector<8x8xf32>,
    %240 = vector.extract_strided_slice %184 {offsets = [0, 16], sizes = [8, 8], strides = [1, 1]} : vector<8x32xf32> to vector<8x8xf32>
    %241 = arith.truncf %240 : vector<8x8xf32> to vector<8x8xbf16>
    %242 = vector.extract_strided_slice %188 {offsets = [0, 16], sizes = [8, 8], strides = [1, 1]} : vector<8x32xf32> to vector<8x8xf32>
    %243 = arith.truncf %242 : vector<8x8xf32> to vector<8x8xbf16>
    %244 = vector.extract_strided_slice %189 {offsets = [0, 16], sizes = [8, 8], strides = [1, 1]} : vector<8x32xf32> to vector<8x8xf32>
    %245 = arith.truncf %244 : vector<8x8xf32> to vector<8x8xbf16>
    %cst_141 = arith.constant dense<0.000000e+00> : vector<8x8xf32>
    %246 = tpu.matmul %241, %243, %cst_141 {dimension_numbers = #tpu.dot_dimension_numbers<[1], [1], [0], [0], [0, 0, 1, 0], [], []>} : vector<8x8xbf16>, vector<8x8xbf16>, vector<8x8xf32> -> vector<8x8xf32>
    %247 = vector.broadcast %49 : vector<1x8xf32> to vector<8x8xf32>
    %248 = arith.addf %246, %247 : vector<8x8xf32>
    %cst_142 = arith.constant dense<0xFF800000> : vector<8xf32>
    %249 = vector.multi_reduction <maximumf>, %248, %cst_142 [1] : vector<8x8xf32> to vector<8xf32>
    %250 = vector.shape_cast %249 : vector<8xf32> to vector<8x1xf32>
    %251 = vector.broadcast %250 : vector<8x1xf32> to vector<8x8xf32>
    %252 = arith.subf %248, %251 : vector<8x8xf32>
    %253 = math.exp %252 : vector<8x8xf32>
    %cst_143 = arith.constant dense<0.000000e+00> : vector<8xf32>
    %254 = vector.multi_reduction <add>, %253, %cst_143 [1] : vector<8x8xf32> to vector<8xf32>
    %255 = vector.shape_cast %254 : vector<8xf32> to vector<8x1xf32>
    %256 = tpu.reciprocal %255 {approx = true} : vector<8x1xf32> -> vector<8x1xf32>
    %257 = vector.broadcast %256 : vector<8x1xf32> to vector<8x8xf32>
    %258 = arith.mulf %253, %257 : vector<8x8xf32>
    %c0_144 = arith.constant 0 : index
    %c0_145 = arith.constant 0 : index
    %c2_146 = arith.constant 2 : index
    %c0_147 = arith.constant 0 : index
    %c0_148 = arith.constant 0 : index
    %259 = vector.load %arg23[%c0_144, %c0_145, %c2_146, %c0_147, %c0_148] : memref<1x2x4x8x8xf32, #tpu.memory_space<vmem>>, vector<1x1x1x8x8xf32>
    %260 = vector.shape_cast %259 : vector<1x1x1x8x8xf32> to vector<8x8xf32>
    %261 = vector.shape_cast %258 : vector<8x8xf32> to vector<1x1x1x8x8xf32>
    tpu.vector_store %arg23[%c0_144, %c0_145, %c2_146, %c0_147, %c0_148], %261 {strides = array<i32>} : memref<1x2x4x8x8xf32, #tpu.memory_space<vmem>>, vector<1x1x1x8x8xf32>,
    %262 = arith.truncf %258 : vector<8x8xf32> to vector<8x8xbf16>
    %cst_149 = arith.constant dense<0.000000e+00> : vector<8x8xf32>
    %263 = tpu.matmul %262, %245, %cst_149 {dimension_numbers = #tpu.dot_dimension_numbers<[1], [0], [0], [1], [0, 0, 1, 1], [], []>} : vector<8x8xbf16>, vector<8x8xbf16>, vector<8x8xf32> -> vector<8x8xf32>
    %c0_150 = arith.constant 0 : index
    %c16_151 = arith.constant 16 : index
    %264 = vector.load %arg24[%c0_150, %c16_151] : memref<8x32xf32, #tpu.memory_space<vmem>>, vector<8x8xf32>
    tpu.vector_store %arg24[%c0_150, %c16_151], %263 {strides = array<i32>} : memref<8x32xf32, #tpu.memory_space<vmem>>, vector<8x8xf32>,
    %265 = vector.extract_strided_slice %184 {offsets = [0, 24], sizes = [8, 8], strides = [1, 1]} : vector<8x32xf32> to vector<8x8xf32>
    %266 = arith.truncf %265 : vector<8x8xf32> to vector<8x8xbf16>
    %267 = vector.extract_strided_slice %188 {offsets = [0, 24], sizes = [8, 8], strides = [1, 1]} : vector<8x32xf32> to vector<8x8xf32>
    %268 = arith.truncf %267 : vector<8x8xf32> to vector<8x8xbf16>
    %269 = vector.extract_strided_slice %189 {offsets = [0, 24], sizes = [8, 8], strides = [1, 1]} : vector<8x32xf32> to vector<8x8xf32>
    %270 = arith.truncf %269 : vector<8x8xf32> to vector<8x8xbf16>
    %cst_152 = arith.constant dense<0.000000e+00> : vector<8x8xf32>
    %271 = tpu.matmul %266, %268, %cst_152 {dimension_numbers = #tpu.dot_dimension_numbers<[1], [1], [0], [0], [0, 0, 1, 0], [], []>} : vector<8x8xbf16>, vector<8x8xbf16>, vector<8x8xf32> -> vector<8x8xf32>
    %272 = vector.broadcast %49 : vector<1x8xf32> to vector<8x8xf32>
    %273 = arith.addf %271, %272 : vector<8x8xf32>
    %cst_153 = arith.constant dense<0xFF800000> : vector<8xf32>
    %274 = vector.multi_reduction <maximumf>, %273, %cst_153 [1] : vector<8x8xf32> to vector<8xf32>
    %275 = vector.shape_cast %274 : vector<8xf32> to vector<8x1xf32>
    %276 = vector.broadcast %275 : vector<8x1xf32> to vector<8x8xf32>
    %277 = arith.subf %273, %276 : vector<8x8xf32>
    %278 = math.exp %277 : vector<8x8xf32>
    %cst_154 = arith.constant dense<0.000000e+00> : vector<8xf32>
    %279 = vector.multi_reduction <add>, %278, %cst_154 [1] : vector<8x8xf32> to vector<8xf32>
    %280 = vector.shape_cast %279 : vector<8xf32> to vector<8x1xf32>
    %281 = tpu.reciprocal %280 {approx = true} : vector<8x1xf32> -> vector<8x1xf32>
    %282 = vector.broadcast %281 : vector<8x1xf32> to vector<8x8xf32>
    %283 = arith.mulf %278, %282 : vector<8x8xf32>
    %c0_155 = arith.constant 0 : index
    %c0_156 = arith.constant 0 : index
    %c3_157 = arith.constant 3 : index
    %c0_158 = arith.constant 0 : index
    %c0_159 = arith.constant 0 : index
    %284 = vector.load %arg23[%c0_155, %c0_156, %c3_157, %c0_158, %c0_159] : memref<1x2x4x8x8xf32, #tpu.memory_space<vmem>>, vector<1x1x1x8x8xf32>
    %285 = vector.shape_cast %284 : vector<1x1x1x8x8xf32> to vector<8x8xf32>
    %286 = vector.shape_cast %283 : vector<8x8xf32> to vector<1x1x1x8x8xf32>
    tpu.vector_store %arg23[%c0_155, %c0_156, %c3_157, %c0_158, %c0_159], %286 {strides = array<i32>} : memref<1x2x4x8x8xf32, #tpu.memory_space<vmem>>, vector<1x1x1x8x8xf32>,
    %287 = arith.truncf %283 : vector<8x8xf32> to vector<8x8xbf16>
    %cst_160 = arith.constant dense<0.000000e+00> : vector<8x8xf32>
    %288 = tpu.matmul %287, %270, %cst_160 {dimension_numbers = #tpu.dot_dimension_numbers<[1], [0], [0], [1], [0, 0, 1, 1], [], []>} : vector<8x8xbf16>, vector<8x8xbf16>, vector<8x8xf32> -> vector<8x8xf32>
    %c0_161 = arith.constant 0 : index
    %c24_162 = arith.constant 24 : index
    %289 = vector.load %arg24[%c0_161, %c24_162] : memref<8x32xf32, #tpu.memory_space<vmem>>, vector<8x8xf32>
    tpu.vector_store %arg24[%c0_161, %c24_162], %288 {strides = array<i32>} : memref<8x32xf32, #tpu.memory_space<vmem>>, vector<8x8xf32>,
    %c0_163 = arith.constant 0 : index
    %c0_164 = arith.constant 0 : index
    %290 = vector.load %arg24[%c0_163, %c0_164] : memref<8x32xf32, #tpu.memory_space<vmem>>, vector<8x32xf32>
    %291 = arith.truncf %290 : vector<8x32xf32> to vector<8x32xbf16>
    %cst_165 = arith.constant dense<0.000000e+00> : vector<8x32xf32>
    %292 = tpu.matmul %291, %21, %cst_165 {dimension_numbers = #tpu.dot_dimension_numbers<[1], [0], [0], [1], [0, 0, 1, 1], [], []>} : vector<8x32xbf16>, vector<32x32xbf16>, vector<8x32xf32> -> vector<8x32xf32>
    %293 = vector.broadcast %23 : vector<1x32xf32> to vector<8x32xf32>
    %294 = arith.addf %292, %293 : vector<8x32xf32>
    %295 = arith.addf %180, %294 : vector<8x32xf32>
    %cst_166 = arith.constant dense<0.000000e+00> : vector<8xf32>
    %296 = vector.multi_reduction <add>, %295, %cst_166 [1] : vector<8x32xf32> to vector<8xf32>
    %297 = vector.shape_cast %296 : vector<8xf32> to vector<8x1xf32>
    %cst_167 = arith.constant 3.200000e+01 : f32
    %298 = vector.broadcast %cst_167 : f32 to vector<8x1xf32>
    %299 = arith.divf %297, %298 : vector<8x1xf32>
    %300 = vector.broadcast %299 : vector<8x1xf32> to vector<8x32xf32>
    %301 = arith.subf %295, %300 : vector<8x32xf32>
    %302 = arith.mulf %301, %301 : vector<8x32xf32>
    %cst_168 = arith.constant dense<0.000000e+00> : vector<8xf32>
    %303 = vector.multi_reduction <add>, %302, %cst_168 [1] : vector<8x32xf32> to vector<8xf32>
    %304 = vector.shape_cast %303 : vector<8xf32> to vector<8x1xf32>
    %cst_169 = arith.constant 3.200000e+01 : f32
    %305 = vector.broadcast %cst_169 : f32 to vector<8x1xf32>
    %306 = arith.divf %304, %305 : vector<8x1xf32>
    %307 = vector.broadcast %299 : vector<8x1xf32> to vector<8x32xf32>
    %308 = arith.subf %295, %307 : vector<8x32xf32>
    %cst_170 = arith.constant 9.99999997E-7 : f32
    %309 = vector.broadcast %cst_170 : f32 to vector<8x1xf32>
    %310 = arith.addf %306, %309 : vector<8x1xf32>
    %311 = math.rsqrt %310 : vector<8x1xf32>
    %312 = vector.broadcast %311 : vector<8x1xf32> to vector<8x32xf32>
    %313 = arith.mulf %308, %312 : vector<8x32xf32>
    %314 = vector.broadcast %37 : vector<1x32xf32> to vector<8x32xf32>
    %315 = arith.mulf %313, %314 : vector<8x32xf32>
    %316 = vector.broadcast %39 : vector<1x32xf32> to vector<8x32xf32>
    %317 = arith.addf %315, %316 : vector<8x32xf32>
    %318 = arith.truncf %317 : vector<8x32xf32> to vector<8x32xbf16>
    %cst_171 = arith.constant dense<0.000000e+00> : vector<8x64xf32>
    %319 = tpu.matmul %318, %25, %cst_171 {dimension_numbers = #tpu.dot_dimension_numbers<[1], [0], [0], [1], [0, 0, 1, 1], [], []>} : vector<8x32xbf16>, vector<32x64xbf16>, vector<8x64xf32> -> vector<8x64xf32>
    %320 = vector.broadcast %27 : vector<1x64xf32> to vector<8x64xf32>
    %321 = arith.addf %319, %320 : vector<8x64xf32>
    %cst_172 = arith.constant 0.000000e+00 : f32
    %322 = vector.broadcast %cst_172 : f32 to vector<8x64xf32>
    %323 = arith.maximumf %321, %322 : vector<8x64xf32>
    %324 = arith.truncf %323 : vector<8x64xf32> to vector<8x64xbf16>
    %cst_173 = arith.constant dense<0.000000e+00> : vector<8x32xf32>
    %325 = tpu.matmul %324, %29, %cst_173 {dimension_numbers = #tpu.dot_dimension_numbers<[1], [0], [0], [1], [0, 0, 1, 1], [], []>} : vector<8x64xbf16>, vector<64x32xbf16>, vector<8x32xf32> -> vector<8x32xf32>
    %326 = vector.broadcast %31 : vector<1x32xf32> to vector<8x32xf32>
    %327 = arith.addf %325, %326 : vector<8x32xf32>
    %328 = arith.addf %317, %327 : vector<8x32xf32>
    %cst_174 = arith.constant dense<0.000000e+00> : vector<8xf32>
    %329 = vector.multi_reduction <add>, %328, %cst_174 [1] : vector<8x32xf32> to vector<8xf32>
    %330 = vector.shape_cast %329 : vector<8xf32> to vector<8x1xf32>
    %cst_175 = arith.constant 3.200000e+01 : f32
    %331 = vector.broadcast %cst_175 : f32 to vector<8x1xf32>
    %332 = arith.divf %330, %331 : vector<8x1xf32>
    %333 = vector.broadcast %332 : vector<8x1xf32> to vector<8x32xf32>
    %334 = arith.subf %328, %333 : vector<8x32xf32>
    %335 = arith.mulf %334, %334 : vector<8x32xf32>
    %cst_176 = arith.constant dense<0.000000e+00> : vector<8xf32>
    %336 = vector.multi_reduction <add>, %335, %cst_176 [1] : vector<8x32xf32> to vector<8xf32>
    %337 = vector.shape_cast %336 : vector<8xf32> to vector<8x1xf32>
    %cst_177 = arith.constant 3.200000e+01 : f32
    %338 = vector.broadcast %cst_177 : f32 to vector<8x1xf32>
    %339 = arith.divf %337, %338 : vector<8x1xf32>
    %340 = vector.broadcast %332 : vector<8x1xf32> to vector<8x32xf32>
    %341 = arith.subf %328, %340 : vector<8x32xf32>
    %cst_178 = arith.constant 9.99999997E-7 : f32
    %342 = vector.broadcast %cst_178 : f32 to vector<8x1xf32>
    %343 = arith.addf %339, %342 : vector<8x1xf32>
    %344 = math.rsqrt %343 : vector<8x1xf32>
    %345 = vector.broadcast %344 : vector<8x1xf32> to vector<8x32xf32>
    %346 = arith.mulf %341, %345 : vector<8x32xf32>
    %347 = vector.broadcast %41 : vector<1x32xf32> to vector<8x32xf32>
    %348 = arith.mulf %346, %347 : vector<8x32xf32>
    %349 = vector.broadcast %43 : vector<1x32xf32> to vector<8x32xf32>
    %350 = arith.addf %348, %349 : vector<8x32xf32>
    %c0_179 = arith.constant 0 : index
    %c0_180 = arith.constant 0 : index
    %c0_181 = arith.constant 0 : index
    %351 = vector.load %arg21[%c0_179, %c0_180, %c0_181] : memref<2x8x32xf32, #tpu.memory_space<vmem>>, vector<1x8x32xf32>
    %352 = vector.shape_cast %351 : vector<1x8x32xf32> to vector<8x32xf32>
    %353 = vector.shape_cast %350 : vector<8x32xf32> to vector<1x8x32xf32>
    tpu.vector_store %arg21[%c0_179, %c0_180, %c0_181], %353 {strides = array<i32>} : memref<2x8x32xf32, #tpu.memory_space<vmem>>, vector<1x8x32xf32>,
    %c1_182 = arith.constant 1 : index
    %c0_183 = arith.constant 0 : index
    %c0_184 = arith.constant 0 : index
    %354 = vector.load %arg21[%c1_182, %c0_183, %c0_184] : memref<2x8x32xf32, #tpu.memory_space<vmem>>, vector<1x8x32xf32>
    %355 = vector.shape_cast %354 : vector<1x8x32xf32> to vector<8x32xf32>
    %c1_185 = arith.constant 1 : index
    %c0_186 = arith.constant 0 : index
    %c0_187 = arith.constant 0 : index
    %356 = vector.load %arg2[%c1_185, %c0_186, %c0_187] : memref<2x8x32xbf16, #tpu.memory_space<vmem>>, vector<1x8x32xbf16>
    %357 = vector.shape_cast %356 : vector<1x8x32xbf16> to vector<8x32xbf16>
    %c1_188 = arith.constant 1 : index
    %c0_189 = arith.constant 0 : index
    %c0_190 = arith.constant 0 : index
    %358 = vector.load %arg4[%c1_188, %c0_189, %c0_190] : memref<2x1x8xf32, #tpu.memory_space<vmem>>, vector<1x1x8xf32>
    %359 = vector.shape_cast %358 : vector<1x1x8xf32> to vector<1x8xf32>
    %360 = arith.truncf %355 : vector<8x32xf32> to vector<8x32xbf16>
    %cst_191 = arith.constant dense<0.000000e+00> : vector<8x96xf32>
    %361 = tpu.matmul %360, %5, %cst_191 {dimension_numbers = #tpu.dot_dimension_numbers<[1], [0], [0], [1], [0, 0, 1, 1], [], []>} : vector<8x32xbf16>, vector<32x96xbf16>, vector<8x96xf32> -> vector<8x96xf32>
    %362 = vector.broadcast %7 : vector<1x96xf32> to vector<8x96xf32>
    %363 = arith.addf %361, %362 : vector<8x96xf32>
    %364 = vector.extract_strided_slice %363 {offsets = [0, 0], sizes = [8, 32], strides = [1, 1]} : vector<8x96xf32> to vector<8x32xf32>
    %365 = vector.extract_strided_slice %363 {offsets = [0, 32], sizes = [8, 32], strides = [1, 1]} : vector<8x96xf32> to vector<8x32xf32>
    %366 = vector.extract_strided_slice %363 {offsets = [0, 64], sizes = [8, 32], strides = [1, 1]} : vector<8x96xf32> to vector<8x32xf32>
    %367 = vector.extract_strided_slice %364 {offsets = [0, 0], sizes = [8, 8], strides = [1, 1]} : vector<8x32xf32> to vector<8x8xf32>
    %368 = arith.truncf %367 : vector<8x8xf32> to vector<8x8xbf16>
    %369 = vector.extract_strided_slice %365 {offsets = [0, 0], sizes = [8, 8], strides = [1, 1]} : vector<8x32xf32> to vector<8x8xf32>
    %370 = arith.truncf %369 : vector<8x8xf32> to vector<8x8xbf16>
    %371 = vector.extract_strided_slice %366 {offsets = [0, 0], sizes = [8, 8], strides = [1, 1]} : vector<8x32xf32> to vector<8x8xf32>
    %372 = arith.truncf %371 : vector<8x8xf32> to vector<8x8xbf16>
    %cst_192 = arith.constant dense<0.000000e+00> : vector<8x8xf32>
    %373 = tpu.matmul %368, %370, %cst_192 {dimension_numbers = #tpu.dot_dimension_numbers<[1], [1], [0], [0], [0, 0, 1, 0], [], []>} : vector<8x8xbf16>, vector<8x8xbf16>, vector<8x8xf32> -> vector<8x8xf32>
    %374 = arith.addf %373, %3 : vector<8x8xf32>
    %cst_193 = arith.constant dense<0xFF800000> : vector<8xf32>
    %375 = vector.multi_reduction <maximumf>, %374, %cst_193 [1] : vector<8x8xf32> to vector<8xf32>
    %376 = vector.shape_cast %375 : vector<8xf32> to vector<8x1xf32>
    %377 = vector.broadcast %376 : vector<8x1xf32> to vector<8x8xf32>
    %378 = arith.subf %374, %377 : vector<8x8xf32>
    %379 = math.exp %378 : vector<8x8xf32>
    %cst_194 = arith.constant dense<0.000000e+00> : vector<8xf32>
    %380 = vector.multi_reduction <add>, %379, %cst_194 [1] : vector<8x8xf32> to vector<8xf32>
    %381 = vector.shape_cast %380 : vector<8xf32> to vector<8x1xf32>
    %382 = tpu.reciprocal %381 {approx = true} : vector<8x1xf32> -> vector<8x1xf32>
    %383 = vector.broadcast %382 : vector<8x1xf32> to vector<8x8xf32>
    %384 = arith.mulf %379, %383 : vector<8x8xf32>
    %c0_195 = arith.constant 0 : index
    %c1_196 = arith.constant 1 : index
    %c0_197 = arith.constant 0 : index
    %c0_198 = arith.constant 0 : index
    %c0_199 = arith.constant 0 : index
    %385 = vector.load %arg22[%c0_195, %c1_196, %c0_197, %c0_198, %c0_199] : memref<1x2x4x8x8xf32, #tpu.memory_space<vmem>>, vector<1x1x1x8x8xf32>
    %386 = vector.shape_cast %385 : vector<1x1x1x8x8xf32> to vector<8x8xf32>
    %387 = vector.shape_cast %384 : vector<8x8xf32> to vector<1x1x1x8x8xf32>
    tpu.vector_store %arg22[%c0_195, %c1_196, %c0_197, %c0_198, %c0_199], %387 {strides = array<i32>} : memref<1x2x4x8x8xf32, #tpu.memory_space<vmem>>, vector<1x1x1x8x8xf32>,
    %388 = arith.truncf %384 : vector<8x8xf32> to vector<8x8xbf16>
    %cst_200 = arith.constant dense<0.000000e+00> : vector<8x8xf32>
    %389 = tpu.matmul %388, %372, %cst_200 {dimension_numbers = #tpu.dot_dimension_numbers<[1], [0], [0], [1], [0, 0, 1, 1], [], []>} : vector<8x8xbf16>, vector<8x8xbf16>, vector<8x8xf32> -> vector<8x8xf32>
    %c0_201 = arith.constant 0 : index
    %c0_202 = arith.constant 0 : index
    %390 = vector.load %arg24[%c0_201, %c0_202] : memref<8x32xf32, #tpu.memory_space<vmem>>, vector<8x8xf32>
    tpu.vector_store %arg24[%c0_201, %c0_202], %389 {strides = array<i32>} : memref<8x32xf32, #tpu.memory_space<vmem>>, vector<8x8xf32>,
    %391 = vector.extract_strided_slice %364 {offsets = [0, 8], sizes = [8, 8], strides = [1, 1]} : vector<8x32xf32> to vector<8x8xf32>
    %392 = arith.truncf %391 : vector<8x8xf32> to vector<8x8xbf16>
    %393 = vector.extract_strided_slice %365 {offsets = [0, 8], sizes = [8, 8], strides = [1, 1]} : vector<8x32xf32> to vector<8x8xf32>
    %394 = arith.truncf %393 : vector<8x8xf32> to vector<8x8xbf16>
    %395 = vector.extract_strided_slice %366 {offsets = [0, 8], sizes = [8, 8], strides = [1, 1]} : vector<8x32xf32> to vector<8x8xf32>
    %396 = arith.truncf %395 : vector<8x8xf32> to vector<8x8xbf16>
    %cst_203 = arith.constant dense<0.000000e+00> : vector<8x8xf32>
    %397 = tpu.matmul %392, %394, %cst_203 {dimension_numbers = #tpu.dot_dimension_numbers<[1], [1], [0], [0], [0, 0, 1, 0], [], []>} : vector<8x8xbf16>, vector<8x8xbf16>, vector<8x8xf32> -> vector<8x8xf32>
    %398 = arith.addf %397, %3 : vector<8x8xf32>
    %cst_204 = arith.constant dense<0xFF800000> : vector<8xf32>
    %399 = vector.multi_reduction <maximumf>, %398, %cst_204 [1] : vector<8x8xf32> to vector<8xf32>
    %400 = vector.shape_cast %399 : vector<8xf32> to vector<8x1xf32>
    %401 = vector.broadcast %400 : vector<8x1xf32> to vector<8x8xf32>
    %402 = arith.subf %398, %401 : vector<8x8xf32>
    %403 = math.exp %402 : vector<8x8xf32>
    %cst_205 = arith.constant dense<0.000000e+00> : vector<8xf32>
    %404 = vector.multi_reduction <add>, %403, %cst_205 [1] : vector<8x8xf32> to vector<8xf32>
    %405 = vector.shape_cast %404 : vector<8xf32> to vector<8x1xf32>
    %406 = tpu.reciprocal %405 {approx = true} : vector<8x1xf32> -> vector<8x1xf32>
    %407 = vector.broadcast %406 : vector<8x1xf32> to vector<8x8xf32>
    %408 = arith.mulf %403, %407 : vector<8x8xf32>
    %c0_206 = arith.constant 0 : index
    %c1_207 = arith.constant 1 : index
    %c1_208 = arith.constant 1 : index
    %c0_209 = arith.constant 0 : index
    %c0_210 = arith.constant 0 : index
    %409 = vector.load %arg22[%c0_206, %c1_207, %c1_208, %c0_209, %c0_210] : memref<1x2x4x8x8xf32, #tpu.memory_space<vmem>>, vector<1x1x1x8x8xf32>
    %410 = vector.shape_cast %409 : vector<1x1x1x8x8xf32> to vector<8x8xf32>
    %411 = vector.shape_cast %408 : vector<8x8xf32> to vector<1x1x1x8x8xf32>
    tpu.vector_store %arg22[%c0_206, %c1_207, %c1_208, %c0_209, %c0_210], %411 {strides = array<i32>} : memref<1x2x4x8x8xf32, #tpu.memory_space<vmem>>, vector<1x1x1x8x8xf32>,
    %412 = arith.truncf %408 : vector<8x8xf32> to vector<8x8xbf16>
    %cst_211 = arith.constant dense<0.000000e+00> : vector<8x8xf32>
    %413 = tpu.matmul %412, %396, %cst_211 {dimension_numbers = #tpu.dot_dimension_numbers<[1], [0], [0], [1], [0, 0, 1, 1], [], []>} : vector<8x8xbf16>, vector<8x8xbf16>, vector<8x8xf32> -> vector<8x8xf32>
    %c0_212 = arith.constant 0 : index
    %c8_213 = arith.constant 8 : index
    %414 = vector.load %arg24[%c0_212, %c8_213] : memref<8x32xf32, #tpu.memory_space<vmem>>, vector<8x8xf32>
    tpu.vector_store %arg24[%c0_212, %c8_213], %413 {strides = array<i32>} : memref<8x32xf32, #tpu.memory_space<vmem>>, vector<8x8xf32>,
    %415 = vector.extract_strided_slice %364 {offsets = [0, 16], sizes = [8, 8], strides = [1, 1]} : vector<8x32xf32> to vector<8x8xf32>
    %416 = arith.truncf %415 : vector<8x8xf32> to vector<8x8xbf16>
    %417 = vector.extract_strided_slice %365 {offsets = [0, 16], sizes = [8, 8], strides = [1, 1]} : vector<8x32xf32> to vector<8x8xf32>
    %418 = arith.truncf %417 : vector<8x8xf32> to vector<8x8xbf16>
    %419 = vector.extract_strided_slice %366 {offsets = [0, 16], sizes = [8, 8], strides = [1, 1]} : vector<8x32xf32> to vector<8x8xf32>
    %420 = arith.truncf %419 : vector<8x8xf32> to vector<8x8xbf16>
    %cst_214 = arith.constant dense<0.000000e+00> : vector<8x8xf32>
    %421 = tpu.matmul %416, %418, %cst_214 {dimension_numbers = #tpu.dot_dimension_numbers<[1], [1], [0], [0], [0, 0, 1, 0], [], []>} : vector<8x8xbf16>, vector<8x8xbf16>, vector<8x8xf32> -> vector<8x8xf32>
    %422 = arith.addf %421, %3 : vector<8x8xf32>
    %cst_215 = arith.constant dense<0xFF800000> : vector<8xf32>
    %423 = vector.multi_reduction <maximumf>, %422, %cst_215 [1] : vector<8x8xf32> to vector<8xf32>
    %424 = vector.shape_cast %423 : vector<8xf32> to vector<8x1xf32>
    %425 = vector.broadcast %424 : vector<8x1xf32> to vector<8x8xf32>
    %426 = arith.subf %422, %425 : vector<8x8xf32>
    %427 = math.exp %426 : vector<8x8xf32>
    %cst_216 = arith.constant dense<0.000000e+00> : vector<8xf32>
    %428 = vector.multi_reduction <add>, %427, %cst_216 [1] : vector<8x8xf32> to vector<8xf32>
    %429 = vector.shape_cast %428 : vector<8xf32> to vector<8x1xf32>
    %430 = tpu.reciprocal %429 {approx = true} : vector<8x1xf32> -> vector<8x1xf32>
    %431 = vector.broadcast %430 : vector<8x1xf32> to vector<8x8xf32>
    %432 = arith.mulf %427, %431 : vector<8x8xf32>
    %c0_217 = arith.constant 0 : index
    %c1_218 = arith.constant 1 : index
    %c2_219 = arith.constant 2 : index
    %c0_220 = arith.constant 0 : index
    %c0_221 = arith.constant 0 : index
    %433 = vector.load %arg22[%c0_217, %c1_218, %c2_219, %c0_220, %c0_221] : memref<1x2x4x8x8xf32, #tpu.memory_space<vmem>>, vector<1x1x1x8x8xf32>
    %434 = vector.shape_cast %433 : vector<1x1x1x8x8xf32> to vector<8x8xf32>
    %435 = vector.shape_cast %432 : vector<8x8xf32> to vector<1x1x1x8x8xf32>
    tpu.vector_store %arg22[%c0_217, %c1_218, %c2_219, %c0_220, %c0_221], %435 {strides = array<i32>} : memref<1x2x4x8x8xf32, #tpu.memory_space<vmem>>, vector<1x1x1x8x8xf32>,
    %436 = arith.truncf %432 : vector<8x8xf32> to vector<8x8xbf16>
    %cst_222 = arith.constant dense<0.000000e+00> : vector<8x8xf32>
    %437 = tpu.matmul %436, %420, %cst_222 {dimension_numbers = #tpu.dot_dimension_numbers<[1], [0], [0], [1], [0, 0, 1, 1], [], []>} : vector<8x8xbf16>, vector<8x8xbf16>, vector<8x8xf32> -> vector<8x8xf32>
    %c0_223 = arith.constant 0 : index
    %c16_224 = arith.constant 16 : index
    %438 = vector.load %arg24[%c0_223, %c16_224] : memref<8x32xf32, #tpu.memory_space<vmem>>, vector<8x8xf32>
    tpu.vector_store %arg24[%c0_223, %c16_224], %437 {strides = array<i32>} : memref<8x32xf32, #tpu.memory_space<vmem>>, vector<8x8xf32>,
    %439 = vector.extract_strided_slice %364 {offsets = [0, 24], sizes = [8, 8], strides = [1, 1]} : vector<8x32xf32> to vector<8x8xf32>
    %440 = arith.truncf %439 : vector<8x8xf32> to vector<8x8xbf16>
    %441 = vector.extract_strided_slice %365 {offsets = [0, 24], sizes = [8, 8], strides = [1, 1]} : vector<8x32xf32> to vector<8x8xf32>
    %442 = arith.truncf %441 : vector<8x8xf32> to vector<8x8xbf16>
    %443 = vector.extract_strided_slice %366 {offsets = [0, 24], sizes = [8, 8], strides = [1, 1]} : vector<8x32xf32> to vector<8x8xf32>
    %444 = arith.truncf %443 : vector<8x8xf32> to vector<8x8xbf16>
    %cst_225 = arith.constant dense<0.000000e+00> : vector<8x8xf32>
    %445 = tpu.matmul %440, %442, %cst_225 {dimension_numbers = #tpu.dot_dimension_numbers<[1], [1], [0], [0], [0, 0, 1, 0], [], []>} : vector<8x8xbf16>, vector<8x8xbf16>, vector<8x8xf32> -> vector<8x8xf32>
    %446 = arith.addf %445, %3 : vector<8x8xf32>
    %cst_226 = arith.constant dense<0xFF800000> : vector<8xf32>
    %447 = vector.multi_reduction <maximumf>, %446, %cst_226 [1] : vector<8x8xf32> to vector<8xf32>
    %448 = vector.shape_cast %447 : vector<8xf32> to vector<8x1xf32>
    %449 = vector.broadcast %448 : vector<8x1xf32> to vector<8x8xf32>
    %450 = arith.subf %446, %449 : vector<8x8xf32>
    %451 = math.exp %450 : vector<8x8xf32>
    %cst_227 = arith.constant dense<0.000000e+00> : vector<8xf32>
    %452 = vector.multi_reduction <add>, %451, %cst_227 [1] : vector<8x8xf32> to vector<8xf32>
    %453 = vector.shape_cast %452 : vector<8xf32> to vector<8x1xf32>
    %454 = tpu.reciprocal %453 {approx = true} : vector<8x1xf32> -> vector<8x1xf32>
    %455 = vector.broadcast %454 : vector<8x1xf32> to vector<8x8xf32>
    %456 = arith.mulf %451, %455 : vector<8x8xf32>
    %c0_228 = arith.constant 0 : index
    %c1_229 = arith.constant 1 : index
    %c3_230 = arith.constant 3 : index
    %c0_231 = arith.constant 0 : index
    %c0_232 = arith.constant 0 : index
    %457 = vector.load %arg22[%c0_228, %c1_229, %c3_230, %c0_231, %c0_232] : memref<1x2x4x8x8xf32, #tpu.memory_space<vmem>>, vector<1x1x1x8x8xf32>
    %458 = vector.shape_cast %457 : vector<1x1x1x8x8xf32> to vector<8x8xf32>
    %459 = vector.shape_cast %456 : vector<8x8xf32> to vector<1x1x1x8x8xf32>
    tpu.vector_store %arg22[%c0_228, %c1_229, %c3_230, %c0_231, %c0_232], %459 {strides = array<i32>} : memref<1x2x4x8x8xf32, #tpu.memory_space<vmem>>, vector<1x1x1x8x8xf32>,
    %460 = arith.truncf %456 : vector<8x8xf32> to vector<8x8xbf16>
    %cst_233 = arith.constant dense<0.000000e+00> : vector<8x8xf32>
    %461 = tpu.matmul %460, %444, %cst_233 {dimension_numbers = #tpu.dot_dimension_numbers<[1], [0], [0], [1], [0, 0, 1, 1], [], []>} : vector<8x8xbf16>, vector<8x8xbf16>, vector<8x8xf32> -> vector<8x8xf32>
    %c0_234 = arith.constant 0 : index
    %c24_235 = arith.constant 24 : index
    %462 = vector.load %arg24[%c0_234, %c24_235] : memref<8x32xf32, #tpu.memory_space<vmem>>, vector<8x8xf32>
    tpu.vector_store %arg24[%c0_234, %c24_235], %461 {strides = array<i32>} : memref<8x32xf32, #tpu.memory_space<vmem>>, vector<8x8xf32>,
    %c0_236 = arith.constant 0 : index
    %c0_237 = arith.constant 0 : index
    %463 = vector.load %arg24[%c0_236, %c0_237] : memref<8x32xf32, #tpu.memory_space<vmem>>, vector<8x32xf32>
    %464 = arith.truncf %463 : vector<8x32xf32> to vector<8x32xbf16>
    %cst_238 = arith.constant dense<0.000000e+00> : vector<8x32xf32>
    %465 = tpu.matmul %464, %9, %cst_238 {dimension_numbers = #tpu.dot_dimension_numbers<[1], [0], [0], [1], [0, 0, 1, 1], [], []>} : vector<8x32xbf16>, vector<32x32xbf16>, vector<8x32xf32> -> vector<8x32xf32>
    %466 = vector.broadcast %11 : vector<1x32xf32> to vector<8x32xf32>
    %467 = arith.addf %465, %466 : vector<8x32xf32>
    %468 = arith.addf %355, %467 : vector<8x32xf32>
    %cst_239 = arith.constant dense<0.000000e+00> : vector<8xf32>
    %469 = vector.multi_reduction <add>, %468, %cst_239 [1] : vector<8x32xf32> to vector<8xf32>
    %470 = vector.shape_cast %469 : vector<8xf32> to vector<8x1xf32>
    %cst_240 = arith.constant 3.200000e+01 : f32
    %471 = vector.broadcast %cst_240 : f32 to vector<8x1xf32>
    %472 = arith.divf %470, %471 : vector<8x1xf32>
    %473 = vector.broadcast %472 : vector<8x1xf32> to vector<8x32xf32>
    %474 = arith.subf %468, %473 : vector<8x32xf32>
    %475 = arith.mulf %474, %474 : vector<8x32xf32>
    %cst_241 = arith.constant dense<0.000000e+00> : vector<8xf32>
    %476 = vector.multi_reduction <add>, %475, %cst_241 [1] : vector<8x32xf32> to vector<8xf32>
    %477 = vector.shape_cast %476 : vector<8xf32> to vector<8x1xf32>
    %cst_242 = arith.constant 3.200000e+01 : f32
    %478 = vector.broadcast %cst_242 : f32 to vector<8x1xf32>
    %479 = arith.divf %477, %478 : vector<8x1xf32>
    %480 = vector.broadcast %472 : vector<8x1xf32> to vector<8x32xf32>
    %481 = arith.subf %468, %480 : vector<8x32xf32>
    %cst_243 = arith.constant 9.99999997E-7 : f32
    %482 = vector.broadcast %cst_243 : f32 to vector<8x1xf32>
    %483 = arith.addf %479, %482 : vector<8x1xf32>
    %484 = math.rsqrt %483 : vector<8x1xf32>
    %485 = vector.broadcast %484 : vector<8x1xf32> to vector<8x32xf32>
    %486 = arith.mulf %481, %485 : vector<8x32xf32>
    %487 = vector.broadcast %33 : vector<1x32xf32> to vector<8x32xf32>
    %488 = arith.mulf %486, %487 : vector<8x32xf32>
    %489 = vector.broadcast %35 : vector<1x32xf32> to vector<8x32xf32>
    %490 = arith.addf %488, %489 : vector<8x32xf32>
    %491 = arith.truncf %490 : vector<8x32xf32> to vector<8x32xbf16>
    %cst_244 = arith.constant dense<0.000000e+00> : vector<8x32xf32>
    %492 = tpu.matmul %491, %13, %cst_244 {dimension_numbers = #tpu.dot_dimension_numbers<[1], [0], [0], [1], [0, 0, 1, 1], [], []>} : vector<8x32xbf16>, vector<32x32xbf16>, vector<8x32xf32> -> vector<8x32xf32>
    %493 = vector.broadcast %15 : vector<1x32xf32> to vector<8x32xf32>
    %494 = arith.addf %492, %493 : vector<8x32xf32>
    %cst_245 = arith.constant dense<0.000000e+00> : vector<8x64xf32>
    %495 = tpu.matmul %357, %17, %cst_245 {dimension_numbers = #tpu.dot_dimension_numbers<[1], [0], [0], [1], [0, 0, 1, 1], [], []>} : vector<8x32xbf16>, vector<32x64xbf16>, vector<8x64xf32> -> vector<8x64xf32>
    %496 = vector.broadcast %19 : vector<1x64xf32> to vector<8x64xf32>
    %497 = arith.addf %495, %496 : vector<8x64xf32>
    %498 = vector.extract_strided_slice %497 {offsets = [0, 0], sizes = [8, 32], strides = [1, 1]} : vector<8x64xf32> to vector<8x32xf32>
    %499 = vector.extract_strided_slice %497 {offsets = [0, 32], sizes = [8, 32], strides = [1, 1]} : vector<8x64xf32> to vector<8x32xf32>
    %500 = vector.extract_strided_slice %494 {offsets = [0, 0], sizes = [8, 8], strides = [1, 1]} : vector<8x32xf32> to vector<8x8xf32>
    %501 = arith.truncf %500 : vector<8x8xf32> to vector<8x8xbf16>
    %502 = vector.extract_strided_slice %498 {offsets = [0, 0], sizes = [8, 8], strides = [1, 1]} : vector<8x32xf32> to vector<8x8xf32>
    %503 = arith.truncf %502 : vector<8x8xf32> to vector<8x8xbf16>
    %504 = vector.extract_strided_slice %499 {offsets = [0, 0], sizes = [8, 8], strides = [1, 1]} : vector<8x32xf32> to vector<8x8xf32>
    %505 = arith.truncf %504 : vector<8x8xf32> to vector<8x8xbf16>
    %cst_246 = arith.constant dense<0.000000e+00> : vector<8x8xf32>
    %506 = tpu.matmul %501, %503, %cst_246 {dimension_numbers = #tpu.dot_dimension_numbers<[1], [1], [0], [0], [0, 0, 1, 0], [], []>} : vector<8x8xbf16>, vector<8x8xbf16>, vector<8x8xf32> -> vector<8x8xf32>
    %507 = vector.broadcast %359 : vector<1x8xf32> to vector<8x8xf32>
    %508 = arith.addf %506, %507 : vector<8x8xf32>
    %cst_247 = arith.constant dense<0xFF800000> : vector<8xf32>
    %509 = vector.multi_reduction <maximumf>, %508, %cst_247 [1] : vector<8x8xf32> to vector<8xf32>
    %510 = vector.shape_cast %509 : vector<8xf32> to vector<8x1xf32>
    %511 = vector.broadcast %510 : vector<8x1xf32> to vector<8x8xf32>
    %512 = arith.subf %508, %511 : vector<8x8xf32>
    %513 = math.exp %512 : vector<8x8xf32>
    %cst_248 = arith.constant dense<0.000000e+00> : vector<8xf32>
    %514 = vector.multi_reduction <add>, %513, %cst_248 [1] : vector<8x8xf32> to vector<8xf32>
    %515 = vector.shape_cast %514 : vector<8xf32> to vector<8x1xf32>
    %516 = tpu.reciprocal %515 {approx = true} : vector<8x1xf32> -> vector<8x1xf32>
    %517 = vector.broadcast %516 : vector<8x1xf32> to vector<8x8xf32>
    %518 = arith.mulf %513, %517 : vector<8x8xf32>
    %c0_249 = arith.constant 0 : index
    %c1_250 = arith.constant 1 : index
    %c0_251 = arith.constant 0 : index
    %c0_252 = arith.constant 0 : index
    %c0_253 = arith.constant 0 : index
    %519 = vector.load %arg23[%c0_249, %c1_250, %c0_251, %c0_252, %c0_253] : memref<1x2x4x8x8xf32, #tpu.memory_space<vmem>>, vector<1x1x1x8x8xf32>
    %520 = vector.shape_cast %519 : vector<1x1x1x8x8xf32> to vector<8x8xf32>
    %521 = vector.shape_cast %518 : vector<8x8xf32> to vector<1x1x1x8x8xf32>
    tpu.vector_store %arg23[%c0_249, %c1_250, %c0_251, %c0_252, %c0_253], %521 {strides = array<i32>} : memref<1x2x4x8x8xf32, #tpu.memory_space<vmem>>, vector<1x1x1x8x8xf32>,
    %522 = arith.truncf %518 : vector<8x8xf32> to vector<8x8xbf16>
    %cst_254 = arith.constant dense<0.000000e+00> : vector<8x8xf32>
    %523 = tpu.matmul %522, %505, %cst_254 {dimension_numbers = #tpu.dot_dimension_numbers<[1], [0], [0], [1], [0, 0, 1, 1], [], []>} : vector<8x8xbf16>, vector<8x8xbf16>, vector<8x8xf32> -> vector<8x8xf32>
    %c0_255 = arith.constant 0 : index
    %c0_256 = arith.constant 0 : index
    %524 = vector.load %arg24[%c0_255, %c0_256] : memref<8x32xf32, #tpu.memory_space<vmem>>, vector<8x8xf32>
    tpu.vector_store %arg24[%c0_255, %c0_256], %523 {strides = array<i32>} : memref<8x32xf32, #tpu.memory_space<vmem>>, vector<8x8xf32>,
    %525 = vector.extract_strided_slice %494 {offsets = [0, 8], sizes = [8, 8], strides = [1, 1]} : vector<8x32xf32> to vector<8x8xf32>
    %526 = arith.truncf %525 : vector<8x8xf32> to vector<8x8xbf16>
    %527 = vector.extract_strided_slice %498 {offsets = [0, 8], sizes = [8, 8], strides = [1, 1]} : vector<8x32xf32> to vector<8x8xf32>
    %528 = arith.truncf %527 : vector<8x8xf32> to vector<8x8xbf16>
    %529 = vector.extract_strided_slice %499 {offsets = [0, 8], sizes = [8, 8], strides = [1, 1]} : vector<8x32xf32> to vector<8x8xf32>
    %530 = arith.truncf %529 : vector<8x8xf32> to vector<8x8xbf16>
    %cst_257 = arith.constant dense<0.000000e+00> : vector<8x8xf32>
    %531 = tpu.matmul %526, %528, %cst_257 {dimension_numbers = #tpu.dot_dimension_numbers<[1], [1], [0], [0], [0, 0, 1, 0], [], []>} : vector<8x8xbf16>, vector<8x8xbf16>, vector<8x8xf32> -> vector<8x8xf32>
    %532 = vector.broadcast %359 : vector<1x8xf32> to vector<8x8xf32>
    %533 = arith.addf %531, %532 : vector<8x8xf32>
    %cst_258 = arith.constant dense<0xFF800000> : vector<8xf32>
    %534 = vector.multi_reduction <maximumf>, %533, %cst_258 [1] : vector<8x8xf32> to vector<8xf32>
    %535 = vector.shape_cast %534 : vector<8xf32> to vector<8x1xf32>
    %536 = vector.broadcast %535 : vector<8x1xf32> to vector<8x8xf32>
    %537 = arith.subf %533, %536 : vector<8x8xf32>
    %538 = math.exp %537 : vector<8x8xf32>
    %cst_259 = arith.constant dense<0.000000e+00> : vector<8xf32>
    %539 = vector.multi_reduction <add>, %538, %cst_259 [1] : vector<8x8xf32> to vector<8xf32>
    %540 = vector.shape_cast %539 : vector<8xf32> to vector<8x1xf32>
    %541 = tpu.reciprocal %540 {approx = true} : vector<8x1xf32> -> vector<8x1xf32>
    %542 = vector.broadcast %541 : vector<8x1xf32> to vector<8x8xf32>
    %543 = arith.mulf %538, %542 : vector<8x8xf32>
    %c0_260 = arith.constant 0 : index
    %c1_261 = arith.constant 1 : index
    %c1_262 = arith.constant 1 : index
    %c0_263 = arith.constant 0 : index
    %c0_264 = arith.constant 0 : index
    %544 = vector.load %arg23[%c0_260, %c1_261, %c1_262, %c0_263, %c0_264] : memref<1x2x4x8x8xf32, #tpu.memory_space<vmem>>, vector<1x1x1x8x8xf32>
    %545 = vector.shape_cast %544 : vector<1x1x1x8x8xf32> to vector<8x8xf32>
    %546 = vector.shape_cast %543 : vector<8x8xf32> to vector<1x1x1x8x8xf32>
    tpu.vector_store %arg23[%c0_260, %c1_261, %c1_262, %c0_263, %c0_264], %546 {strides = array<i32>} : memref<1x2x4x8x8xf32, #tpu.memory_space<vmem>>, vector<1x1x1x8x8xf32>,
    %547 = arith.truncf %543 : vector<8x8xf32> to vector<8x8xbf16>
    %cst_265 = arith.constant dense<0.000000e+00> : vector<8x8xf32>
    %548 = tpu.matmul %547, %530, %cst_265 {dimension_numbers = #tpu.dot_dimension_numbers<[1], [0], [0], [1], [0, 0, 1, 1], [], []>} : vector<8x8xbf16>, vector<8x8xbf16>, vector<8x8xf32> -> vector<8x8xf32>
    %c0_266 = arith.constant 0 : index
    %c8_267 = arith.constant 8 : index
    %549 = vector.load %arg24[%c0_266, %c8_267] : memref<8x32xf32, #tpu.memory_space<vmem>>, vector<8x8xf32>
    tpu.vector_store %arg24[%c0_266, %c8_267], %548 {strides = array<i32>} : memref<8x32xf32, #tpu.memory_space<vmem>>, vector<8x8xf32>,
    %550 = vector.extract_strided_slice %494 {offsets = [0, 16], sizes = [8, 8], strides = [1, 1]} : vector<8x32xf32> to vector<8x8xf32>
    %551 = arith.truncf %550 : vector<8x8xf32> to vector<8x8xbf16>
    %552 = vector.extract_strided_slice %498 {offsets = [0, 16], sizes = [8, 8], strides = [1, 1]} : vector<8x32xf32> to vector<8x8xf32>
    %553 = arith.truncf %552 : vector<8x8xf32> to vector<8x8xbf16>
    %554 = vector.extract_strided_slice %499 {offsets = [0, 16], sizes = [8, 8], strides = [1, 1]} : vector<8x32xf32> to vector<8x8xf32>
    %555 = arith.truncf %554 : vector<8x8xf32> to vector<8x8xbf16>
    %cst_268 = arith.constant dense<0.000000e+00> : vector<8x8xf32>
    %556 = tpu.matmul %551, %553, %cst_268 {dimension_numbers = #tpu.dot_dimension_numbers<[1], [1], [0], [0], [0, 0, 1, 0], [], []>} : vector<8x8xbf16>, vector<8x8xbf16>, vector<8x8xf32> -> vector<8x8xf32>
    %557 = vector.broadcast %359 : vector<1x8xf32> to vector<8x8xf32>
    %558 = arith.addf %556, %557 : vector<8x8xf32>
    %cst_269 = arith.constant dense<0xFF800000> : vector<8xf32>
    %559 = vector.multi_reduction <maximumf>, %558, %cst_269 [1] : vector<8x8xf32> to vector<8xf32>
    %560 = vector.shape_cast %559 : vector<8xf32> to vector<8x1xf32>
    %561 = vector.broadcast %560 : vector<8x1xf32> to vector<8x8xf32>
    %562 = arith.subf %558, %561 : vector<8x8xf32>
    %563 = math.exp %562 : vector<8x8xf32>
    %cst_270 = arith.constant dense<0.000000e+00> : vector<8xf32>
    %564 = vector.multi_reduction <add>, %563, %cst_270 [1] : vector<8x8xf32> to vector<8xf32>
    %565 = vector.shape_cast %564 : vector<8xf32> to vector<8x1xf32>
    %566 = tpu.reciprocal %565 {approx = true} : vector<8x1xf32> -> vector<8x1xf32>
    %567 = vector.broadcast %566 : vector<8x1xf32> to vector<8x8xf32>
    %568 = arith.mulf %563, %567 : vector<8x8xf32>
    %c0_271 = arith.constant 0 : index
    %c1_272 = arith.constant 1 : index
    %c2_273 = arith.constant 2 : index
    %c0_274 = arith.constant 0 : index
    %c0_275 = arith.constant 0 : index
    %569 = vector.load %arg23[%c0_271, %c1_272, %c2_273, %c0_274, %c0_275] : memref<1x2x4x8x8xf32, #tpu.memory_space<vmem>>, vector<1x1x1x8x8xf32>
    %570 = vector.shape_cast %569 : vector<1x1x1x8x8xf32> to vector<8x8xf32>
    %571 = vector.shape_cast %568 : vector<8x8xf32> to vector<1x1x1x8x8xf32>
    tpu.vector_store %arg23[%c0_271, %c1_272, %c2_273, %c0_274, %c0_275], %571 {strides = array<i32>} : memref<1x2x4x8x8xf32, #tpu.memory_space<vmem>>, vector<1x1x1x8x8xf32>,
    %572 = arith.truncf %568 : vector<8x8xf32> to vector<8x8xbf16>
    %cst_276 = arith.constant dense<0.000000e+00> : vector<8x8xf32>
    %573 = tpu.matmul %572, %555, %cst_276 {dimension_numbers = #tpu.dot_dimension_numbers<[1], [0], [0], [1], [0, 0, 1, 1], [], []>} : vector<8x8xbf16>, vector<8x8xbf16>, vector<8x8xf32> -> vector<8x8xf32>
    %c0_277 = arith.constant 0 : index
    %c16_278 = arith.constant 16 : index
    %574 = vector.load %arg24[%c0_277, %c16_278] : memref<8x32xf32, #tpu.memory_space<vmem>>, vector<8x8xf32>
    tpu.vector_store %arg24[%c0_277, %c16_278], %573 {strides = array<i32>} : memref<8x32xf32, #tpu.memory_space<vmem>>, vector<8x8xf32>,
    %575 = vector.extract_strided_slice %494 {offsets = [0, 24], sizes = [8, 8], strides = [1, 1]} : vector<8x32xf32> to vector<8x8xf32>
    %576 = arith.truncf %575 : vector<8x8xf32> to vector<8x8xbf16>
    %577 = vector.extract_strided_slice %498 {offsets = [0, 24], sizes = [8, 8], strides = [1, 1]} : vector<8x32xf32> to vector<8x8xf32>
    %578 = arith.truncf %577 : vector<8x8xf32> to vector<8x8xbf16>
    %579 = vector.extract_strided_slice %499 {offsets = [0, 24], sizes = [8, 8], strides = [1, 1]} : vector<8x32xf32> to vector<8x8xf32>
    %580 = arith.truncf %579 : vector<8x8xf32> to vector<8x8xbf16>
    %cst_279 = arith.constant dense<0.000000e+00> : vector<8x8xf32>
    %581 = tpu.matmul %576, %578, %cst_279 {dimension_numbers = #tpu.dot_dimension_numbers<[1], [1], [0], [0], [0, 0, 1, 0], [], []>} : vector<8x8xbf16>, vector<8x8xbf16>, vector<8x8xf32> -> vector<8x8xf32>
    %582 = vector.broadcast %359 : vector<1x8xf32> to vector<8x8xf32>
    %583 = arith.addf %581, %582 : vector<8x8xf32>
    %cst_280 = arith.constant dense<0xFF800000> : vector<8xf32>
    %584 = vector.multi_reduction <maximumf>, %583, %cst_280 [1] : vector<8x8xf32> to vector<8xf32>
    %585 = vector.shape_cast %584 : vector<8xf32> to vector<8x1xf32>
    %586 = vector.broadcast %585 : vector<8x1xf32> to vector<8x8xf32>
    %587 = arith.subf %583, %586 : vector<8x8xf32>
    %588 = math.exp %587 : vector<8x8xf32>
    %cst_281 = arith.constant dense<0.000000e+00> : vector<8xf32>
    %589 = vector.multi_reduction <add>, %588, %cst_281 [1] : vector<8x8xf32> to vector<8xf32>
    %590 = vector.shape_cast %589 : vector<8xf32> to vector<8x1xf32>
    %591 = tpu.reciprocal %590 {approx = true} : vector<8x1xf32> -> vector<8x1xf32>
    %592 = vector.broadcast %591 : vector<8x1xf32> to vector<8x8xf32>
    %593 = arith.mulf %588, %592 : vector<8x8xf32>
    %c0_282 = arith.constant 0 : index
    %c1_283 = arith.constant 1 : index
    %c3_284 = arith.constant 3 : index
    %c0_285 = arith.constant 0 : index
    %c0_286 = arith.constant 0 : index
    %594 = vector.load %arg23[%c0_282, %c1_283, %c3_284, %c0_285, %c0_286] : memref<1x2x4x8x8xf32, #tpu.memory_space<vmem>>, vector<1x1x1x8x8xf32>
    %595 = vector.shape_cast %594 : vector<1x1x1x8x8xf32> to vector<8x8xf32>
    %596 = vector.shape_cast %593 : vector<8x8xf32> to vector<1x1x1x8x8xf32>
    tpu.vector_store %arg23[%c0_282, %c1_283, %c3_284, %c0_285, %c0_286], %596 {strides = array<i32>} : memref<1x2x4x8x8xf32, #tpu.memory_space<vmem>>, vector<1x1x1x8x8xf32>,
    %597 = arith.truncf %593 : vector<8x8xf32> to vector<8x8xbf16>
    %cst_287 = arith.constant dense<0.000000e+00> : vector<8x8xf32>
    %598 = tpu.matmul %597, %580, %cst_287 {dimension_numbers = #tpu.dot_dimension_numbers<[1], [0], [0], [1], [0, 0, 1, 1], [], []>} : vector<8x8xbf16>, vector<8x8xbf16>, vector<8x8xf32> -> vector<8x8xf32>
    %c0_288 = arith.constant 0 : index
    %c24_289 = arith.constant 24 : index
    %599 = vector.load %arg24[%c0_288, %c24_289] : memref<8x32xf32, #tpu.memory_space<vmem>>, vector<8x8xf32>
    tpu.vector_store %arg24[%c0_288, %c24_289], %598 {strides = array<i32>} : memref<8x32xf32, #tpu.memory_space<vmem>>, vector<8x8xf32>,
    %c0_290 = arith.constant 0 : index
    %c0_291 = arith.constant 0 : index
    %600 = vector.load %arg24[%c0_290, %c0_291] : memref<8x32xf32, #tpu.memory_space<vmem>>, vector<8x32xf32>
    %601 = arith.truncf %600 : vector<8x32xf32> to vector<8x32xbf16>
    %cst_292 = arith.constant dense<0.000000e+00> : vector<8x32xf32>
    %602 = tpu.matmul %601, %21, %cst_292 {dimension_numbers = #tpu.dot_dimension_numbers<[1], [0], [0], [1], [0, 0, 1, 1], [], []>} : vector<8x32xbf16>, vector<32x32xbf16>, vector<8x32xf32> -> vector<8x32xf32>
    %603 = vector.broadcast %23 : vector<1x32xf32> to vector<8x32xf32>
    %604 = arith.addf %602, %603 : vector<8x32xf32>
    %605 = arith.addf %490, %604 : vector<8x32xf32>
    %cst_293 = arith.constant dense<0.000000e+00> : vector<8xf32>
    %606 = vector.multi_reduction <add>, %605, %cst_293 [1] : vector<8x32xf32> to vector<8xf32>
    %607 = vector.shape_cast %606 : vector<8xf32> to vector<8x1xf32>
    %cst_294 = arith.constant 3.200000e+01 : f32
    %608 = vector.broadcast %cst_294 : f32 to vector<8x1xf32>
    %609 = arith.divf %607, %608 : vector<8x1xf32>
    %610 = vector.broadcast %609 : vector<8x1xf32> to vector<8x32xf32>
    %611 = arith.subf %605, %610 : vector<8x32xf32>
    %612 = arith.mulf %611, %611 : vector<8x32xf32>
    %cst_295 = arith.constant dense<0.000000e+00> : vector<8xf32>
    %613 = vector.multi_reduction <add>, %612, %cst_295 [1] : vector<8x32xf32> to vector<8xf32>
    %614 = vector.shape_cast %613 : vector<8xf32> to vector<8x1xf32>
    %cst_296 = arith.constant 3.200000e+01 : f32
    %615 = vector.broadcast %cst_296 : f32 to vector<8x1xf32>
    %616 = arith.divf %614, %615 : vector<8x1xf32>
    %617 = vector.broadcast %609 : vector<8x1xf32> to vector<8x32xf32>
    %618 = arith.subf %605, %617 : vector<8x32xf32>
    %cst_297 = arith.constant 9.99999997E-7 : f32
    %619 = vector.broadcast %cst_297 : f32 to vector<8x1xf32>
    %620 = arith.addf %616, %619 : vector<8x1xf32>
    %621 = math.rsqrt %620 : vector<8x1xf32>
    %622 = vector.broadcast %621 : vector<8x1xf32> to vector<8x32xf32>
    %623 = arith.mulf %618, %622 : vector<8x32xf32>
    %624 = vector.broadcast %37 : vector<1x32xf32> to vector<8x32xf32>
    %625 = arith.mulf %623, %624 : vector<8x32xf32>
    %626 = vector.broadcast %39 : vector<1x32xf32> to vector<8x32xf32>
    %627 = arith.addf %625, %626 : vector<8x32xf32>
    %628 = arith.truncf %627 : vector<8x32xf32> to vector<8x32xbf16>
    %cst_298 = arith.constant dense<0.000000e+00> : vector<8x64xf32>
    %629 = tpu.matmul %628, %25, %cst_298 {dimension_numbers = #tpu.dot_dimension_numbers<[1], [0], [0], [1], [0, 0, 1, 1], [], []>} : vector<8x32xbf16>, vector<32x64xbf16>, vector<8x64xf32> -> vector<8x64xf32>
    %630 = vector.broadcast %27 : vector<1x64xf32> to vector<8x64xf32>
    %631 = arith.addf %629, %630 : vector<8x64xf32>
    %cst_299 = arith.constant 0.000000e+00 : f32
    %632 = vector.broadcast %cst_299 : f32 to vector<8x64xf32>
    %633 = arith.maximumf %631, %632 : vector<8x64xf32>
    %634 = arith.truncf %633 : vector<8x64xf32> to vector<8x64xbf16>
    %cst_300 = arith.constant dense<0.000000e+00> : vector<8x32xf32>
    %635 = tpu.matmul %634, %29, %cst_300 {dimension_numbers = #tpu.dot_dimension_numbers<[1], [0], [0], [1], [0, 0, 1, 1], [], []>} : vector<8x64xbf16>, vector<64x32xbf16>, vector<8x32xf32> -> vector<8x32xf32>
    %636 = vector.broadcast %31 : vector<1x32xf32> to vector<8x32xf32>
    %637 = arith.addf %635, %636 : vector<8x32xf32>
    %638 = arith.addf %627, %637 : vector<8x32xf32>
    %cst_301 = arith.constant dense<0.000000e+00> : vector<8xf32>
    %639 = vector.multi_reduction <add>, %638, %cst_301 [1] : vector<8x32xf32> to vector<8xf32>
    %640 = vector.shape_cast %639 : vector<8xf32> to vector<8x1xf32>
    %cst_302 = arith.constant 3.200000e+01 : f32
    %641 = vector.broadcast %cst_302 : f32 to vector<8x1xf32>
    %642 = arith.divf %640, %641 : vector<8x1xf32>
    %643 = vector.broadcast %642 : vector<8x1xf32> to vector<8x32xf32>
    %644 = arith.subf %638, %643 : vector<8x32xf32>
    %645 = arith.mulf %644, %644 : vector<8x32xf32>
    %cst_303 = arith.constant dense<0.000000e+00> : vector<8xf32>
    %646 = vector.multi_reduction <add>, %645, %cst_303 [1] : vector<8x32xf32> to vector<8xf32>
    %647 = vector.shape_cast %646 : vector<8xf32> to vector<8x1xf32>
    %cst_304 = arith.constant 3.200000e+01 : f32
    %648 = vector.broadcast %cst_304 : f32 to vector<8x1xf32>
    %649 = arith.divf %647, %648 : vector<8x1xf32>
    %650 = vector.broadcast %642 : vector<8x1xf32> to vector<8x32xf32>
    %651 = arith.subf %638, %650 : vector<8x32xf32>
    %cst_305 = arith.constant 9.99999997E-7 : f32
    %652 = vector.broadcast %cst_305 : f32 to vector<8x1xf32>
    %653 = arith.addf %649, %652 : vector<8x1xf32>
    %654 = math.rsqrt %653 : vector<8x1xf32>
    %655 = vector.broadcast %654 : vector<8x1xf32> to vector<8x32xf32>
    %656 = arith.mulf %651, %655 : vector<8x32xf32>
    %657 = vector.broadcast %41 : vector<1x32xf32> to vector<8x32xf32>
    %658 = arith.mulf %656, %657 : vector<8x32xf32>
    %659 = vector.broadcast %43 : vector<1x32xf32> to vector<8x32xf32>
    %660 = arith.addf %658, %659 : vector<8x32xf32>
    %c1_306 = arith.constant 1 : index
    %c0_307 = arith.constant 0 : index
    %c0_308 = arith.constant 0 : index
    %661 = vector.load %arg21[%c1_306, %c0_307, %c0_308] : memref<2x8x32xf32, #tpu.memory_space<vmem>>, vector<1x8x32xf32>
    %662 = vector.shape_cast %661 : vector<1x8x32xf32> to vector<8x32xf32>
    %663 = vector.shape_cast %660 : vector<8x32xf32> to vector<1x8x32xf32>
    tpu.vector_store %arg21[%c1_306, %c0_307, %c0_308], %663 {strides = array<i32>} : memref<2x8x32xf32, #tpu.memory_space<vmem>>, vector<1x8x32xf32>,
    return
  }
  func.func @transform_0(%arg0: i32) -> (i32, i32, i32) {
    %c0_i32 = arith.constant 0 : i32
    %c0_i32_0 = arith.constant 0 : i32
    %c0_i32_1 = arith.constant 0 : i32
    %c0_i32_2 = arith.constant 0 : i32
    return %c0_i32, %c0_i32_0, %c0_i32_1 : i32, i32, i32
  }
  func.func @transform_1(%arg0: i32) -> (i32, i32, i32) {
    %c0_i32 = arith.constant 0 : i32
    %c0_i32_0 = arith.constant 0 : i32
    %c0_i32_1 = arith.constant 0 : i32
    %c0_i32_2 = arith.constant 0 : i32
    return %c0_i32, %c0_i32_0, %c0_i32_1 : i32, i32, i32
  }
  func.func @transform_2(%arg0: i32) -> (i32, i32) {
    %c0_i32 = arith.constant 0 : i32
    %c0_i32_0 = arith.constant 0 : i32
    %c0_i32_1 = arith.constant 0 : i32
    return %c0_i32, %c0_i32_0 : i32, i32
  }
  func.func @transform_3(%arg0: i32) -> (i32, i32, i32) {
    %c0_i32 = arith.constant 0 : i32
    %c0_i32_0 = arith.constant 0 : i32
    %c0_i32_1 = arith.constant 0 : i32
    %c0_i32_2 = arith.constant 0 : i32
    return %c0_i32, %c0_i32_0, %c0_i32_1 : i32, i32, i32
  }
  func.func @transform_4(%arg0: i32) -> (i32, i32, i32) {
    %c0_i32 = arith.constant 0 : i32
    %c0_i32_0 = arith.constant 0 : i32
    %c0_i32_1 = arith.constant 0 : i32
    return %arg0, %c0_i32, %c0_i32_0 : i32, i32, i32
  }
  func.func @transform_5(%arg0: i32) -> (i32, i32, i32) {
    %c0_i32 = arith.constant 0 : i32
    %c0_i32_0 = arith.constant 0 : i32
    %c0_i32_1 = arith.constant 0 : i32
    return %arg0, %c0_i32, %c0_i32_0 : i32, i32, i32
  }
  func.func @transform_6(%arg0: i32) -> (i32, i32, i32) {
    %c0_i32 = arith.constant 0 : i32
    %c0_i32_0 = arith.constant 0 : i32
    %c0_i32_1 = arith.constant 0 : i32
    return %arg0, %c0_i32, %c0_i32_0 : i32, i32, i32
  }
  func.func @transform_7(%arg0: i32) -> (i32, i32, i32) {
    %c0_i32 = arith.constant 0 : i32
    %c0_i32_0 = arith.constant 0 : i32
    %c0_i32_1 = arith.constant 0 : i32
    return %arg0, %c0_i32, %c0_i32_0 : i32, i32, i32
  }
  func.func @transform_8(%arg0: i32) -> (i32, i32, i32) {
    %c0_i32 = arith.constant 0 : i32
    %c0_i32_0 = arith.constant 0 : i32
    %c0_i32_1 = arith.constant 0 : i32
    return %arg0, %c0_i32, %c0_i32_0 : i32, i32, i32
  }
  func.func @transform_9(%arg0: i32) -> (i32, i32, i32) {
    %c0_i32 = arith.constant 0 : i32
    %c0_i32_0 = arith.constant 0 : i32
    %c0_i32_1 = arith.constant 0 : i32
    return %arg0, %c0_i32, %c0_i32_0 : i32, i32, i32
  }
  func.func @transform_10(%arg0: i32) -> (i32, i32, i32) {
    %c0_i32 = arith.constant 0 : i32
    %c0_i32_0 = arith.constant 0 : i32
    %c0_i32_1 = arith.constant 0 : i32
    return %arg0, %c0_i32, %c0_i32_0 : i32, i32, i32
  }
  func.func @transform_11(%arg0: i32) -> (i32, i32, i32) {
    %c0_i32 = arith.constant 0 : i32
    %c0_i32_0 = arith.constant 0 : i32
    %c0_i32_1 = arith.constant 0 : i32
    return %arg0, %c0_i32, %c0_i32_0 : i32, i32, i32
  }
  func.func @transform_12(%arg0: i32) -> (i32, i32, i32) {
    %c0_i32 = arith.constant 0 : i32
    %c0_i32_0 = arith.constant 0 : i32
    %c0_i32_1 = arith.constant 0 : i32
    return %arg0, %c0_i32, %c0_i32_0 : i32, i32, i32
  }
  func.func @transform_13(%arg0: i32) -> (i32, i32, i32) {
    %c0_i32 = arith.constant 0 : i32
    %c0_i32_0 = arith.constant 0 : i32
    %c0_i32_1 = arith.constant 0 : i32
    return %arg0, %c0_i32, %c0_i32_0 : i32, i32, i32
  }
  func.func @transform_14(%arg0: i32) -> (i32, i32, i32) {
    %c0_i32 = arith.constant 0 : i32
    %c0_i32_0 = arith.constant 0 : i32
    %c0_i32_1 = arith.constant 0 : i32
    return %arg0, %c0_i32, %c0_i32_0 : i32, i32, i32
  }
  func.func @transform_15(%arg0: i32) -> (i32, i32, i32) {
    %c0_i32 = arith.constant 0 : i32
    %c0_i32_0 = arith.constant 0 : i32
    %c0_i32_1 = arith.constant 0 : i32
    return %arg0, %c0_i32, %c0_i32_0 : i32, i32, i32
  }
  func.func @transform_16(%arg0: i32) -> (i32, i32, i32) {
    %c0_i32 = arith.constant 0 : i32
    %c0_i32_0 = arith.constant 0 : i32
    %c0_i32_1 = arith.constant 0 : i32
    return %arg0, %c0_i32, %c0_i32_0 : i32, i32, i32
  }
  func.func @transform_17(%arg0: i32) -> (i32, i32, i32) {
    %c0_i32 = arith.constant 0 : i32
    %c0_i32_0 = arith.constant 0 : i32
    %c0_i32_1 = arith.constant 0 : i32
    return %arg0, %c0_i32, %c0_i32_0 : i32, i32, i32
  }
  func.func @transform_18(%arg0: i32) -> (i32, i32, i32) {
    %c0_i32 = arith.constant 0 : i32
    %c0_i32_0 = arith.constant 0 : i32
    %c0_i32_1 = arith.constant 0 : i32
    return %arg0, %c0_i32, %c0_i32_0 : i32, i32, i32
  }
  func.func @transform_19(%arg0: i32) -> (i32, i32, i32) {
    %c0_i32 = arith.constant 0 : i32
    %c0_i32_0 = arith.constant 0 : i32
    %c0_i32_1 = arith.constant 0 : i32
    return %arg0, %c0_i32, %c0_i32_0 : i32, i32, i32
  }
  func.func @transform_20(%arg0: i32) -> (i32, i32, i32) {
    %c0_i32 = arith.constant 0 : i32
    %c0_i32_0 = arith.constant 0 : i32
    %c0_i32_1 = arith.constant 0 : i32
    %c0_i32_2 = arith.constant 0 : i32
    return %c0_i32, %c0_i32_0, %c0_i32_1 : i32, i32, i32
  }
  func.func @transform_21(%arg0: i32) -> (i32, i32, i32, i32, i32) {
    %c0_i32 = arith.constant 0 : i32
    %c0_i32_0 = arith.constant 0 : i32
    %c0_i32_1 = arith.constant 0 : i32
    %c0_i32_2 = arith.constant 0 : i32
    %c0_i32_3 = arith.constant 0 : i32
    return %arg0, %c0_i32, %c0_i32_0, %c0_i32_1, %c0_i32_2 : i32, i32, i32, i32, i32
  }
  func.func @transform_22(%arg0: i32) -> (i32, i32, i32, i32, i32) {
    %c0_i32 = arith.constant 0 : i32
    %c0_i32_0 = arith.constant 0 : i32
    %c0_i32_1 = arith.constant 0 : i32
    %c0_i32_2 = arith.constant 0 : i32
    %c0_i32_3 = arith.constant 0 : i32
    return %arg0, %c0_i32, %c0_i32_0, %c0_i32_1, %c0_i32_2 : i32, i32, i32, i32, i32
  }
}

</mosaic_0001>

<llo_original>
// kernel: tpu_custom_call.1
$region0: #{tpu_custom_call.1}
  #allocation0 [shape = 'u32[]', space=smem, size = 0x4, offset = 0x4, fixed_abs, tag = 'smem constant byte address 0x4 - core index']
  #allocation1 [shape = 'u32[144,128]{1,0:T(1,128)}', space=vmem, size = 0x12000, scoped, tag = 'internal scratch']
  #allocation2 [shape = 'f32[8,32]{1,0:T(8,128)}', space=vmem, size = 0x1000, scoped, tag = 'scratch operand']
  %s0 = inlined_call_operand.hbm [shape: f32[2,8,32], index: 0, kind: input, shape index: {}, may-alias: {0,20}]
  %s1 = inlined_call_operand.hbm [shape: bf16[2,8,32], index: 1, kind: input, shape index: {}]
  %s2 = inlined_call_operand.hbm [shape: f32[8,8], index: 2, kind: input, shape index: {}]
  %s3 = inlined_call_operand.hbm [shape: f32[2,1,8], index: 3, kind: input, shape index: {}]
  %s4 = inlined_call_operand.hbm [shape: bf16[2,32,96], index: 4, kind: input, shape index: {}]
  %s5 = inlined_call_operand.hbm [shape: f32[2,1,96], index: 5, kind: input, shape index: {}]
  %s6 = inlined_call_operand.hbm [shape: bf16[2,32,32], index: 6, kind: input, shape index: {}]
  %s7 = inlined_call_operand.hbm [shape: f32[2,1,32], index: 7, kind: input, shape index: {}]
  %s8 = inlined_call_operand.hbm [shape: bf16[2,32,32], index: 8, kind: input, shape index: {}]
  %s9 = inlined_call_operand.hbm [shape: f32[2,1,32], index: 9, kind: input, shape index: {}]
  %s10 = inlined_call_operand.hbm [shape: bf16[2,32,64], index: 10, kind: input, shape index: {}]
  %s11 = inlined_call_operand.hbm [shape: f32[2,1,64], index: 11, kind: input, shape index: {}]
  %s12 = inlined_call_operand.hbm [shape: bf16[2,32,32], index: 12, kind: input, shape index: {}]
  %s13 = inlined_call_operand.hbm [shape: f32[2,1,32], index: 13, kind: input, shape index: {}]
  %s14 = inlined_call_operand.hbm [shape: bf16[2,32,64], index: 14, kind: input, shape index: {}]
  %s15 = inlined_call_operand.hbm [shape: f32[2,1,64], index: 15, kind: input, shape index: {}]
  %s16 = inlined_call_operand.hbm [shape: bf16[2,64,32], index: 16, kind: input, shape index: {}]
  %s17 = inlined_call_operand.hbm [shape: f32[2,1,32], index: 17, kind: input, shape index: {}]
  %s18 = inlined_call_operand.hbm [shape: f32[2,3,32], index: 18, kind: input, shape index: {}]
  %s19 = inlined_call_operand.hbm [shape: f32[2,3,32], index: 19, kind: input, shape index: {}]
  %s20 = inlined_call_operand.hbm [shape: f32[2,8,32], index: 20, kind: output, shape index: {0}, may-alias: {0,20}]
  %s21 = inlined_call_operand.hbm [shape: f32[2,2,4,8,8], index: 21, kind: output, shape index: {1}]
  %s22 = inlined_call_operand.hbm [shape: f32[2,2,4,8,8], index: 22, kind: output, shape index: {2}]
  %23 = xla_tuple %s20, %s21, %s22
  %s24 = sld [smem:[#allocation0]]
  $region213: #{tpu_custom_call.1} parent=0
    _
  %s26 = ssub.s32 1, %s24
  %s27 = scalar_select 0, %s26, %s24
  $region1: #{tpu_custom_call.1} parent=0
    #allocation3 [shape = 'u8[8192]{0}', space=vmem, size = 0x2000, scoped, tag = 'input window, operand 0, single buffered']
    #allocation4 [shape = 's32[2]{0}', space=sflag, size = 0x8, scoped, tag = 'scoped memory for tpu_custom_call.1']
    #allocation5 [shape = 's32[2]{0}', space=sflag, size = 0x8, scoped, tag = 'scoped memory for tpu_custom_call.1']
    #allocation6 [shape = 'u8[4096]{0}', space=vmem, size = 0x1000, scoped, tag = 'input window, operand 1, single buffered']
    #allocation7 [shape = 's32[1]{0}', space=sflag, size = 0x4, scoped, tag = 'scoped memory for tpu_custom_call.1']
    #allocation8 [shape = 'u8[4096]{0}', space=vmem, size = 0x1000, scoped, tag = 'input window, operand 2, single buffered']
    #allocation9 [shape = 'u8[1024]{0}', space=vmem, size = 0x400, scoped, tag = 'input window, operand 3, single buffered']
    #allocation10 [shape = 's32[1]{0}', space=sflag, size = 0x4, scoped, tag = 'scoped memory for tpu_custom_call.1']
    #allocation11 [shape = 'u8[16384]{0}', space=vmem, size = 0x4000, scoped, tag = 'input window, operand 4']
    #allocation12 [shape = 'u8[1024]{0}', space=vmem, size = 0x400, scoped, tag = 'input window, operand 5']
    #allocation13 [shape = 'u8[16384]{0}', space=vmem, size = 0x4000, scoped, tag = 'input window, operand 6']
    #allocation14 [shape = 'u8[1024]{0}', space=vmem, size = 0x400, scoped, tag = 'input window, operand 7']
    #allocation15 [shape = 'u8[16384]{0}', space=vmem, size = 0x4000, scoped, tag = 'input window, operand 8']
    #allocation16 [shape = 'u8[1024]{0}', space=vmem, size = 0x400, scoped, tag = 'input window, operand 9']
    #allocation17 [shape = 'u8[16384]{0}', space=vmem, size = 0x4000, scoped, tag = 'input window, operand 10']
    #allocation18 [shape = 'u8[1024]{0}', space=vmem, size = 0x400, scoped, tag = 'input window, operand 11']
    #allocation19 [shape = 'u8[16384]{0}', space=vmem, size = 0x4000, scoped, tag = 'input window, operand 12']
    #allocation20 [shape = 'u8[1024]{0}', space=vmem, size = 0x400, scoped, tag = 'input window, operand 13']
    #allocation21 [shape = 'u8[16384]{0}', space=vmem, size = 0x4000, scoped, tag = 'input window, operand 14']
    #allocation22 [shape = 'u8[1024]{0}', space=vmem, size = 0x400, scoped, tag = 'input window, operand 15']
    #allocation23 [shape = 'u8[32768]{0}', space=vmem, size = 0x8000, scoped, tag = 'input window, operand 16']
    #allocation24 [shape = 'u8[1024]{0}', space=vmem, size = 0x400, scoped, tag = 'input window, operand 17']
    #allocation25 [shape = 'u8[4096]{0}', space=vmem, size = 0x1000, scoped, tag = 'input window, operand 18']
    #allocation26 [shape = 'u8[4096]{0}', space=vmem, size = 0x1000, scoped, tag = 'input window, operand 19']
    #allocation27 [shape = 'u8[8192]{0}', space=vmem, size = 0x2000, scoped, tag = 'output window, operand 0, single buffered']
    #allocation28 [shape = 'u8[65536]{0}', space=vmem, size = 0x10000, scoped, tag = 'output window, operand 1']
    #allocation29 [shape = 's32[2]{0}', space=sflag, size = 0x8, scoped, tag = 'scoped memory for tpu_custom_call.1']
    #allocation30 [shape = 'u8[65536]{0}', space=vmem, size = 0x10000, scoped, tag = 'output window, operand 2']
    %28 = vsyncpa [#allocation4], 0
    %29 = vsyncpa [#allocation7], 0
    %30 = vsyncpa [#allocation10], 0
    %31 = vsyncpa [#allocation5], 0
    %32 = vsyncpa [#allocation29], 0
    %s33 = scalar_lea.sflag [#allocation29], 1
    %34 = vsyncpa %s33, 0
    loop: start=0, step=1, limit=4
    $region2: #{tpu_custom_call.1} parent=1 // loop_pre_header
      _
    $region3: #{tpu_custom_call.1} parent=1 // loop_header
      %s36 = sphi 0, %s40
      %p37 = scmp.ge.s32.totalorder %s36, 4
      %s44 = sphi 0, %s44
      %s46 = sphi 0, %s44
      %s47 = sphi 0, %s46
      %s61 = sphi 0, %s47
      %s65 = sphi 0, %s65
      %s67 = sphi 0, %s65
      %s68 = sphi 0, %s67
      %s82 = sphi 0, %s68
      %s86 = sphi 0, %s86
      %s88 = sphi 0, %s86
      %s89 = sphi 0, %s88
      %s103 = sphi 0, %s89
      %s107 = sphi 0, %s107
      %s109 = sphi 0, %s107
      %s110 = sphi 0, %s109
      %s124 = sphi 0, %s110
      %s130 = sphi 0, %s132
      %s133 = sphi 0, %s130
      %s134 = sphi 0, %s133
      %s150 = sphi 0, %s134
      %s156 = sphi 0, %s158
      %s159 = sphi 0, %s156
      %s160 = sphi 0, %s159
      %s176 = sphi 0, %s160
      %s182 = sphi 0, %s184
      %s185 = sphi 0, %s182
      %s186 = sphi 0, %s185
      %s202 = sphi 0, %s186
      %s208 = sphi 0, %s210
      %s211 = sphi 0, %s208
      %s212 = sphi 0, %s211
      %s228 = sphi 0, %s212
      %s234 = sphi 0, %s236
      %s237 = sphi 0, %s234
      %s238 = sphi 0, %s237
      %s254 = sphi 0, %s238
      %s260 = sphi 0, %s262
      %s263 = sphi 0, %s260
      %s264 = sphi 0, %s263
      %s280 = sphi 0, %s264
      %s286 = sphi 0, %s288
      %s289 = sphi 0, %s286
      %s290 = sphi 0, %s289
      %s306 = sphi 0, %s290
      %s312 = sphi 0, %s314
      %s315 = sphi 0, %s312
      %s316 = sphi 0, %s315
      %s332 = sphi 0, %s316
      %s338 = sphi 0, %s340
      %s341 = sphi 0, %s338
      %s342 = sphi 0, %s341
      %s358 = sphi 0, %s342
      %s364 = sphi 0, %s366
      %s367 = sphi 0, %s364
      %s368 = sphi 0, %s367
      %s384 = sphi 0, %s368
      %s390 = sphi 0, %s392
      %s393 = sphi 0, %s390
      %s394 = sphi 0, %s393
      %s410 = sphi 0, %s394
      %s416 = sphi 0, %s418
      %s419 = sphi 0, %s416
      %s420 = sphi 0, %s419
      %s436 = sphi 0, %s420
      %s442 = sphi 0, %s444
      %s445 = sphi 0, %s442
      %s446 = sphi 0, %s445
      %s462 = sphi 0, %s446
      %s468 = sphi 0, %s470
      %s471 = sphi 0, %s468
      %s472 = sphi 0, %s471
      %s488 = sphi 0, %s472
      %s494 = sphi 0, %s496
      %s497 = sphi 0, %s494
      %s498 = sphi 0, %s497
      %s514 = sphi 0, %s498
      %s520 = sphi 0, %s522
      %s523 = sphi 0, %s520
      %s524 = sphi 0, %s523
      %s540 = sphi 0, %s524
      %s544 = sphi 0, %s544
      %s546 = sphi 0, %s544
      %s547 = sphi 0, %s546
      %s561 = sphi 0, %s547
      %s567 = sphi 0, %s569
      %s570 = sphi 0, %s567
      %s571 = sphi 0, %s570
      %s587 = sphi 0, %s571
      %s593 = sphi 0, %s595
      %s596 = sphi 0, %s593
      %s597 = sphi 0, %s596
      %s613 = sphi 0, %s597
    $region4: #{tpu_custom_call.1} parent=1 // loop_header_branch
      %39 = sbr.rel (%p37) target = $region8
    $region5: #{tpu_custom_call.1} parent=1 // loop_body
      %s41 = ssub.s32 %s36, 1
      %s42 = ssub.s32 %s36, 2
      %s43 = sadd.s32 %s36, 1
      %s45 = sadd.s32 %s44, 1
      %p48 = scmp.eq.s32.totalorder %s36, 1
      %p49 = scmp.ne.s32.totalorder %s44, %s46
      %p50 = scmp.eq.s32.totalorder %s36, 0
      %p51 = por %p49, %p50
      %p52 = scmp.ne.s32.totalorder %s44, %s46
      %p53 = scmp.eq.s32.totalorder %s41, 1
      %p54 = por %p52, %p53
      %p55 = scmp.ne.s32.totalorder %s46, %s47
      %p56 = scmp.eq.s32.totalorder %s41, 0
      %p57 = por %p55, %p56
      %p58 = scmp.ne.s32.totalorder %s46, %s47
      %p59 = scmp.eq.s32.totalorder %s42, 1
      %p60 = por %p58, %p59
      %p62 = scmp.ne.s32.totalorder %s47, %s61
      %p63 = scmp.eq.s32.totalorder %s42, 0
      %p64 = por %p62, %p63
      %s66 = sadd.s32 %s65, 1
      %p69 = scmp.eq.s32.totalorder %s36, 1
      %p70 = scmp.ne.s32.totalorder %s65, %s67
      %p71 = scmp.eq.s32.totalorder %s36, 0
      %p72 = por %p70, %p71
      %p73 = scmp.ne.s32.totalorder %s65, %s67
      %p74 = scmp.eq.s32.totalorder %s41, 1
      %p75 = por %p73, %p74
      %p76 = scmp.ne.s32.totalorder %s67, %s68
      %p77 = scmp.eq.s32.totalorder %s41, 0
      %p78 = por %p76, %p77
      %p79 = scmp.ne.s32.totalorder %s67, %s68
      %p80 = scmp.eq.s32.totalorder %s42, 1
      %p81 = por %p79, %p80
      %p83 = scmp.ne.s32.totalorder %s68, %s82
      %p84 = scmp.eq.s32.totalorder %s42, 0
      %p85 = por %p83, %p84
      %s87 = sadd.s32 %s86, 1
      %p90 = scmp.eq.s32.totalorder %s36, 1
      %p91 = scmp.ne.s32.totalorder %s86, %s88
      %p92 = scmp.eq.s32.totalorder %s36, 0
      %p93 = por %p91, %p92
      %p94 = scmp.ne.s32.totalorder %s86, %s88
      %p95 = scmp.eq.s32.totalorder %s41, 1
      %p96 = por %p94, %p95
      %p97 = scmp.ne.s32.totalorder %s88, %s89
      %p98 = scmp.eq.s32.totalorder %s41, 0
      %p99 = por %p97, %p98
      %p100 = scmp.ne.s32.totalorder %s88, %s89
      %p101 = scmp.eq.s32.totalorder %s42, 1
      %p102 = por %p100, %p101
      %p104 = scmp.ne.s32.totalorder %s89, %s103
      %p105 = scmp.eq.s32.totalorder %s42, 0
      %p106 = por %p104, %p105
      %s108 = sadd.s32 %s107, 1
      %p111 = scmp.eq.s32.totalorder %s36, 1
      %p112 = scmp.ne.s32.totalorder %s107, %s109
      %p113 = scmp.eq.s32.totalorder %s36, 0
      %p114 = por %p112, %p113
      %p115 = scmp.ne.s32.totalorder %s107, %s109
      %p116 = scmp.eq.s32.totalorder %s41, 1
      %p117 = por %p115, %p116
      %p118 = scmp.ne.s32.totalorder %s109, %s110
      %p119 = scmp.eq.s32.totalorder %s41, 0
      %p120 = por %p118, %p119
      %p121 = scmp.ne.s32.totalorder %s109, %s110
      %p122 = scmp.eq.s32.totalorder %s42, 1
      %p123 = por %p121, %p122
      %p125 = scmp.ne.s32.totalorder %s110, %s124
      %p126 = scmp.eq.s32.totalorder %s42, 0
      %p127 = por %p125, %p126
      %s128 = ssub.s32 %s36, %s43
      %p129 = scmp.eq.s32.totalorder %s128, 0
      %s131 = sadd.s32 %s130, 1
      %s132 = scalar_select %p129, %s130, %s131
      %p135 = pneg %p129
      %p136 = scmp.eq.s32.totalorder %s36, 1
      %p137 = por %p135, %p136
      %p138 = scmp.ne.s32.totalorder %s130, %s133
      %p139 = scmp.eq.s32.totalorder %s36, 0
      %p140 = por %p138, %p139
      %p141 = scmp.ne.s32.totalorder %s130, %s133
      %p142 = scmp.eq.s32.totalorder %s41, 1
      %p143 = por %p141, %p142
      %p144 = scmp.ne.s32.totalorder %s133, %s134
      %p145 = scmp.eq.s32.totalorder %s41, 0
      %p146 = por %p144, %p145
      %p147 = scmp.ne.s32.totalorder %s133, %s134
      %p148 = scmp.eq.s32.totalorder %s42, 1
      %p149 = por %p147, %p148
      %p151 = scmp.ne.s32.totalorder %s134, %s150
      %p152 = scmp.eq.s32.totalorder %s42, 0
      %p153 = por %p151, %p152
      %s154 = ssub.s32 %s36, %s43
      %p155 = scmp.eq.s32.totalorder %s154, 0
      %s157 = sadd.s32 %s156, 1
      %s158 = scalar_select %p155, %s156, %s157
      %p161 = pneg %p155
      %p162 = scmp.eq.s32.totalorder %s36, 1
      %p163 = por %p161, %p162
      %p164 = scmp.ne.s32.totalorder %s156, %s159
      %p165 = scmp.eq.s32.totalorder %s36, 0
      %p166 = por %p164, %p165
      %p167 = scmp.ne.s32.totalorder %s156, %s159
      %p168 = scmp.eq.s32.totalorder %s41, 1
      %p169 = por %p167, %p168
      %p170 = scmp.ne.s32.totalorder %s159, %s160
      %p171 = scmp.eq.s32.totalorder %s41, 0
      %p172 = por %p170, %p171
      %p173 = scmp.ne.s32.totalorder %s159, %s160
      %p174 = scmp.eq.s32.totalorder %s42, 1
      %p175 = por %p173, %p174
      %p177 = scmp.ne.s32.totalorder %s160, %s176
      %p178 = scmp.eq.s32.totalorder %s42, 0
      %p179 = por %p177, %p178
      %s180 = ssub.s32 %s36, %s43
      %p181 = scmp.eq.s32.totalorder %s180, 0
      %s183 = sadd.s32 %s182, 1
      %s184 = scalar_select %p181, %s182, %s183
      %p187 = pneg %p181
      %p188 = scmp.eq.s32.totalorder %s36, 1
      %p189 = por %p187, %p188
      %p190 = scmp.ne.s32.totalorder %s182, %s185
      %p191 = scmp.eq.s32.totalorder %s36, 0
      %p192 = por %p190, %p191
      %p193 = scmp.ne.s32.totalorder %s182, %s185
      %p194 = scmp.eq.s32.totalorder %s41, 1
      %p195 = por %p193, %p194
      %p196 = scmp.ne.s32.totalorder %s185, %s186
      %p197 = scmp.eq.s32.totalorder %s41, 0
      %p198 = por %p196, %p197
      %p199 = scmp.ne.s32.totalorder %s185, %s186
      %p200 = scmp.eq.s32.totalorder %s42, 1
      %p201 = por %p199, %p200
      %p203 = scmp.ne.s32.totalorder %s186, %s202
      %p204 = scmp.eq.s32.totalorder %s42, 0
      %p205 = por %p203, %p204
      %s206 = ssub.s32 %s36, %s43
      %p207 = scmp.eq.s32.totalorder %s206, 0
      %s209 = sadd.s32 %s208, 1
      %s210 = scalar_select %p207, %s208, %s209
      %p213 = pneg %p207
      %p214 = scmp.eq.s32.totalorder %s36, 1
      %p215 = por %p213, %p214
      %p216 = scmp.ne.s32.totalorder %s208, %s211
      %p217 = scmp.eq.s32.totalorder %s36, 0
      %p218 = por %p216, %p217
      %p219 = scmp.ne.s32.totalorder %s208, %s211
      %p220 = scmp.eq.s32.totalorder %s41, 1
      %p221 = por %p219, %p220
      %p222 = scmp.ne.s32.totalorder %s211, %s212
      %p223 = scmp.eq.s32.totalorder %s41, 0
      %p224 = por %p222, %p223
      %p225 = scmp.ne.s32.totalorder %s211, %s212
      %p226 = scmp.eq.s32.totalorder %s42, 1
      %p227 = por %p225, %p226
      %p229 = scmp.ne.s32.totalorder %s212, %s228
      %p230 = scmp.eq.s32.totalorder %s42, 0
      %p231 = por %p229, %p230
      %s232 = ssub.s32 %s36, %s43
      %p233 = scmp.eq.s32.totalorder %s232, 0
      %s235 = sadd.s32 %s234, 1
      %s236 = scalar_select %p233, %s234, %s235
      %p239 = pneg %p233
      %p240 = scmp.eq.s32.totalorder %s36, 1
      %p241 = por %p239, %p240
      %p242 = scmp.ne.s32.totalorder %s234, %s237
      %p243 = scmp.eq.s32.totalorder %s36, 0
      %p244 = por %p242, %p243
      %p245 = scmp.ne.s32.totalorder %s234, %s237
      %p246 = scmp.eq.s32.totalorder %s41, 1
      %p247 = por %p245, %p246
      %p248 = scmp.ne.s32.totalorder %s237, %s238
      %p249 = scmp.eq.s32.totalorder %s41, 0
      %p250 = por %p248, %p249
      %p251 = scmp.ne.s32.totalorder %s237, %s238
      %p252 = scmp.eq.s32.totalorder %s42, 1
      %p253 = por %p251, %p252
      %p255 = scmp.ne.s32.totalorder %s238, %s254
      %p256 = scmp.eq.s32.totalorder %s42, 0
      %p257 = por %p255, %p256
      %s258 = ssub.s32 %s36, %s43
      %p259 = scmp.eq.s32.totalorder %s258, 0
      %s261 = sadd.s32 %s260, 1
      %s262 = scalar_select %p259, %s260, %s261
      %p265 = pneg %p259
      %p266 = scmp.eq.s32.totalorder %s36, 1
      %p267 = por %p265, %p266
      %p268 = scmp.ne.s32.totalorder %s260, %s263
      %p269 = scmp.eq.s32.totalorder %s36, 0
      %p270 = por %p268, %p269
      %p271 = scmp.ne.s32.totalorder %s260, %s263
      %p272 = scmp.eq.s32.totalorder %s41, 1
      %p273 = por %p271, %p272
      %p274 = scmp.ne.s32.totalorder %s263, %s264
      %p275 = scmp.eq.s32.totalorder %s41, 0
      %p276 = por %p274, %p275
      %p277 = scmp.ne.s32.totalorder %s263, %s264
      %p278 = scmp.eq.s32.totalorder %s42, 1
      %p279 = por %p277, %p278
      %p281 = scmp.ne.s32.totalorder %s264, %s280
      %p282 = scmp.eq.s32.totalorder %s42, 0
      %p283 = por %p281, %p282
      %s284 = ssub.s32 %s36, %s43
      %p285 = scmp.eq.s32.totalorder %s284, 0
      %s287 = sadd.s32 %s286, 1
      %s288 = scalar_select %p285, %s286, %s287
      %p291 = pneg %p285
      %p292 = scmp.eq.s32.totalorder %s36, 1
      %p293 = por %p291, %p292
      %p294 = scmp.ne.s32.totalorder %s286, %s289
      %p295 = scmp.eq.s32.totalorder %s36, 0
      %p296 = por %p294, %p295
      %p297 = scmp.ne.s32.totalorder %s286, %s289
      %p298 = scmp.eq.s32.totalorder %s41, 1
      %p299 = por %p297, %p298
      %p300 = scmp.ne.s32.totalorder %s289, %s290
      %p301 = scmp.eq.s32.totalorder %s41, 0
      %p302 = por %p300, %p301
      %p303 = scmp.ne.s32.totalorder %s289, %s290
      %p304 = scmp.eq.s32.totalorder %s42, 1
      %p305 = por %p303, %p304
      %p307 = scmp.ne.s32.totalorder %s290, %s306
      %p308 = scmp.eq.s32.totalorder %s42, 0
      %p309 = por %p307, %p308
      %s310 = ssub.s32 %s36, %s43
      %p311 = scmp.eq.s32.totalorder %s310, 0
      %s313 = sadd.s32 %s312, 1
      %s314 = scalar_select %p311, %s312, %s313
      %p317 = pneg %p311
      %p318 = scmp.eq.s32.totalorder %s36, 1
      %p319 = por %p317, %p318
      %p320 = scmp.ne.s32.totalorder %s312, %s315
      %p321 = scmp.eq.s32.totalorder %s36, 0
      %p322 = por %p320, %p321
      %p323 = scmp.ne.s32.totalorder %s312, %s315
      %p324 = scmp.eq.s32.totalorder %s41, 1
      %p325 = por %p323, %p324
      %p326 = scmp.ne.s32.totalorder %s315, %s316
      %p327 = scmp.eq.s32.totalorder %s41, 0
      %p328 = por %p326, %p327
      %p329 = scmp.ne.s32.totalorder %s315, %s316
      %p330 = scmp.eq.s32.totalorder %s42, 1
      %p331 = por %p329, %p330
      %p333 = scmp.ne.s32.totalorder %s316, %s332
      %p334 = scmp.eq.s32.totalorder %s42, 0
      %p335 = por %p333, %p334
      %s336 = ssub.s32 %s36, %s43
      %p337 = scmp.eq.s32.totalorder %s336, 0
      %s339 = sadd.s32 %s338, 1
      %s340 = scalar_select %p337, %s338, %s339
      %p343 = pneg %p337
      %p344 = scmp.eq.s32.totalorder %s36, 1
      %p345 = por %p343, %p344
      %p346 = scmp.ne.s32.totalorder %s338, %s341
      %p347 = scmp.eq.s32.totalorder %s36, 0
      %p348 = por %p346, %p347
      %p349 = scmp.ne.s32.totalorder %s338, %s341
      %p350 = scmp.eq.s32.totalorder %s41, 1
      %p351 = por %p349, %p350
      %p352 = scmp.ne.s32.totalorder %s341, %s342
      %p353 = scmp.eq.s32.totalorder %s41, 0
      %p354 = por %p352, %p353
      %p355 = scmp.ne.s32.totalorder %s341, %s342
      %p356 = scmp.eq.s32.totalorder %s42, 1
      %p357 = por %p355, %p356
      %p359 = scmp.ne.s32.totalorder %s342, %s358
      %p360 = scmp.eq.s32.totalorder %s42, 0
      %p361 = por %p359, %p360
      %s362 = ssub.s32 %s36, %s43
      %p363 = scmp.eq.s32.totalorder %s362, 0
      %s365 = sadd.s32 %s364, 1
      %s366 = scalar_select %p363, %s364, %s365
      %p369 = pneg %p363
      %p370 = scmp.eq.s32.totalorder %s36, 1
      %p371 = por %p369, %p370
      %p372 = scmp.ne.s32.totalorder %s364, %s367
      %p373 = scmp.eq.s32.totalorder %s36, 0
      %p374 = por %p372, %p373
      %p375 = scmp.ne.s32.totalorder %s364, %s367
      %p376 = scmp.eq.s32.totalorder %s41, 1
      %p377 = por %p375, %p376
      %p378 = scmp.ne.s32.totalorder %s367, %s368
      %p379 = scmp.eq.s32.totalorder %s41, 0
      %p380 = por %p378, %p379
      %p381 = scmp.ne.s32.totalorder %s367, %s368
      %p382 = scmp.eq.s32.totalorder %s42, 1
      %p383 = por %p381, %p382
      %p385 = scmp.ne.s32.totalorder %s368, %s384
      %p386 = scmp.eq.s32.totalorder %s42, 0
      %p387 = por %p385, %p386
      %s388 = ssub.s32 %s36, %s43
      %p389 = scmp.eq.s32.totalorder %s388, 0
      %s391 = sadd.s32 %s390, 1
      %s392 = scalar_select %p389, %s390, %s391
      %p395 = pneg %p389
      %p396 = scmp.eq.s32.totalorder %s36, 1
      %p397 = por %p395, %p396
      %p398 = scmp.ne.s32.totalorder %s390, %s393
      %p399 = scmp.eq.s32.totalorder %s36, 0
      %p400 = por %p398, %p399
      %p401 = scmp.ne.s32.totalorder %s390, %s393
      %p402 = scmp.eq.s32.totalorder %s41, 1
      %p403 = por %p401, %p402
      %p404 = scmp.ne.s32.totalorder %s393, %s394
      %p405 = scmp.eq.s32.totalorder %s41, 0
      %p406 = por %p404, %p405
      %p407 = scmp.ne.s32.totalorder %s393, %s394
      %p408 = scmp.eq.s32.totalorder %s42, 1
      %p409 = por %p407, %p408
      %p411 = scmp.ne.s32.totalorder %s394, %s410
      %p412 = scmp.eq.s32.totalorder %s42, 0
      %p413 = por %p411, %p412
      %s414 = ssub.s32 %s36, %s43
      %p415 = scmp.eq.s32.totalorder %s414, 0
      %s417 = sadd.s32 %s416, 1
      %s418 = scalar_select %p415, %s416, %s417
      %p421 = pneg %p415
      %p422 = scmp.eq.s32.totalorder %s36, 1
      %p423 = por %p421, %p422
      %p424 = scmp.ne.s32.totalorder %s416, %s419
      %p425 = scmp.eq.s32.totalorder %s36, 0
      %p426 = por %p424, %p425
      %p427 = scmp.ne.s32.totalorder %s416, %s419
      %p428 = scmp.eq.s32.totalorder %s41, 1
      %p429 = por %p427, %p428
      %p430 = scmp.ne.s32.totalorder %s419, %s420
      %p431 = scmp.eq.s32.totalorder %s41, 0
      %p432 = por %p430, %p431
      %p433 = scmp.ne.s32.totalorder %s419, %s420
      %p434 = scmp.eq.s32.totalorder %s42, 1
      %p435 = por %p433, %p434
      %p437 = scmp.ne.s32.totalorder %s420, %s436
      %p438 = scmp.eq.s32.totalorder %s42, 0
      %p439 = por %p437, %p438
      %s440 = ssub.s32 %s36, %s43
      %p441 = scmp.eq.s32.totalorder %s440, 0
      %s443 = sadd.s32 %s442, 1
      %s444 = scalar_select %p441, %s442, %s443
      %p447 = pneg %p441
      %p448 = scmp.eq.s32.totalorder %s36, 1
      %p449 = por %p447, %p448
      %p450 = scmp.ne.s32.totalorder %s442, %s445
      %p451 = scmp.eq.s32.totalorder %s36, 0
      %p452 = por %p450, %p451
      %p453 = scmp.ne.s32.totalorder %s442, %s445
      %p454 = scmp.eq.s32.totalorder %s41, 1
      %p455 = por %p453, %p454
      %p456 = scmp.ne.s32.totalorder %s445, %s446
      %p457 = scmp.eq.s32.totalorder %s41, 0
      %p458 = por %p456, %p457
      %p459 = scmp.ne.s32.totalorder %s445, %s446
      %p460 = scmp.eq.s32.totalorder %s42, 1
      %p461 = por %p459, %p460
      %p463 = scmp.ne.s32.totalorder %s446, %s462
      %p464 = scmp.eq.s32.totalorder %s42, 0
      %p465 = por %p463, %p464
      %s466 = ssub.s32 %s36, %s43
      %p467 = scmp.eq.s32.totalorder %s466, 0
      %s469 = sadd.s32 %s468, 1
      %s470 = scalar_select %p467, %s468, %s469
      %p473 = pneg %p467
      %p474 = scmp.eq.s32.totalorder %s36, 1
      %p475 = por %p473, %p474
      %p476 = scmp.ne.s32.totalorder %s468, %s471
      %p477 = scmp.eq.s32.totalorder %s36, 0
      %p478 = por %p476, %p477
      %p479 = scmp.ne.s32.totalorder %s468, %s471
      %p480 = scmp.eq.s32.totalorder %s41, 1
      %p481 = por %p479, %p480
      %p482 = scmp.ne.s32.totalorder %s471, %s472
      %p483 = scmp.eq.s32.totalorder %s41, 0
      %p484 = por %p482, %p483
      %p485 = scmp.ne.s32.totalorder %s471, %s472
      %p486 = scmp.eq.s32.totalorder %s42, 1
      %p487 = por %p485, %p486
      %p489 = scmp.ne.s32.totalorder %s472, %s488
      %p490 = scmp.eq.s32.totalorder %s42, 0
      %p491 = por %p489, %p490
      %s492 = ssub.s32 %s36, %s43
      %p493 = scmp.eq.s32.totalorder %s492, 0
      %s495 = sadd.s32 %s494, 1
      %s496 = scalar_select %p493, %s494, %s495
      %p499 = pneg %p493
      %p500 = scmp.eq.s32.totalorder %s36, 1
      %p501 = por %p499, %p500
      %p502 = scmp.ne.s32.totalorder %s494, %s497
      %p503 = scmp.eq.s32.totalorder %s36, 0
      %p504 = por %p502, %p503
      %p505 = scmp.ne.s32.totalorder %s494, %s497
      %p506 = scmp.eq.s32.totalorder %s41, 1
      %p507 = por %p505, %p506
      %p508 = scmp.ne.s32.totalorder %s497, %s498
      %p509 = scmp.eq.s32.totalorder %s41, 0
      %p510 = por %p508, %p509
      %p511 = scmp.ne.s32.totalorder %s497, %s498
      %p512 = scmp.eq.s32.totalorder %s42, 1
      %p513 = por %p511, %p512
      %p515 = scmp.ne.s32.totalorder %s498, %s514
      %p516 = scmp.eq.s32.totalorder %s42, 0
      %p517 = por %p515, %p516
      %s518 = ssub.s32 %s36, %s43
      %p519 = scmp.eq.s32.totalorder %s518, 0
      %s521 = sadd.s32 %s520, 1
      %s522 = scalar_select %p519, %s520, %s521
      %p525 = pneg %p519
      %p526 = scmp.eq.s32.totalorder %s36, 1
      %p527 = por %p525, %p526
      %p528 = scmp.ne.s32.totalorder %s520, %s523
      %p529 = scmp.eq.s32.totalorder %s36, 0
      %p530 = por %p528, %p529
      %p531 = scmp.ne.s32.totalorder %s520, %s523
      %p532 = scmp.eq.s32.totalorder %s41, 1
      %p533 = por %p531, %p532
      %p534 = scmp.ne.s32.totalorder %s523, %s524
      %p535 = scmp.eq.s32.totalorder %s41, 0
      %p536 = por %p534, %p535
      %p537 = scmp.ne.s32.totalorder %s523, %s524
      %p538 = scmp.eq.s32.totalorder %s42, 1
      %p539 = por %p537, %p538
      %p541 = scmp.ne.s32.totalorder %s524, %s540
      %p542 = scmp.eq.s32.totalorder %s42, 0
      %p543 = por %p541, %p542
      %s545 = sadd.s32 %s544, 1
      %p548 = scmp.eq.s32.totalorder %s36, 1
      %p549 = scmp.ne.s32.totalorder %s544, %s546
      %p550 = scmp.eq.s32.totalorder %s36, 0
      %p551 = por %p549, %p550
      %p552 = scmp.ne.s32.totalorder %s544, %s546
      %p553 = scmp.eq.s32.totalorder %s41, 1
      %p554 = por %p552, %p553
      %p555 = scmp.ne.s32.totalorder %s546, %s547
      %p556 = scmp.eq.s32.totalorder %s41, 0
      %p557 = por %p555, %p556
      %p558 = scmp.ne.s32.totalorder %s546, %s547
      %p559 = scmp.eq.s32.totalorder %s42, 1
      %p560 = por %p558, %p559
      %p562 = scmp.ne.s32.totalorder %s547, %s561
      %p563 = scmp.eq.s32.totalorder %s42, 0
      %p564 = por %p562, %p563
      %s565 = ssub.s32 %s36, %s43
      %p566 = scmp.eq.s32.totalorder %s565, 0
      %s568 = sadd.s32 %s567, 1
      %s569 = scalar_select %p566, %s567, %s568
      %p572 = pneg %p566
      %p573 = scmp.eq.s32.totalorder %s36, 1
      %p574 = por %p572, %p573
      %p575 = scmp.ne.s32.totalorder %s567, %s570
      %p576 = scmp.eq.s32.totalorder %s36, 0
      %p577 = por %p575, %p576
      %p578 = scmp.ne.s32.totalorder %s567, %s570
      %p579 = scmp.eq.s32.totalorder %s41, 1
      %p580 = por %p578, %p579
      %p581 = scmp.ne.s32.totalorder %s570, %s571
      %p582 = scmp.eq.s32.totalorder %s41, 0
      %p583 = por %p581, %p582
      %p584 = scmp.ne.s32.totalorder %s570, %s571
      %p585 = scmp.eq.s32.totalorder %s42, 1
      %p586 = por %p584, %p585
      %p588 = scmp.ne.s32.totalorder %s571, %s587
      %p589 = scmp.eq.s32.totalorder %s42, 0
      %p590 = por %p588, %p589
      %s591 = ssub.s32 %s36, %s43
      %p592 = scmp.eq.s32.totalorder %s591, 0
      %s594 = sadd.s32 %s593, 1
      %s595 = scalar_select %p592, %s593, %s594
      %p598 = pneg %p592
      %p599 = scmp.eq.s32.totalorder %s36, 1
      %p600 = por %p598, %p599
      %p601 = scmp.ne.s32.totalorder %s593, %s596
      %p602 = scmp.eq.s32.totalorder %s36, 0
      %p603 = por %p601, %p602
      %p604 = scmp.ne.s32.totalorder %s593, %s596
      %p605 = scmp.eq.s32.totalorder %s41, 1
      %p606 = por %p604, %p605
      %p607 = scmp.ne.s32.totalorder %s596, %s597
      %p608 = scmp.eq.s32.totalorder %s41, 0
      %p609 = por %p607, %p608
      %p610 = scmp.ne.s32.totalorder %s596, %s597
      %p611 = scmp.eq.s32.totalorder %s42, 1
      %p612 = por %p610, %p611
      %p614 = scmp.ne.s32.totalorder %s597, %s613
      %p615 = scmp.eq.s32.totalorder %s42, 0
      %p616 = por %p614, %p615
      %p617 = scmp.le.s32.totalorder 1, %s36
      %p618 = scmp.lt.s32.totalorder %s36, 3
      %p619 = pnand %p617, %p618
      %p620 = pneg %p619
      // Predicated region
      $region9: #{tpu_custom_call.1} parent=5 // pred_check
        _
      $region10: #{tpu_custom_call.1} parent=5 // pred_check_branch
        %622 = sbr.rel (%p619) target = $region12
      $region11: #{tpu_custom_call.1} parent=5 // pred_region
        %s623 = ssub.s32 %s36, 1
        // Predicated region
        $region13: #{tpu_custom_call.1} parent=11 // pred_check
          %p624 = pneg %p57
        $region14: #{tpu_custom_call.1} parent=11 // pred_check_branch
          %626 = sbr.rel (%p624) target = $region16
        $region15: #{tpu_custom_call.1} parent=11 // pred_region
          %s628 = ssub.s32 256, 256
          %629 = vsyncadd [#allocation4], %s628
          %s630 = sshll.u32 [#allocation3], 4
          %s631 = int_to_ptr.vmem [resolvable:$true] %s630
          %636 = dma.hbm_to_vmem [thread:$0]  %s0, 256, %s631, [#allocation4], 128, 128, 8
        $region16: #{tpu_custom_call.1} parent=11 // pred_fallthru
          _
        // Predicated region
        $region17: #{tpu_custom_call.1} parent=11 // pred_check
          %p637 = pneg %p78
        $region18: #{tpu_custom_call.1} parent=11 // pred_check_branch
          %639 = sbr.rel (%p637) target = $region20
        $region19: #{tpu_custom_call.1} parent=11 // pred_region
          %s641 = ssub.s32 128, 128
          %642 = vsyncadd [#allocation7], %s641
          %s643 = sshll.u32 [#allocation6], 4
          %s644 = int_to_ptr.vmem [resolvable:$true] %s643
          %649 = dma.hbm_to_vmem [thread:$0]  %s1, 128, %s644, [#allocation7], 64, 64, 4
        $region20: #{tpu_custom_call.1} parent=11 // pred_fallthru
          _
        // Predicated region
        $region21: #{tpu_custom_call.1} parent=11 // pred_check
          %p650 = pneg %p99
        $region22: #{tpu_custom_call.1} parent=11 // pred_check_branch
          %652 = sbr.rel (%p650) target = $region24
        $region23: #{tpu_custom_call.1} parent=11 // pred_region
          %s654 = ssub.s32 128, 128
          %655 = vsyncadd [#allocation7], %s654
          %s657 = sshll.u32 [#allocation8], 4
          %s658 = int_to_ptr.vmem [resolvable:$true] %s657
          %660 = dma.hbm_to_vmem [thread:$0]  %s2, 128, %s658, [#allocation7]
        $region24: #{tpu_custom_call.1} parent=11 // pred_fallthru
          _
        // Predicated region
        $region25: #{tpu_custom_call.1} parent=11 // pred_check
          %p661 = pneg %p120
        $region26: #{tpu_custom_call.1} parent=11 // pred_check_branch
          %663 = sbr.rel (%p661) target = $region28
        $region27: #{tpu_custom_call.1} parent=11 // pred_region
          %s665 = ssub.s32 32, 32
          %666 = vsyncadd [#allocation10], %s665
          %s667 = sshll.u32 [#allocation9], 4
          %s668 = int_to_ptr.vmem [resolvable:$true] %s667
          %673 = dma.hbm_to_vmem [thread:$0]  %s3, 32, %s668, [#allocation10], 16, 16, 1
        $region28: #{tpu_custom_call.1} parent=11 // pred_fallthru
          _
      $region12: #{tpu_custom_call.1} parent=5 // pred_fallthru
        _
      %p674 = scmp.lt.s32.totalorder %s36, 2
      // Predicated region
      $region29: #{tpu_custom_call.1} parent=5 // pred_check
        %p675 = pneg %p674
      $region30: #{tpu_custom_call.1} parent=5 // pred_check_branch
        %677 = sbr.rel (%p675) target = $region32
      $region31: #{tpu_custom_call.1} parent=5 // pred_region
        // Predicated region
        $region33: #{tpu_custom_call.1} parent=31 // pred_check
          %p678 = pneg %p140
        $region34: #{tpu_custom_call.1} parent=31 // pred_check_branch
          %680 = sbr.rel (%p678) target = $region36
        $region35: #{tpu_custom_call.1} parent=31 // pred_region
          %s681 = sand.u32 %s36, 1
          %s682 = scalar_lea.sflag [#allocation4], %s681
          %s683 = sand.u32 %s130, 1
          %s684 = smul.addr %s683, 16
          %s685 = scalar_lea.vmem [#allocation11], %s684
          %s687 = ssub.s32 256, 256
          %688 = vsyncadd %s682, %s687
          %s689 = smul.addr %s36, 4
          %s690 = smul.addr %s689, 64
          %s691 = scalar_lea.hbm %s4, %s690
          %s692 = sshll.u32 %s685, 4
          %s693 = int_to_ptr.vmem [resolvable:$true] %s692
          %698 = dma.hbm_to_vmem [thread:$0]  %s691, 256, %s693, %s682, 64, 64, 4
        $region36: #{tpu_custom_call.1} parent=31 // pred_fallthru
          _
        // Predicated region
        $region37: #{tpu_custom_call.1} parent=31 // pred_check
          %p699 = pneg %p166
        $region38: #{tpu_custom_call.1} parent=31 // pred_check_branch
          %701 = sbr.rel (%p699) target = $region40
        $region39: #{tpu_custom_call.1} parent=31 // pred_region
          %s702 = sand.u32 %s36, 1
          %s703 = scalar_lea.sflag [#allocation4], %s702
          %s704 = sand.u32 %s156, 1
          %s705 = scalar_lea.vmem [#allocation12], %s704
          %s707 = ssub.s32 16, 16
          %708 = vsyncadd %s703, %s707
          %s709 = smul.addr %s36, 16
          %s710 = scalar_lea.hbm %s5, %s709
          %s712 = sshll.u32 %s705, 4
          %s713 = int_to_ptr.vmem [resolvable:$true] %s712
          %715 = dma.hbm_to_vmem [thread:$0]  %s710, 16, %s713, %s703
        $region40: #{tpu_custom_call.1} parent=31 // pred_fallthru
          _
        // Predicated region
        $region41: #{tpu_custom_call.1} parent=31 // pred_check
          %p716 = pneg %p192
        $region42: #{tpu_custom_call.1} parent=31 // pred_check_branch
          %718 = sbr.rel (%p716) target = $region44
        $region43: #{tpu_custom_call.1} parent=31 // pred_region
          %s719 = sand.u32 %s36, 1
          %s720 = scalar_lea.sflag [#allocation4], %s719
          %s721 = sand.u32 %s182, 1
          %s722 = smul.addr %s721, 16
          %s723 = scalar_lea.vmem [#allocation13], %s722
          %s725 = ssub.s32 256, 256
          %726 = vsyncadd %s720, %s725
          %s727 = smul.addr %s36, 4
          %s728 = smul.addr %s727, 64
          %s729 = scalar_lea.hbm %s6, %s728
          %s730 = sshll.u32 %s723, 4
          %s731 = int_to_ptr.vmem [resolvable:$true] %s730
          %736 = dma.hbm_to_vmem [thread:$0]  %s729, 256, %s731, %s720, 64, 64, 4
        $region44: #{tpu_custom_call.1} parent=31 // pred_fallthru
          _
        // Predicated region
        $region45: #{tpu_custom_call.1} parent=31 // pred_check
          %p737 = pneg %p218
        $region46: #{tpu_custom_call.1} parent=31 // pred_check_branch
          %739 = sbr.rel (%p737) target = $region48
        $region47: #{tpu_custom_call.1} parent=31 // pred_region
          %s740 = sand.u32 %s36, 1
          %s741 = scalar_lea.sflag [#allocation4], %s740
          %s742 = sand.u32 %s208, 1
          %s743 = scalar_lea.vmem [#allocation14], %s742
          %s745 = ssub.s32 16, 16
          %746 = vsyncadd %s741, %s745
          %s747 = smul.addr %s36, 16
          %s748 = scalar_lea.hbm %s7, %s747
          %s750 = sshll.u32 %s743, 4
          %s751 = int_to_ptr.vmem [resolvable:$true] %s750
          %753 = dma.hbm_to_vmem [thread:$0]  %s748, 16, %s751, %s741
        $region48: #{tpu_custom_call.1} parent=31 // pred_fallthru
          _
        // Predicated region
        $region49: #{tpu_custom_call.1} parent=31 // pred_check
          %p754 = pneg %p244
        $region50: #{tpu_custom_call.1} parent=31 // pred_check_branch
          %756 = sbr.rel (%p754) target = $region52
        $region51: #{tpu_custom_call.1} parent=31 // pred_region
          %s757 = sand.u32 %s36, 1
          %s758 = scalar_lea.sflag [#allocation4], %s757
          %s759 = sand.u32 %s234, 1
          %s760 = smul.addr %s759, 16
          %s761 = scalar_lea.vmem [#allocation15], %s760
          %s763 = ssub.s32 256, 256
          %764 = vsyncadd %s758, %s763
          %s765 = smul.addr %s36, 4
          %s766 = smul.addr %s765, 64
          %s767 = scalar_lea.hbm %s8, %s766
          %s768 = sshll.u32 %s761, 4
          %s769 = int_to_ptr.vmem [resolvable:$true] %s768
          %774 = dma.hbm_to_vmem [thread:$0]  %s767, 256, %s769, %s758, 64, 64, 4
        $region52: #{tpu_custom_call.1} parent=31 // pred_fallthru
          _
        // Predicated region
        $region53: #{tpu_custom_call.1} parent=31 // pred_check
          %p775 = pneg %p270
        $region54: #{tpu_custom_call.1} parent=31 // pred_check_branch
          %777 = sbr.rel (%p775) target = $region56
        $region55: #{tpu_custom_call.1} parent=31 // pred_region
          %s778 = sand.u32 %s36, 1
          %s779 = scalar_lea.sflag [#allocation4], %s778
          %s780 = sand.u32 %s260, 1
          %s781 = scalar_lea.vmem [#allocation16], %s780
          %s783 = ssub.s32 16, 16
          %784 = vsyncadd %s779, %s783
          %s785 = smul.addr %s36, 16
          %s786 = scalar_lea.hbm %s9, %s785
          %s788 = sshll.u32 %s781, 4
          %s789 = int_to_ptr.vmem [resolvable:$true] %s788
          %791 = dma.hbm_to_vmem [thread:$0]  %s786, 16, %s789, %s779
        $region56: #{tpu_custom_call.1} parent=31 // pred_fallthru
          _
        // Predicated region
        $region57: #{tpu_custom_call.1} parent=31 // pred_check
          %p792 = pneg %p296
        $region58: #{tpu_custom_call.1} parent=31 // pred_check_branch
          %794 = sbr.rel (%p792) target = $region60
        $region59: #{tpu_custom_call.1} parent=31 // pred_region
          %s795 = sand.u32 %s36, 1
          %s796 = scalar_lea.sflag [#allocation4], %s795
          %s797 = sand.u32 %s286, 1
          %s798 = smul.addr %s797, 16
          %s799 = scalar_lea.vmem [#allocation17], %s798
          %s801 = ssub.s32 256, 256
          %802 = vsyncadd %s796, %s801
          %s803 = smul.addr %s36, 4
          %s804 = smul.addr %s803, 64
          %s805 = scalar_lea.hbm %s10, %s804
          %s806 = sshll.u32 %s799, 4
          %s807 = int_to_ptr.vmem [resolvable:$true] %s806
          %812 = dma.hbm_to_vmem [thread:$0]  %s805, 256, %s807, %s796, 64, 64, 4
        $region60: #{tpu_custom_call.1} parent=31 // pred_fallthru
          _
        // Predicated region
        $region61: #{tpu_custom_call.1} parent=31 // pred_check
          %p813 = pneg %p322
        $region62: #{tpu_custom_call.1} parent=31 // pred_check_branch
          %815 = sbr.rel (%p813) target = $region64
        $region63: #{tpu_custom_call.1} parent=31 // pred_region
          %s816 = sand.u32 %s36, 1
          %s817 = scalar_lea.sflag [#allocation4], %s816
          %s818 = sand.u32 %s312, 1
          %s819 = scalar_lea.vmem [#allocation18], %s818
          %s821 = ssub.s32 16, 16
          %822 = vsyncadd %s817, %s821
          %s823 = smul.addr %s36, 16
          %s824 = scalar_lea.hbm %s11, %s823
          %s826 = sshll.u32 %s819, 4
          %s827 = int_to_ptr.vmem [resolvable:$true] %s826
          %829 = dma.hbm_to_vmem [thread:$0]  %s824, 16, %s827, %s817
        $region64: #{tpu_custom_call.1} parent=31 // pred_fallthru
          _
        // Predicated region
        $region65: #{tpu_custom_call.1} parent=31 // pred_check
          %p830 = pneg %p348
        $region66: #{tpu_custom_call.1} parent=31 // pred_check_branch
          %832 = sbr.rel (%p830) target = $region68
        $region67: #{tpu_custom_call.1} parent=31 // pred_region
          %s833 = sand.u32 %s36, 1
          %s834 = scalar_lea.sflag [#allocation4], %s833
          %s835 = sand.u32 %s338, 1
          %s836 = smul.addr %s835, 16
          %s837 = scalar_lea.vmem [#allocation19], %s836
          %s839 = ssub.s32 256, 256
          %840 = vsyncadd %s834, %s839
          %s841 = smul.addr %s36, 4
          %s842 = smul.addr %s841, 64
          %s843 = scalar_lea.hbm %s12, %s842
          %s844 = sshll.u32 %s837, 4
          %s845 = int_to_ptr.vmem [resolvable:$true] %s844
          %850 = dma.hbm_to_vmem [thread:$0]  %s843, 256, %s845, %s834, 64, 64, 4
        $region68: #{tpu_custom_call.1} parent=31 // pred_fallthru
          _
        // Predicated region
        $region69: #{tpu_custom_call.1} parent=31 // pred_check
          %p851 = pneg %p374
        $region70: #{tpu_custom_call.1} parent=31 // pred_check_branch
          %853 = sbr.rel (%p851) target = $region72
        $region71: #{tpu_custom_call.1} parent=31 // pred_region
          %s854 = sand.u32 %s36, 1
          %s855 = scalar_lea.sflag [#allocation4], %s854
          %s856 = sand.u32 %s364, 1
          %s857 = scalar_lea.vmem [#allocation20], %s856
          %s859 = ssub.s32 16, 16
          %860 = vsyncadd %s855, %s859
          %s861 = smul.addr %s36, 16
          %s862 = scalar_lea.hbm %s13, %s861
          %s864 = sshll.u32 %s857, 4
          %s865 = int_to_ptr.vmem [resolvable:$true] %s864
          %867 = dma.hbm_to_vmem [thread:$0]  %s862, 16, %s865, %s855
        $region72: #{tpu_custom_call.1} parent=31 // pred_fallthru
          _
        // Predicated region
        $region73: #{tpu_custom_call.1} parent=31 // pred_check
          %p868 = pneg %p400
        $region74: #{tpu_custom_call.1} parent=31 // pred_check_branch
          %870 = sbr.rel (%p868) target = $region76
        $region75: #{tpu_custom_call.1} parent=31 // pred_region
          %s871 = sand.u32 %s36, 1
          %s872 = scalar_lea.sflag [#allocation4], %s871
          %s873 = sand.u32 %s390, 1
          %s874 = smul.addr %s873, 16
          %s875 = scalar_lea.vmem [#allocation21], %s874
          %s877 = ssub.s32 256, 256
          %878 = vsyncadd %s872, %s877
          %s879 = smul.addr %s36, 4
          %s880 = smul.addr %s879, 64
          %s881 = scalar_lea.hbm %s14, %s880
          %s882 = sshll.u32 %s875, 4
          %s883 = int_to_ptr.vmem [resolvable:$true] %s882
          %888 = dma.hbm_to_vmem [thread:$0]  %s881, 256, %s883, %s872, 64, 64, 4
        $region76: #{tpu_custom_call.1} parent=31 // pred_fallthru
          _
        // Predicated region
        $region77: #{tpu_custom_call.1} parent=31 // pred_check
          %p889 = pneg %p426
        $region78: #{tpu_custom_call.1} parent=31 // pred_check_branch
          %891 = sbr.rel (%p889) target = $region80
        $region79: #{tpu_custom_call.1} parent=31 // pred_region
          %s892 = sand.u32 %s36, 1
          %s893 = scalar_lea.sflag [#allocation4], %s892
          %s894 = sand.u32 %s416, 1
          %s895 = scalar_lea.vmem [#allocation22], %s894
          %s897 = ssub.s32 16, 16
          %898 = vsyncadd %s893, %s897
          %s899 = smul.addr %s36, 16
          %s900 = scalar_lea.hbm %s15, %s899
          %s902 = sshll.u32 %s895, 4
          %s903 = int_to_ptr.vmem [resolvable:$true] %s902
          %905 = dma.hbm_to_vmem [thread:$0]  %s900, 16, %s903, %s893
        $region80: #{tpu_custom_call.1} parent=31 // pred_fallthru
          _
        // Predicated region
        $region81: #{tpu_custom_call.1} parent=31 // pred_check
          %p906 = pneg %p452
        $region82: #{tpu_custom_call.1} parent=31 // pred_check_branch
          %908 = sbr.rel (%p906) target = $region84
        $region83: #{tpu_custom_call.1} parent=31 // pred_region
          %s909 = sand.u32 %s36, 1
          %s910 = scalar_lea.sflag [#allocation4], %s909
          %s911 = sand.u32 %s442, 1
          %s912 = smul.addr %s911, 32
          %s913 = scalar_lea.vmem [#allocation23], %s912
          %s915 = ssub.s32 512, 512
          %916 = vsyncadd %s910, %s915
          %s917 = smul.addr %s36, 8
          %s918 = smul.addr %s917, 64
          %s919 = scalar_lea.hbm %s16, %s918
          %s920 = sshll.u32 %s913, 4
          %s921 = int_to_ptr.vmem [resolvable:$true] %s920
          %926 = dma.hbm_to_vmem [thread:$0]  %s919, 512, %s921, %s910, 64, 64, 4
        $region84: #{tpu_custom_call.1} parent=31 // pred_fallthru
          _
        // Predicated region
        $region85: #{tpu_custom_call.1} parent=31 // pred_check
          %p927 = pneg %p478
        $region86: #{tpu_custom_call.1} parent=31 // pred_check_branch
          %929 = sbr.rel (%p927) target = $region88
        $region87: #{tpu_custom_call.1} parent=31 // pred_region
          %s930 = sand.u32 %s36, 1
          %s931 = scalar_lea.sflag [#allocation4], %s930
          %s932 = sand.u32 %s468, 1
          %s933 = scalar_lea.vmem [#allocation24], %s932
          %s935 = ssub.s32 16, 16
          %936 = vsyncadd %s931, %s935
          %s937 = smul.addr %s36, 16
          %s938 = scalar_lea.hbm %s17, %s937
          %s940 = sshll.u32 %s933, 4
          %s941 = int_to_ptr.vmem [resolvable:$true] %s940
          %943 = dma.hbm_to_vmem [thread:$0]  %s938, 16, %s941, %s931
        $region88: #{tpu_custom_call.1} parent=31 // pred_fallthru
          _
        // Predicated region
        $region89: #{tpu_custom_call.1} parent=31 // pred_check
          %p944 = pneg %p504
        $region90: #{tpu_custom_call.1} parent=31 // pred_check_branch
          %946 = sbr.rel (%p944) target = $region92
        $region91: #{tpu_custom_call.1} parent=31 // pred_region
          %s947 = sand.u32 %s36, 1
          %s948 = scalar_lea.sflag [#allocation4], %s947
          %s949 = sand.u32 %s494, 1
          %s950 = smul.addr %s949, 4
          %s951 = scalar_lea.vmem [#allocation25], %s950
          %s953 = ssub.s32 64, 64
          %954 = vsyncadd %s948, %s953
          %s955 = smul.addr %s36, 64
          %s956 = scalar_lea.hbm %s18, %s955
          %s958 = sshll.u32 %s951, 4
          %s959 = int_to_ptr.vmem [resolvable:$true] %s958
          %961 = dma.hbm_to_vmem [thread:$0]  %s956, 64, %s959, %s948
        $region92: #{tpu_custom_call.1} parent=31 // pred_fallthru
          _
        // Predicated region
        $region93: #{tpu_custom_call.1} parent=31 // pred_check
          %p962 = pneg %p530
        $region94: #{tpu_custom_call.1} parent=31 // pred_check_branch
          %964 = sbr.rel (%p962) target = $region96
        $region95: #{tpu_custom_call.1} parent=31 // pred_region
          %s965 = sand.u32 %s36, 1
          %s966 = scalar_lea.sflag [#allocation4], %s965
          %s967 = sand.u32 %s520, 1
          %s968 = smul.addr %s967, 4
          %s969 = scalar_lea.vmem [#allocation26], %s968
          %s971 = ssub.s32 64, 64
          %972 = vsyncadd %s966, %s971
          %s973 = smul.addr %s36, 64
          %s974 = scalar_lea.hbm %s19, %s973
          %s976 = sshll.u32 %s969, 4
          %s977 = int_to_ptr.vmem [resolvable:$true] %s976
          %979 = dma.hbm_to_vmem [thread:$0]  %s974, 64, %s977, %s966
        $region96: #{tpu_custom_call.1} parent=31 // pred_fallthru
          _
      $region32: #{tpu_custom_call.1} parent=5 // pred_fallthru
        _
      %p980 = scmp.le.s32.totalorder 1, %s36
      %p981 = scmp.lt.s32.totalorder %s36, 3
      %p982 = pnand %p980, %p981
      %p983 = pneg %p982
      // Predicated region
      $region97: #{tpu_custom_call.1} parent=5 // pred_check
        _
      $region98: #{tpu_custom_call.1} parent=5 // pred_check_branch
        %985 = sbr.rel (%p982) target = $region100
      $region99: #{tpu_custom_call.1} parent=5 // pred_region
        %s986 = ssub.s32 %s36, 1
        // Predicated region
        $region101: #{tpu_custom_call.1} parent=99 // pred_check
          %p987 = pneg %p57
        $region102: #{tpu_custom_call.1} parent=99 // pred_check_branch
          %989 = sbr.rel (%p987) target = $region104
        $region103: #{tpu_custom_call.1} parent=99 // pred_region
          %990 = dma.done [#allocation4], 256
        $region104: #{tpu_custom_call.1} parent=99 // pred_fallthru
          _
        // Predicated region
        $region105: #{tpu_custom_call.1} parent=99 // pred_check
          %p991 = pneg %p78
        $region106: #{tpu_custom_call.1} parent=99 // pred_check_branch
          %993 = sbr.rel (%p991) target = $region108
        $region107: #{tpu_custom_call.1} parent=99 // pred_region
          %994 = dma.done [#allocation7], 128
        $region108: #{tpu_custom_call.1} parent=99 // pred_fallthru
          _
        // Predicated region
        $region109: #{tpu_custom_call.1} parent=99 // pred_check
          %p995 = pneg %p99
        $region110: #{tpu_custom_call.1} parent=99 // pred_check_branch
          %997 = sbr.rel (%p995) target = $region112
        $region111: #{tpu_custom_call.1} parent=99 // pred_region
          %998 = dma.done [#allocation7], 128
        $region112: #{tpu_custom_call.1} parent=99 // pred_fallthru
          _
        // Predicated region
        $region113: #{tpu_custom_call.1} parent=99 // pred_check
          %p999 = pneg %p120
        $region114: #{tpu_custom_call.1} parent=99 // pred_check_branch
          %1001 = sbr.rel (%p999) target = $region116
        $region115: #{tpu_custom_call.1} parent=99 // pred_region
          %1002 = dma.done [#allocation10], 32
        $region116: #{tpu_custom_call.1} parent=99 // pred_fallthru
          _
        %s1003 = sand.u32 %s41, 1
        %s1004 = scalar_lea.sflag [#allocation4], %s1003
        %s1005 = sand.u32 %s133, 1
        %s1006 = smul.addr %s1005, 16
        %s1007 = scalar_lea.vmem [#allocation11], %s1006
        // Predicated region
        $region117: #{tpu_custom_call.1} parent=99 // pred_check
          %p1008 = pneg %p146
        $region118: #{tpu_custom_call.1} parent=99 // pred_check_branch
          %1010 = sbr.rel (%p1008) target = $region120
        $region119: #{tpu_custom_call.1} parent=99 // pred_region
          %1011 = dma.done %s1004, 256
        $region120: #{tpu_custom_call.1} parent=99 // pred_fallthru
          _
        %s1012 = sand.u32 %s41, 1
        %s1013 = scalar_lea.sflag [#allocation4], %s1012
        %s1014 = sand.u32 %s159, 1
        %s1015 = scalar_lea.vmem [#allocation12], %s1014
        // Predicated region
        $region121: #{tpu_custom_call.1} parent=99 // pred_check
          %p1016 = pneg %p172
        $region122: #{tpu_custom_call.1} parent=99 // pred_check_branch
          %1018 = sbr.rel (%p1016) target = $region124
        $region123: #{tpu_custom_call.1} parent=99 // pred_region
          %1019 = dma.done %s1013, 16
        $region124: #{tpu_custom_call.1} parent=99 // pred_fallthru
          _
        %s1020 = sand.u32 %s41, 1
        %s1021 = scalar_lea.sflag [#allocation4], %s1020
        %s1022 = sand.u32 %s185, 1
        %s1023 = smul.addr %s1022, 16
        %s1024 = scalar_lea.vmem [#allocation13], %s1023
        // Predicated region
        $region125: #{tpu_custom_call.1} parent=99 // pred_check
          %p1025 = pneg %p198
        $region126: #{tpu_custom_call.1} parent=99 // pred_check_branch
          %1027 = sbr.rel (%p1025) target = $region128
        $region127: #{tpu_custom_call.1} parent=99 // pred_region
          %1028 = dma.done %s1021, 256
        $region128: #{tpu_custom_call.1} parent=99 // pred_fallthru
          _
        %s1029 = sand.u32 %s41, 1
        %s1030 = scalar_lea.sflag [#allocation4], %s1029
        %s1031 = sand.u32 %s211, 1
        %s1032 = scalar_lea.vmem [#allocation14], %s1031
        // Predicated region
        $region129: #{tpu_custom_call.1} parent=99 // pred_check
          %p1033 = pneg %p224
        $region130: #{tpu_custom_call.1} parent=99 // pred_check_branch
          %1035 = sbr.rel (%p1033) target = $region132
        $region131: #{tpu_custom_call.1} parent=99 // pred_region
          %1036 = dma.done %s1030, 16
        $region132: #{tpu_custom_call.1} parent=99 // pred_fallthru
          _
        %s1037 = sand.u32 %s41, 1
        %s1038 = scalar_lea.sflag [#allocation4], %s1037
        %s1039 = sand.u32 %s237, 1
        %s1040 = smul.addr %s1039, 16
        %s1041 = scalar_lea.vmem [#allocation15], %s1040
        // Predicated region
        $region133: #{tpu_custom_call.1} parent=99 // pred_check
          %p1042 = pneg %p250
        $region134: #{tpu_custom_call.1} parent=99 // pred_check_branch
          %1044 = sbr.rel (%p1042) target = $region136
        $region135: #{tpu_custom_call.1} parent=99 // pred_region
          %1045 = dma.done %s1038, 256
        $region136: #{tpu_custom_call.1} parent=99 // pred_fallthru
          _
        %s1046 = sand.u32 %s41, 1
        %s1047 = scalar_lea.sflag [#allocation4], %s1046
        %s1048 = sand.u32 %s263, 1
        %s1049 = scalar_lea.vmem [#allocation16], %s1048
        // Predicated region
        $region137: #{tpu_custom_call.1} parent=99 // pred_check
          %p1050 = pneg %p276
        $region138: #{tpu_custom_call.1} parent=99 // pred_check_branch
          %1052 = sbr.rel (%p1050) target = $region140
        $region139: #{tpu_custom_call.1} parent=99 // pred_region
          %1053 = dma.done %s1047, 16
        $region140: #{tpu_custom_call.1} parent=99 // pred_fallthru
          _
        %s1054 = sand.u32 %s41, 1
        %s1055 = scalar_lea.sflag [#allocation4], %s1054
        %s1056 = sand.u32 %s289, 1
        %s1057 = smul.addr %s1056, 16
        %s1058 = scalar_lea.vmem [#allocation17], %s1057
        // Predicated region
        $region141: #{tpu_custom_call.1} parent=99 // pred_check
          %p1059 = pneg %p302
        $region142: #{tpu_custom_call.1} parent=99 // pred_check_branch
          %1061 = sbr.rel (%p1059) target = $region144
        $region143: #{tpu_custom_call.1} parent=99 // pred_region
          %1062 = dma.done %s1055, 256
        $region144: #{tpu_custom_call.1} parent=99 // pred_fallthru
          _
        %s1063 = sand.u32 %s41, 1
        %s1064 = scalar_lea.sflag [#allocation4], %s1063
        %s1065 = sand.u32 %s315, 1
        %s1066 = scalar_lea.vmem [#allocation18], %s1065
        // Predicated region
        $region145: #{tpu_custom_call.1} parent=99 // pred_check
          %p1067 = pneg %p328
        $region146: #{tpu_custom_call.1} parent=99 // pred_check_branch
          %1069 = sbr.rel (%p1067) target = $region148
        $region147: #{tpu_custom_call.1} parent=99 // pred_region
          %1070 = dma.done %s1064, 16
        $region148: #{tpu_custom_call.1} parent=99 // pred_fallthru
          _
        %s1071 = sand.u32 %s41, 1
        %s1072 = scalar_lea.sflag [#allocation4], %s1071
        %s1073 = sand.u32 %s341, 1
        %s1074 = smul.addr %s1073, 16
        %s1075 = scalar_lea.vmem [#allocation19], %s1074
        // Predicated region
        $region149: #{tpu_custom_call.1} parent=99 // pred_check
          %p1076 = pneg %p354
        $region150: #{tpu_custom_call.1} parent=99 // pred_check_branch
          %1078 = sbr.rel (%p1076) target = $region152
        $region151: #{tpu_custom_call.1} parent=99 // pred_region
          %1079 = dma.done %s1072, 256
        $region152: #{tpu_custom_call.1} parent=99 // pred_fallthru
          _
        %s1080 = sand.u32 %s41, 1
        %s1081 = scalar_lea.sflag [#allocation4], %s1080
        %s1082 = sand.u32 %s367, 1
        %s1083 = scalar_lea.vmem [#allocation20], %s1082
        // Predicated region
        $region153: #{tpu_custom_call.1} parent=99 // pred_check
          %p1084 = pneg %p380
        $region154: #{tpu_custom_call.1} parent=99 // pred_check_branch
          %1086 = sbr.rel (%p1084) target = $region156
        $region155: #{tpu_custom_call.1} parent=99 // pred_region
          %1087 = dma.done %s1081, 16
        $region156: #{tpu_custom_call.1} parent=99 // pred_fallthru
          _
        %s1088 = sand.u32 %s41, 1
        %s1089 = scalar_lea.sflag [#allocation4], %s1088
        %s1090 = sand.u32 %s393, 1
        %s1091 = smul.addr %s1090, 16
        %s1092 = scalar_lea.vmem [#allocation21], %s1091
        // Predicated region
        $region157: #{tpu_custom_call.1} parent=99 // pred_check
          %p1093 = pneg %p406
        $region158: #{tpu_custom_call.1} parent=99 // pred_check_branch
          %1095 = sbr.rel (%p1093) target = $region160
        $region159: #{tpu_custom_call.1} parent=99 // pred_region
          %1096 = dma.done %s1089, 256
        $region160: #{tpu_custom_call.1} parent=99 // pred_fallthru
          _
        %s1097 = sand.u32 %s41, 1
        %s1098 = scalar_lea.sflag [#allocation4], %s1097
        %s1099 = sand.u32 %s419, 1
        %s1100 = scalar_lea.vmem [#allocation22], %s1099
        // Predicated region
        $region161: #{tpu_custom_call.1} parent=99 // pred_check
          %p1101 = pneg %p432
        $region162: #{tpu_custom_call.1} parent=99 // pred_check_branch
          %1103 = sbr.rel (%p1101) target = $region164
        $region163: #{tpu_custom_call.1} parent=99 // pred_region
          %1104 = dma.done %s1098, 16
        $region164: #{tpu_custom_call.1} parent=99 // pred_fallthru
          _
        %s1105 = sand.u32 %s41, 1
        %s1106 = scalar_lea.sflag [#allocation4], %s1105
        %s1107 = sand.u32 %s445, 1
        %s1108 = smul.addr %s1107, 32
        %s1109 = scalar_lea.vmem [#allocation23], %s1108
        // Predicated region
        $region165: #{tpu_custom_call.1} parent=99 // pred_check
          %p1110 = pneg %p458
        $region166: #{tpu_custom_call.1} parent=99 // pred_check_branch
          %1112 = sbr.rel (%p1110) target = $region168
        $region167: #{tpu_custom_call.1} parent=99 // pred_region
          %1113 = dma.done %s1106, 512
        $region168: #{tpu_custom_call.1} parent=99 // pred_fallthru
          _
        %s1114 = sand.u32 %s41, 1
        %s1115 = scalar_lea.sflag [#allocation4], %s1114
        %s1116 = sand.u32 %s471, 1
        %s1117 = scalar_lea.vmem [#allocation24], %s1116
        // Predicated region
        $region169: #{tpu_custom_call.1} parent=99 // pred_check
          %p1118 = pneg %p484
        $region170: #{tpu_custom_call.1} parent=99 // pred_check_branch
          %1120 = sbr.rel (%p1118) target = $region172
        $region171: #{tpu_custom_call.1} parent=99 // pred_region
          %1121 = dma.done %s1115, 16
        $region172: #{tpu_custom_call.1} parent=99 // pred_fallthru
          _
        %s1122 = sand.u32 %s41, 1
        %s1123 = scalar_lea.sflag [#allocation4], %s1122
        %s1124 = sand.u32 %s497, 1
        %s1125 = smul.addr %s1124, 4
        %s1126 = scalar_lea.vmem [#allocation25], %s1125
        // Predicated region
        $region173: #{tpu_custom_call.1} parent=99 // pred_check
          %p1127 = pneg %p510
        $region174: #{tpu_custom_call.1} parent=99 // pred_check_branch
          %1129 = sbr.rel (%p1127) target = $region176
        $region175: #{tpu_custom_call.1} parent=99 // pred_region
          %1130 = dma.done %s1123, 64
        $region176: #{tpu_custom_call.1} parent=99 // pred_fallthru
          _
        %s1131 = sand.u32 %s41, 1
        %s1132 = scalar_lea.sflag [#allocation4], %s1131
        %s1133 = sand.u32 %s523, 1
        %s1134 = smul.addr %s1133, 4
        %s1135 = scalar_lea.vmem [#allocation26], %s1134
        // Predicated region
        $region177: #{tpu_custom_call.1} parent=99 // pred_check
          %p1136 = pneg %p536
        $region178: #{tpu_custom_call.1} parent=99 // pred_check_branch
          %1138 = sbr.rel (%p1136) target = $region180
        $region179: #{tpu_custom_call.1} parent=99 // pred_region
          %1139 = dma.done %s1132, 64
        $region180: #{tpu_custom_call.1} parent=99 // pred_fallthru
          _
        %p1140 = pneg %p57
        %p1141 = pneg %p54
        %p1142 = pneg %p78
        %p1143 = pneg %p75
        %p1144 = pneg %p99
        %p1145 = pneg %p96
        %p1146 = pneg %p120
        %p1147 = pneg %p117
        %s1148 = sand.u32 %s41, 1
        %s1149 = scalar_lea.sflag [#allocation4], %s1148
        %s1150 = sand.u32 %s133, 1
        %s1151 = smul.addr %s1150, 16
        %s1152 = scalar_lea.vmem [#allocation11], %s1151
        %p1153 = pneg %p146
        %p1154 = pneg %p143
        %s1155 = sand.u32 %s41, 1
        %s1156 = scalar_lea.sflag [#allocation4], %s1155
        %s1157 = sand.u32 %s159, 1
        %s1158 = scalar_lea.vmem [#allocation12], %s1157
        %p1159 = pneg %p172
        %p1160 = pneg %p169
        %s1161 = sand.u32 %s41, 1
        %s1162 = scalar_lea.sflag [#allocation4], %s1161
        %s1163 = sand.u32 %s185, 1
        %s1164 = smul.addr %s1163, 16
        %s1165 = scalar_lea.vmem [#allocation13], %s1164
        %p1166 = pneg %p198
        %p1167 = pneg %p195
        %s1168 = sand.u32 %s41, 1
        %s1169 = scalar_lea.sflag [#allocation4], %s1168
        %s1170 = sand.u32 %s211, 1
        %s1171 = scalar_lea.vmem [#allocation14], %s1170
        %p1172 = pneg %p224
        %p1173 = pneg %p221
        %s1174 = sand.u32 %s41, 1
        %s1175 = scalar_lea.sflag [#allocation4], %s1174
        %s1176 = sand.u32 %s237, 1
        %s1177 = smul.addr %s1176, 16
        %s1178 = scalar_lea.vmem [#allocation15], %s1177
        %p1179 = pneg %p250
        %p1180 = pneg %p247
        %s1181 = sand.u32 %s41, 1
        %s1182 = scalar_lea.sflag [#allocation4], %s1181
        %s1183 = sand.u32 %s263, 1
        %s1184 = scalar_lea.vmem [#allocation16], %s1183
        %p1185 = pneg %p276
        %p1186 = pneg %p273
        %s1187 = sand.u32 %s41, 1
        %s1188 = scalar_lea.sflag [#allocation4], %s1187
        %s1189 = sand.u32 %s289, 1
        %s1190 = smul.addr %s1189, 16
        %s1191 = scalar_lea.vmem [#allocation17], %s1190
        %p1192 = pneg %p302
        %p1193 = pneg %p299
        %s1194 = sand.u32 %s41, 1
        %s1195 = scalar_lea.sflag [#allocation4], %s1194
        %s1196 = sand.u32 %s315, 1
        %s1197 = scalar_lea.vmem [#allocation18], %s1196
        %p1198 = pneg %p328
        %p1199 = pneg %p325
        %s1200 = sand.u32 %s41, 1
        %s1201 = scalar_lea.sflag [#allocation4], %s1200
        %s1202 = sand.u32 %s341, 1
        %s1203 = smul.addr %s1202, 16
        %s1204 = scalar_lea.vmem [#allocation19], %s1203
        %p1205 = pneg %p354
        %p1206 = pneg %p351
        %s1207 = sand.u32 %s41, 1
        %s1208 = scalar_lea.sflag [#allocation4], %s1207
        %s1209 = sand.u32 %s367, 1
        %s1210 = scalar_lea.vmem [#allocation20], %s1209
        %p1211 = pneg %p380
        %p1212 = pneg %p377
        %s1213 = sand.u32 %s41, 1
        %s1214 = scalar_lea.sflag [#allocation4], %s1213
        %s1215 = sand.u32 %s393, 1
        %s1216 = smul.addr %s1215, 16
        %s1217 = scalar_lea.vmem [#allocation21], %s1216
        %p1218 = pneg %p406
        %p1219 = pneg %p403
        %s1220 = sand.u32 %s41, 1
        %s1221 = scalar_lea.sflag [#allocation4], %s1220
        %s1222 = sand.u32 %s419, 1
        %s1223 = scalar_lea.vmem [#allocation22], %s1222
        %p1224 = pneg %p432
        %p1225 = pneg %p429
        %s1226 = sand.u32 %s41, 1
        %s1227 = scalar_lea.sflag [#allocation4], %s1226
        %s1228 = sand.u32 %s445, 1
        %s1229 = smul.addr %s1228, 32
        %s1230 = scalar_lea.vmem [#allocation23], %s1229
        %p1231 = pneg %p458
        %p1232 = pneg %p455
        %s1233 = sand.u32 %s41, 1
        %s1234 = scalar_lea.sflag [#allocation4], %s1233
        %s1235 = sand.u32 %s471, 1
        %s1236 = scalar_lea.vmem [#allocation24], %s1235
        %p1237 = pneg %p484
        %p1238 = pneg %p481
        %s1239 = sand.u32 %s41, 1
        %s1240 = scalar_lea.sflag [#allocation4], %s1239
        %s1241 = sand.u32 %s497, 1
        %s1242 = smul.addr %s1241, 4
        %s1243 = scalar_lea.vmem [#allocation25], %s1242
        %p1244 = pneg %p510
        %p1245 = pneg %p507
        %s1246 = sand.u32 %s41, 1
        %s1247 = scalar_lea.sflag [#allocation4], %s1246
        %s1248 = sand.u32 %s523, 1
        %s1249 = smul.addr %s1248, 4
        %s1250 = scalar_lea.vmem [#allocation26], %s1249
        %p1251 = pneg %p536
        %p1252 = pneg %p533
        %p1253 = pneg %p557
        %p1254 = pneg %p554
        %p1255 = pneg %p583
        %p1256 = pneg %p580
        %s1257 = sand.u32 %s41, 1
        %s1258 = scalar_lea.sflag [#allocation29], %s1257
        %s1259 = sand.u32 %s570, 1
        %s1260 = smul.addr %s1259, 64
        %s1261 = scalar_lea.vmem [#allocation28], %s1260
        %p1262 = pneg %p609
        %p1263 = pneg %p606
        %s1264 = sand.u32 %s41, 1
        %s1265 = scalar_lea.sflag [#allocation29], %s1264
        %s1266 = sand.u32 %s596, 1
        %s1267 = smul.addr %s1266, 64
        %s1268 = scalar_lea.vmem [#allocation30], %s1267
        %p1270 = scmp.eq.s32.totalorder %s41, 0
        // Predicated region
        $region181: #{tpu_custom_call.1} parent=99 // pred_check
          %p1271 = pneg %p1270
        $region182: #{tpu_custom_call.1} parent=99 // pred_check_branch
          %1273 = sbr.rel (%p1271) target = $region184
        $region183: #{tpu_custom_call.1} parent=99 // pred_region
          %v1274 = vld [vmem:[#allocation3] sm:$0xff]
          %v1275 = vld [vmem:[#allocation3 + $0x8] sm:$0xff]
          %vm1276 = vcmask 261120
          %1277 = vst.msk [vmem:[#allocation27] sm:$0xff] %vm1276, %v1274
          %1278 = vst.msk [vmem:[#allocation27 + $0x8] sm:$0xff] %vm1276, %v1275
        $region184: #{tpu_custom_call.1} parent=99 // pred_fallthru
          _
        %v1279 = vld [vmem:[#allocation8] sm:$0xff]
        %v1280 = vld [vmem:[%s1007] sm:$0xf]
        %v1281 = vld [vmem:[%s1007 + $0x4] sm:$0xf]
        %v1282 = vld [vmem:[%s1007 + $0x8] sm:$0xf]
        %v1283 = vld [vmem:[%s1007 + $0xc] sm:$0xf]
        %v1284 = vld [vmem:[%s1015] sm:$0x1]
        %v1285 = vld [vmem:[%s1024] sm:$0xf]
        %v1286 = vld [vmem:[%s1024 + $0x4] sm:$0xf]
        %v1287 = vld [vmem:[%s1024 + $0x8] sm:$0xf]
        %v1288 = vld [vmem:[%s1024 + $0xc] sm:$0xf]
        %v1289 = vld [vmem:[%s1032] sm:$0x1]
        %v1290 = vld [vmem:[%s1041] sm:$0xf]
        %v1291 = vld [vmem:[%s1041 + $0x4] sm:$0xf]
        %v1292 = vld [vmem:[%s1041 + $0x8] sm:$0xf]
        %v1293 = vld [vmem:[%s1041 + $0xc] sm:$0xf]
        %v1294 = vld [vmem:[%s1049] sm:$0x1]
        %v1295 = vld [vmem:[%s1058] sm:$0xf]
        %v1296 = vld [vmem:[%s1058 + $0x4] sm:$0xf]
        %v1297 = vld [vmem:[%s1058 + $0x8] sm:$0xf]
        %v1298 = vld [vmem:[%s1058 + $0xc] sm:$0xf]
        %v1299 = vld [vmem:[%s1066] sm:$0x1]
        %v1300 = vld [vmem:[%s1075] sm:$0xf]
        %v1301 = vld [vmem:[%s1075 + $0x4] sm:$0xf]
        %v1302 = vld [vmem:[%s1075 + $0x8] sm:$0xf]
        %v1303 = vld [vmem:[%s1075 + $0xc] sm:$0xf]
        %v1304 = vld [vmem:[%s1083] sm:$0x1]
        %v1305 = vld [vmem:[%s1092] sm:$0xf]
        %v1306 = vld [vmem:[%s1092 + $0x4] sm:$0xf]
        %v1307 = vld [vmem:[%s1092 + $0x8] sm:$0xf]
        %v1308 = vld [vmem:[%s1092 + $0xc] sm:$0xf]
        %v1309 = vld [vmem:[%s1100] sm:$0x1]
        %v1310 = vld [vmem:[%s1109] sm:$0xf]
        %v1311 = vld [vmem:[%s1109 + $0x4] sm:$0xf]
        %v1312 = vld [vmem:[%s1109 + $0x8] sm:$0xf]
        %v1313 = vld [vmem:[%s1109 + $0xc] sm:$0xf]
        %v1314 = vld [vmem:[%s1109 + $0x10] sm:$0xf]
        %v1315 = vld [vmem:[%s1109 + $0x14] sm:$0xf]
        %v1316 = vld [vmem:[%s1109 + $0x18] sm:$0xf]
        %v1317 = vld [vmem:[%s1109 + $0x1c] sm:$0xf]
        %v1318 = vld [vmem:[%s1117] sm:$0x1]
        %v1319 = vld [vmem:[%s1126] sm:$0x1]
        %v1320 = vld [vmem:[%s1135] sm:$0x1]
        %v1321 = vld [vmem:[%s1126 + $0x1] sm:$0x1]
        %v1322 = vld [vmem:[%s1135 + $0x1] sm:$0x1]
        %v1323 = vld [vmem:[%s1126 + $0x2] sm:$0x1]
        %v1324 = vld [vmem:[%s1135 + $0x2] sm:$0x1]
        %v1325 = vld [vmem:[#allocation27] sm:$0xff]
        %v1326 = vld [vmem:[#allocation6] sm:$0xf]
        %v1327 = vld [vmem:[#allocation9] sm:$0x1]
        %v1328 = vpack.c.bf16 %v1325, %v1325
        %v1330 = vlaneseq
        %v1331 = vshrl.u32 %v1330, 7
        %v1332 = vsub.s32 0, %v1331
        %v1333 = vrot.slane %v1284, %v1332
        %v1339 = vunpack.c.l.b16 %v1280
        %v1340 = vunpack.c.l.b16 %v1281
        %v1341 = vunpack.c.l.b16 %v1282
        %v1342 = vunpack.c.l.b16 %v1283
        %v1343 = vpack.c.b16 %v1340, %v1339
        %v1344 = vpack.c.b16 %v1342, %v1341
        %vm1347 = vcmask 261120
        %v1349 = vsel %vm1347, %v1328, 0
        %1351 = vmatprep.subr.bf16.mxu0 0
        %1352 = vmatpush1.bf16.msra.mxu0 %v1343
        %1353 = vmatprep.subr.bf16.mxu0 0
        %1354 = vmatpush1.bf16.msra.mxu0 %v1344
        %1355 = vmatprep.subr.bf16.mxu0 0
        %1356 = vmatpush1.bf16.msra.mxu0 0
        %1357 = vmatprep.subr.bf16.mxu0 0
        %1358 = vmatpush1.bf16.msra.mxu0 0
        %1359 = vmatprep.subr.bf16.mxu0 0
        %1360 = vmatpush1.bf16.msra.mxu0 0
        %1361 = vmatprep.subr.bf16.mxu0 0
        %1362 = vmatpush1.bf16.msra.mxu0 0
        %1363 = vmatprep.subr.bf16.mxu0 0
        %1364 = vmatpush1.bf16.msra.mxu0 0
        %1365 = vmatprep.subr.bf16.mxu0 0
        %1366 = vmatpush1.bf16.msra.mxu0 0
        %1367 = vmatprep.subr.bf16.mxu0 0
        %1368 = vmatpush1.bf16.msra.mxu0 0
        %1369 = vmatprep.subr.bf16.mxu0 0
        %1370 = vmatpush1.bf16.msra.mxu0 0
        %1371 = vmatprep.subr.bf16.mxu0 0
        %1372 = vmatpush1.bf16.msra.mxu0 0
        %1373 = vmatprep.subr.bf16.mxu0 0
        %1374 = vmatpush1.bf16.msra.mxu0 0
        %1375 = vmatprep.subr.bf16.mxu0 0
        %1376 = vmatpush1.bf16.msra.mxu0 0
        %1377 = vmatprep.subr.bf16.mxu0 0
        %1378 = vmatpush1.bf16.msra.mxu0 0
        %1379 = vmatprep.subr.bf16.mxu0 0
        %1380 = vmatpush1.bf16.msra.mxu0 0
        %1381 = vmatprep.subr.bf16.mxu0 0
        %1382 = vmatpush1.bf16.msra.mxu0 0
        %1383 = vmatprep.mubr.bf16.mxu0 0
        %1384 = vmatmul.mubr.bf16.gmra.mrb[0].mxu0 %v1349
        %v1385 = vpop.f32.mrb[0].mxu0
        %v1386 = vadd.f32 %v1333, %v1385
        %v1387 = vpop.f32.mrb[0].mxu0
        %v1388 = vpop.f32.mrb[0].mxu0
        %v1389 = vpop.f32.mrb[0].mxu0
        %1390 = vdwg.mxu0
        %v1391 = vpack.c.bf16 %v1386, %v1386
        %1393 = vrot.lane.b32.xlu0 %v1391, 96
        %v1394 = vpop.permute.xlu0 %1393
        %vm1395 = vcmask 64512
        %v1397 = vsel %vm1395, %v1391, 0
        %v1400 = vsel %vm1395, %v1394, 0
        %1402 = vmatprep.subr.bf16.mxu0 0
        %1403 = vmatpush1.bf16.xpose.msra.mxu0 %v1400
        %1404 = vmatprep.subr.bf16.mxu0 0
        %1405 = vmatpush1.bf16.xpose.msra.mxu0 0
        %1406 = vmatprep.subr.bf16.mxu0 0
        %1407 = vmatpush1.bf16.xpose.msra.mxu0 0
        %1408 = vmatprep.subr.bf16.mxu0 0
        %1409 = vmatpush1.bf16.xpose.msra.mxu0 0
        %1410 = vmatprep.subr.bf16.mxu0 0
        %1411 = vmatpush1.bf16.xpose.msra.mxu0 0
        %1412 = vmatprep.subr.bf16.mxu0 0
        %1413 = vmatpush1.bf16.xpose.msra.mxu0 0
        %1414 = vmatprep.subr.bf16.mxu0 0
        %1415 = vmatpush1.bf16.xpose.msra.mxu0 0
        %1416 = vmatprep.subr.bf16.mxu0 0
        %1417 = vmatpush1.bf16.xpose.msra.mxu0 0
        %1418 = vmatprep.subr.bf16.mxu0 0
        %1419 = vmatpush1.bf16.xpose.msra.mxu0 0
        %1420 = vmatprep.subr.bf16.mxu0 0
        %1421 = vmatpush1.bf16.xpose.msra.mxu0 0
        %1422 = vmatprep.subr.bf16.mxu0 0
        %1423 = vmatpush1.bf16.xpose.msra.mxu0 0
        %1424 = vmatprep.subr.bf16.mxu0 0
        %1425 = vmatpush1.bf16.xpose.msra.mxu0 0
        %1426 = vmatprep.subr.bf16.mxu0 0
        %1427 = vmatpush1.bf16.xpose.msra.mxu0 0
        %1428 = vmatprep.subr.bf16.mxu0 0
        %1429 = vmatpush1.bf16.xpose.msra.mxu0 0
        %1430 = vmatprep.subr.bf16.mxu0 0
        %1431 = vmatpush1.bf16.xpose.msra.mxu0 0
        %1432 = vmatprep.subr.bf16.mxu0 0
        %1433 = vmatpush1.bf16.xpose.msra.mxu0 0
        %1434 = vmatprep.mubr.bf16.mxu0 0
        %1435 = vmatmul.mubr.bf16.gmra.mrb[0].mxu0 %v1397
        %v1436 = vpop.f32.mrb[0].mxu0
        %v1437 = vadd.f32 %v1279, %v1436
        %v1438 = vpop.f32.mrb[0].mxu0
        %v1439 = vpop.f32.mrb[0].mxu0
        %v1440 = vpop.f32.mrb[0].mxu0
        %1441 = vdwg.mxu0
        %v1442 = vsel %vm1395, %v1437, -inf
        %1443 = vmax.xlane.f32.xlu0 %v1442
        %v1444 = vpop.xlane.xlu0 %1443
        %v1445 = vsub.f32 %v1437, %v1444
        %v1446 = vmul.f32 %v1445, 1.442695
        %v1447 = vpow.pop %v1446
        %v1448 = vsel %vm1395, %v1447, 0.0
        %1449 = vadd.xlane.f32.xlu0 %v1448
        %v1450 = vpop.xlane.xlu0 %1449
        %v1451 = vrcp.pop %v1450
        %v1452 = vmul.f32 %v1447, %v1451
        %1453 = vst.msk [vmem:[%s1261] sm:$0xff] %vm1395, %v1452
        %v1454 = vpack.c.bf16 %v1452, %v1452
        %1455 = vrot.lane.b32.xlu0 %v1391, 64
        %v1456 = vpop.permute.xlu0 %1455
        %v1458 = vsel %vm1395, %v1454, 0
        %vm1460 = vcmask 1043456
        %v1462 = vsel %vm1460, %v1456, 0
        %1464 = vmatprep.subr.bf16.mxu0 0
        %1465 = vmatpush1.bf16.msra.mxu0 %v1462
        %1466 = vmatprep.subr.bf16.mxu0 0
        %1467 = vmatpush1.bf16.msra.mxu0 0
        %1468 = vmatprep.subr.bf16.mxu0 0
        %1469 = vmatpush1.bf16.msra.mxu0 0
        %1470 = vmatprep.subr.bf16.mxu0 0
        %1471 = vmatpush1.bf16.msra.mxu0 0
        %1472 = vmatprep.subr.bf16.mxu0 0
        %1473 = vmatpush1.bf16.msra.mxu0 0
        %1474 = vmatprep.subr.bf16.mxu0 0
        %1475 = vmatpush1.bf16.msra.mxu0 0
        %1476 = vmatprep.subr.bf16.mxu0 0
        %1477 = vmatpush1.bf16.msra.mxu0 0
        %1478 = vmatprep.subr.bf16.mxu0 0
        %1479 = vmatpush1.bf16.msra.mxu0 0
        %1480 = vmatprep.subr.bf16.mxu0 0
        %1481 = vmatpush1.bf16.msra.mxu0 0
        %1482 = vmatprep.subr.bf16.mxu0 0
        %1483 = vmatpush1.bf16.msra.mxu0 0
        %1484 = vmatprep.subr.bf16.mxu0 0
        %1485 = vmatpush1.bf16.msra.mxu0 0
        %1486 = vmatprep.subr.bf16.mxu0 0
        %1487 = vmatpush1.bf16.msra.mxu0 0
        %1488 = vmatprep.subr.bf16.mxu0 0
        %1489 = vmatpush1.bf16.msra.mxu0 0
        %1490 = vmatprep.subr.bf16.mxu0 0
        %1491 = vmatpush1.bf16.msra.mxu0 0
        %1492 = vmatprep.subr.bf16.mxu0 0
        %1493 = vmatpush1.bf16.msra.mxu0 0
        %1494 = vmatprep.subr.bf16.mxu0 0
        %1495 = vmatpush1.bf16.msra.mxu0 0
        %1496 = vmatprep.mubr.bf16.mxu0 0
        %1497 = vmatmul.mubr.bf16.gmra.mrb[0].mxu0 %v1458
        %v1498 = vpop.f32.mrb[0].mxu0
        %v1499 = vadd.f32 0.0, %v1498
        %v1500 = vpop.f32.mrb[0].mxu0
        %v1501 = vpop.f32.mrb[0].mxu0
        %v1502 = vpop.f32.mrb[0].mxu0
        %1503 = vdwg.mxu0
        %1504 = vst.msk [vmem:[#allocation2] sm:$0xff] %vm1395, %v1499
        %1505 = vrot.lane.b32.xlu0 %v1391, 120
        %v1506 = vpop.permute.xlu0 %1505
        %1507 = vrot.lane.b32.xlu0 %v1391, 88
        %v1508 = vpop.permute.xlu0 %1507
        %v1510 = vsel %vm1395, %v1506, 0
        %v1513 = vsel %vm1395, %v1508, 0
        %1515 = vmatprep.subr.bf16.mxu0 0
        %1516 = vmatpush1.bf16.xpose.msra.mxu0 %v1513
        %1517 = vmatprep.subr.bf16.mxu0 0
        %1518 = vmatpush1.bf16.xpose.msra.mxu0 0
        %1519 = vmatprep.subr.bf16.mxu0 0
        %1520 = vmatpush1.bf16.xpose.msra.mxu0 0
        %1521 = vmatprep.subr.bf16.mxu0 0
        %1522 = vmatpush1.bf16.xpose.msra.mxu0 0
        %1523 = vmatprep.subr.bf16.mxu0 0
        %1524 = vmatpush1.bf16.xpose.msra.mxu0 0
        %1525 = vmatprep.subr.bf16.mxu0 0
        %1526 = vmatpush1.bf16.xpose.msra.mxu0 0
        %1527 = vmatprep.subr.bf16.mxu0 0
        %1528 = vmatpush1.bf16.xpose.msra.mxu0 0
        %1529 = vmatprep.subr.bf16.mxu0 0
        %1530 = vmatpush1.bf16.xpose.msra.mxu0 0
        %1531 = vmatprep.subr.bf16.mxu0 0
        %1532 = vmatpush1.bf16.xpose.msra.mxu0 0
        %1533 = vmatprep.subr.bf16.mxu0 0
        %1534 = vmatpush1.bf16.xpose.msra.mxu0 0
        %1535 = vmatprep.subr.bf16.mxu0 0
        %1536 = vmatpush1.bf16.xpose.msra.mxu0 0
        %1537 = vmatprep.subr.bf16.mxu0 0
        %1538 = vmatpush1.bf16.xpose.msra.mxu0 0
        %1539 = vmatprep.subr.bf16.mxu0 0
        %1540 = vmatpush1.bf16.xpose.msra.mxu0 0
        %1541 = vmatprep.subr.bf16.mxu0 0
        %1542 = vmatpush1.bf16.xpose.msra.mxu0 0
        %1543 = vmatprep.subr.bf16.mxu0 0
        %1544 = vmatpush1.bf16.xpose.msra.mxu0 0
        %1545 = vmatprep.subr.bf16.mxu0 0
        %1546 = vmatpush1.bf16.xpose.msra.mxu0 0
        %1547 = vmatprep.mubr.bf16.mxu0 0
        %1548 = vmatmul.mubr.bf16.gmra.mrb[0].mxu0 %v1510
        %v1549 = vpop.f32.mrb[0].mxu0
        %v1550 = vadd.f32 %v1279, %v1549
        %v1551 = vpop.f32.mrb[0].mxu0
        %v1552 = vpop.f32.mrb[0].mxu0
        %v1553 = vpop.f32.mrb[0].mxu0
        %1554 = vdwg.mxu0
        %v1555 = vsel %vm1395, %v1550, -inf
        %1556 = vmax.xlane.f32.xlu0 %v1555
        %v1557 = vpop.xlane.xlu0 %1556
        %v1558 = vsub.f32 %v1550, %v1557
        %v1559 = vmul.f32 %v1558, 1.442695
        %v1560 = vpow.pop %v1559
        %v1561 = vsel %vm1395, %v1560, 0.0
        %1562 = vadd.xlane.f32.xlu0 %v1561
        %v1563 = vpop.xlane.xlu0 %1562
        %v1564 = vrcp.pop %v1563
        %v1565 = vmul.f32 %v1560, %v1564
        %s1566 = scalar_lea.vmem %s1261, 8 [#allocation28]
        %1567 = vst.msk [vmem:[%s1566] sm:$0xff] %vm1395, %v1565
        %v1568 = vpack.c.bf16 %v1565, %v1565
        %1569 = vrot.lane.b32.xlu0 %v1391, 56
        %v1570 = vpop.permute.xlu0 %1569
        %v1572 = vsel %vm1395, %v1568, 0
        %v1575 = vsel %vm1460, %v1570, 0
        %1577 = vmatprep.subr.bf16.mxu0 0
        %1578 = vmatpush1.bf16.msra.mxu0 %v1575
        %1579 = vmatprep.subr.bf16.mxu0 0
        %1580 = vmatpush1.bf16.msra.mxu0 0
        %1581 = vmatprep.subr.bf16.mxu0 0
        %1582 = vmatpush1.bf16.msra.mxu0 0
        %1583 = vmatprep.subr.bf16.mxu0 0
        %1584 = vmatpush1.bf16.msra.mxu0 0
        %1585 = vmatprep.subr.bf16.mxu0 0
        %1586 = vmatpush1.bf16.msra.mxu0 0
        %1587 = vmatprep.subr.bf16.mxu0 0
        %1588 = vmatpush1.bf16.msra.mxu0 0
        %1589 = vmatprep.subr.bf16.mxu0 0
        %1590 = vmatpush1.bf16.msra.mxu0 0
        %1591 = vmatprep.subr.bf16.mxu0 0
        %1592 = vmatpush1.bf16.msra.mxu0 0
        %1593 = vmatprep.subr.bf16.mxu0 0
        %1594 = vmatpush1.bf16.msra.mxu0 0
        %1595 = vmatprep.subr.bf16.mxu0 0
        %1596 = vmatpush1.bf16.msra.mxu0 0
        %1597 = vmatprep.subr.bf16.mxu0 0
        %1598 = vmatpush1.bf16.msra.mxu0 0
        %1599 = vmatprep.subr.bf16.mxu0 0
        %1600 = vmatpush1.bf16.msra.mxu0 0
        %1601 = vmatprep.subr.bf16.mxu0 0
        %1602 = vmatpush1.bf16.msra.mxu0 0
        %1603 = vmatprep.subr.bf16.mxu0 0
        %1604 = vmatpush1.bf16.msra.mxu0 0
        %1605 = vmatprep.subr.bf16.mxu0 0
        %1606 = vmatpush1.bf16.msra.mxu0 0
        %1607 = vmatprep.subr.bf16.mxu0 0
        %1608 = vmatpush1.bf16.msra.mxu0 0
        %1609 = vmatprep.mubr.bf16.mxu0 0
        %1610 = vmatmul.mubr.bf16.gmra.mrb[0].mxu0 %v1572
        %v1611 = vpop.f32.mrb[0].mxu0
        %v1612 = vadd.f32 0.0, %v1611
        %v1613 = vpop.f32.mrb[0].mxu0
        %v1614 = vpop.f32.mrb[0].mxu0
        %v1615 = vpop.f32.mrb[0].mxu0
        %1616 = vdwg.mxu0
        %1618 = vrot.lane.b32.xlu0 %v1612, 8
        %v1619 = vpop.permute.xlu0 %1618
        %vm1621 = vcmask 130112
        %1622 = vst.msk [vmem:[#allocation2] sm:$0xff] %vm1621, %v1619
        %1623 = vrot.lane.b32.xlu0 %v1391, 112
        %v1624 = vpop.permute.xlu0 %1623
        %1625 = vrot.lane.b32.xlu0 %v1391, 80
        %v1626 = vpop.permute.xlu0 %1625
        %v1628 = vsel %vm1395, %v1624, 0
        %v1631 = vsel %vm1395, %v1626, 0
        %1633 = vmatprep.subr.bf16.mxu0 0
        %1634 = vmatpush1.bf16.xpose.msra.mxu0 %v1631
        %1635 = vmatprep.subr.bf16.mxu0 0
        %1636 = vmatpush1.bf16.xpose.msra.mxu0 0
        %1637 = vmatprep.subr.bf16.mxu0 0
        %1638 = vmatpush1.bf16.xpose.msra.mxu0 0
        %1639 = vmatprep.subr.bf16.mxu0 0
        %1640 = vmatpush1.bf16.xpose.msra.mxu0 0
        %1641 = vmatprep.subr.bf16.mxu0 0
        %1642 = vmatpush1.bf16.xpose.msra.mxu0 0
        %1643 = vmatprep.subr.bf16.mxu0 0
        %1644 = vmatpush1.bf16.xpose.msra.mxu0 0
        %1645 = vmatprep.subr.bf16.mxu0 0
        %1646 = vmatpush1.bf16.xpose.msra.mxu0 0
        %1647 = vmatprep.subr.bf16.mxu0 0
        %1648 = vmatpush1.bf16.xpose.msra.mxu0 0
        %1649 = vmatprep.subr.bf16.mxu0 0
        %1650 = vmatpush1.bf16.xpose.msra.mxu0 0
        %1651 = vmatprep.subr.bf16.mxu0 0
        %1652 = vmatpush1.bf16.xpose.msra.mxu0 0
        %1653 = vmatprep.subr.bf16.mxu0 0
        %1654 = vmatpush1.bf16.xpose.msra.mxu0 0
        %1655 = vmatprep.subr.bf16.mxu0 0
        %1656 = vmatpush1.bf16.xpose.msra.mxu0 0
        %1657 = vmatprep.subr.bf16.mxu0 0
        %1658 = vmatpush1.bf16.xpose.msra.mxu0 0
        %1659 = vmatprep.subr.bf16.mxu0 0
        %1660 = vmatpush1.bf16.xpose.msra.mxu0 0
        %1661 = vmatprep.subr.bf16.mxu0 0
        %1662 = vmatpush1.bf16.xpose.msra.mxu0 0
        %1663 = vmatprep.subr.bf16.mxu0 0
        %1664 = vmatpush1.bf16.xpose.msra.mxu0 0
        %1665 = vmatprep.mubr.bf16.mxu0 0
        %1666 = vmatmul.mubr.bf16.gmra.mrb[0].mxu0 %v1628
        %v1667 = vpop.f32.mrb[0].mxu0
        %v1668 = vadd.f32 %v1279, %v1667
        %v1669 = vpop.f32.mrb[0].mxu0
        %v1670 = vpop.f32.mrb[0].mxu0
        %v1671 = vpop.f32.mrb[0].mxu0
        %1672 = vdwg.mxu0
        %v1673 = vsel %vm1395, %v1668, -inf
        %1674 = vmax.xlane.f32.xlu0 %v1673
        %v1675 = vpop.xlane.xlu0 %1674
        %v1676 = vsub.f32 %v1668, %v1675
        %v1677 = vmul.f32 %v1676, 1.442695
        %v1678 = vpow.pop %v1677
        %v1679 = vsel %vm1395, %v1678, 0.0
        %1680 = vadd.xlane.f32.xlu0 %v1679
        %v1681 = vpop.xlane.xlu0 %1680
        %v1682 = vrcp.pop %v1681
        %v1683 = vmul.f32 %v1678, %v1682
        %s1684 = scalar_lea.vmem %s1261, 16 [#allocation28]
        %1685 = vst.msk [vmem:[%s1684] sm:$0xff] %vm1395, %v1683
        %v1686 = vpack.c.bf16 %v1683, %v1683
        %1687 = vrot.lane.b32.xlu0 %v1391, 48
        %v1688 = vpop.permute.xlu0 %1687
        %v1690 = vsel %vm1395, %v1686, 0
        %v1693 = vsel %vm1460, %v1688, 0
        %1695 = vmatprep.subr.bf16.mxu0 0
        %1696 = vmatpush1.bf16.msra.mxu0 %v1693
        %1697 = vmatprep.subr.bf16.mxu0 0
        %1698 = vmatpush1.bf16.msra.mxu0 0
        %1699 = vmatprep.subr.bf16.mxu0 0
        %1700 = vmatpush1.bf16.msra.mxu0 0
        %1701 = vmatprep.subr.bf16.mxu0 0
        %1702 = vmatpush1.bf16.msra.mxu0 0
        %1703 = vmatprep.subr.bf16.mxu0 0
        %1704 = vmatpush1.bf16.msra.mxu0 0
        %1705 = vmatprep.subr.bf16.mxu0 0
        %1706 = vmatpush1.bf16.msra.mxu0 0
        %1707 = vmatprep.subr.bf16.mxu0 0
        %1708 = vmatpush1.bf16.msra.mxu0 0
        %1709 = vmatprep.subr.bf16.mxu0 0
        %1710 = vmatpush1.bf16.msra.mxu0 0
        %1711 = vmatprep.subr.bf16.mxu0 0
        %1712 = vmatpush1.bf16.msra.mxu0 0
        %1713 = vmatprep.subr.bf16.mxu0 0
        %1714 = vmatpush1.bf16.msra.mxu0 0
        %1715 = vmatprep.subr.bf16.mxu0 0
        %1716 = vmatpush1.bf16.msra.mxu0 0
        %1717 = vmatprep.subr.bf16.mxu0 0
        %1718 = vmatpush1.bf16.msra.mxu0 0
        %1719 = vmatprep.subr.bf16.mxu0 0
        %1720 = vmatpush1.bf16.msra.mxu0 0
        %1721 = vmatprep.subr.bf16.mxu0 0
        %1722 = vmatpush1.bf16.msra.mxu0 0
        %1723 = vmatprep.subr.bf16.mxu0 0
        %1724 = vmatpush1.bf16.msra.mxu0 0
        %1725 = vmatprep.subr.bf16.mxu0 0
        %1726 = vmatpush1.bf16.msra.mxu0 0
        %1727 = vmatprep.mubr.bf16.mxu0 0
        %1728 = vmatmul.mubr.bf16.gmra.mrb[0].mxu0 %v1690
        %v1729 = vpop.f32.mrb[0].mxu0
        %v1730 = vadd.f32 0.0, %v1729
        %v1731 = vpop.f32.mrb[0].mxu0
        %v1732 = vpop.f32.mrb[0].mxu0
        %v1733 = vpop.f32.mrb[0].mxu0
        %1734 = vdwg.mxu0
        %1736 = vrot.lane.b32.xlu0 %v1730, 16
        %v1737 = vpop.permute.xlu0 %1736
        %vm1739 = vcmask 195712
        %1740 = vst.msk [vmem:[#allocation2] sm:$0xff] %vm1739, %v1737
        %1741 = vrot.lane.b32.xlu0 %v1391, 104
        %v1742 = vpop.permute.xlu0 %1741
        %1743 = vrot.lane.b32.xlu0 %v1391, 72
        %v1744 = vpop.permute.xlu0 %1743
        %v1746 = vsel %vm1395, %v1742, 0
        %v1749 = vsel %vm1395, %v1744, 0
        %1751 = vmatprep.subr.bf16.mxu0 0
        %1752 = vmatpush1.bf16.xpose.msra.mxu0 %v1749
        %1753 = vmatprep.subr.bf16.mxu0 0
        %1754 = vmatpush1.bf16.xpose.msra.mxu0 0
        %1755 = vmatprep.subr.bf16.mxu0 0
        %1756 = vmatpush1.bf16.xpose.msra.mxu0 0
        %1757 = vmatprep.subr.bf16.mxu0 0
        %1758 = vmatpush1.bf16.xpose.msra.mxu0 0
        %1759 = vmatprep.subr.bf16.mxu0 0
        %1760 = vmatpush1.bf16.xpose.msra.mxu0 0
        %1761 = vmatprep.subr.bf16.mxu0 0
        %1762 = vmatpush1.bf16.xpose.msra.mxu0 0
        %1763 = vmatprep.subr.bf16.mxu0 0
        %1764 = vmatpush1.bf16.xpose.msra.mxu0 0
        %1765 = vmatprep.subr.bf16.mxu0 0
        %1766 = vmatpush1.bf16.xpose.msra.mxu0 0
        %1767 = vmatprep.subr.bf16.mxu0 0
        %1768 = vmatpush1.bf16.xpose.msra.mxu0 0
        %1769 = vmatprep.subr.bf16.mxu0 0
        %1770 = vmatpush1.bf16.xpose.msra.mxu0 0
        %1771 = vmatprep.subr.bf16.mxu0 0
        %1772 = vmatpush1.bf16.xpose.msra.mxu0 0
        %1773 = vmatprep.subr.bf16.mxu0 0
        %1774 = vmatpush1.bf16.xpose.msra.mxu0 0
        %1775 = vmatprep.subr.bf16.mxu0 0
        %1776 = vmatpush1.bf16.xpose.msra.mxu0 0
        %1777 = vmatprep.subr.bf16.mxu0 0
        %1778 = vmatpush1.bf16.xpose.msra.mxu0 0
        %1779 = vmatprep.subr.bf16.mxu0 0
        %1780 = vmatpush1.bf16.xpose.msra.mxu0 0
        %1781 = vmatprep.subr.bf16.mxu0 0
        %1782 = vmatpush1.bf16.xpose.msra.mxu0 0
        %1783 = vmatprep.mubr.bf16.mxu0 0
        %1784 = vmatmul.mubr.bf16.gmra.mrb[0].mxu0 %v1746
        %v1785 = vpop.f32.mrb[0].mxu0
        %v1786 = vadd.f32 %v1279, %v1785
        %v1787 = vpop.f32.mrb[0].mxu0
        %v1788 = vpop.f32.mrb[0].mxu0
        %v1789 = vpop.f32.mrb[0].mxu0
        %1790 = vdwg.mxu0
        %v1791 = vsel %vm1395, %v1786, -inf
        %1792 = vmax.xlane.f32.xlu0 %v1791
        %v1793 = vpop.xlane.xlu0 %1792
        %v1794 = vsub.f32 %v1786, %v1793
        %v1795 = vmul.f32 %v1794, 1.442695
        %v1796 = vpow.pop %v1795
        %v1797 = vsel %vm1395, %v1796, 0.0
        %1798 = vadd.xlane.f32.xlu0 %v1797
        %v1799 = vpop.xlane.xlu0 %1798
        %v1800 = vrcp.pop %v1799
        %v1801 = vmul.f32 %v1796, %v1800
        %s1802 = scalar_lea.vmem %s1261, 24 [#allocation28]
        %1803 = vst.msk [vmem:[%s1802] sm:$0xff] %vm1395, %v1801
        %v1804 = vpack.c.bf16 %v1801, %v1801
        %1805 = vrot.lane.b32.xlu0 %v1391, 40
        %v1806 = vpop.permute.xlu0 %1805
        %v1808 = vsel %vm1395, %v1804, 0
        %v1811 = vsel %vm1460, %v1806, 0
        %1813 = vmatprep.subr.bf16.mxu0 0
        %1814 = vmatpush1.bf16.msra.mxu0 %v1811
        %1815 = vmatprep.subr.bf16.mxu0 0
        %1816 = vmatpush1.bf16.msra.mxu0 0
        %1817 = vmatprep.subr.bf16.mxu0 0
        %1818 = vmatpush1.bf16.msra.mxu0 0
        %1819 = vmatprep.subr.bf16.mxu0 0
        %1820 = vmatpush1.bf16.msra.mxu0 0
        %1821 = vmatprep.subr.bf16.mxu0 0
        %1822 = vmatpush1.bf16.msra.mxu0 0
        %1823 = vmatprep.subr.bf16.mxu0 0
        %1824 = vmatpush1.bf16.msra.mxu0 0
        %1825 = vmatprep.subr.bf16.mxu0 0
        %1826 = vmatpush1.bf16.msra.mxu0 0
        %1827 = vmatprep.subr.bf16.mxu0 0
        %1828 = vmatpush1.bf16.msra.mxu0 0
        %1829 = vmatprep.subr.bf16.mxu0 0
        %1830 = vmatpush1.bf16.msra.mxu0 0
        %1831 = vmatprep.subr.bf16.mxu0 0
        %1832 = vmatpush1.bf16.msra.mxu0 0
        %1833 = vmatprep.subr.bf16.mxu0 0
        %1834 = vmatpush1.bf16.msra.mxu0 0
        %1835 = vmatprep.subr.bf16.mxu0 0
        %1836 = vmatpush1.bf16.msra.mxu0 0
        %1837 = vmatprep.subr.bf16.mxu0 0
        %1838 = vmatpush1.bf16.msra.mxu0 0
        %1839 = vmatprep.subr.bf16.mxu0 0
        %1840 = vmatpush1.bf16.msra.mxu0 0
        %1841 = vmatprep.subr.bf16.mxu0 0
        %1842 = vmatpush1.bf16.msra.mxu0 0
        %1843 = vmatprep.subr.bf16.mxu0 0
        %1844 = vmatpush1.bf16.msra.mxu0 0
        %1845 = vmatprep.mubr.bf16.mxu0 0
        %1846 = vmatmul.mubr.bf16.gmra.mrb[0].mxu0 %v1808
        %v1847 = vpop.f32.mrb[0].mxu0
        %v1848 = vadd.f32 0.0, %v1847
        %v1849 = vpop.f32.mrb[0].mxu0
        %v1850 = vpop.f32.mrb[0].mxu0
        %v1851 = vpop.f32.mrb[0].mxu0
        %1852 = vdwg.mxu0
        %1854 = vrot.lane.b32.xlu0 %v1848, 24
        %v1855 = vpop.permute.xlu0 %1854
        %vm1857 = vcmask 261312
        %1858 = vst.msk [vmem:[#allocation2] sm:$0xff] %vm1857, %v1855
        %v1859 = vld [vmem:[#allocation2] sm:$0xff]
        %v1860 = vpack.c.bf16 %v1859, %v1859
        %v1862 = vlaneseq
        %v1863 = vshrl.u32 %v1862, 7
        %v1864 = vsub.s32 0, %v1863
        %v1865 = vrot.slane %v1289, %v1864
        %v1871 = vunpack.c.l.b16 %v1285
        %v1872 = vunpack.c.l.b16 %v1286
        %v1873 = vunpack.c.l.b16 %v1287
        %v1874 = vunpack.c.l.b16 %v1288
        %v1875 = vpack.c.b16 %v1872, %v1871
        %v1876 = vpack.c.b16 %v1874, %v1873
        %v1880 = vsel %vm1347, %v1860, 0
        %1882 = vmatprep.subr.bf16.mxu0 0
        %1883 = vmatpush1.bf16.msra.mxu0 %v1875
        %1884 = vmatprep.subr.bf16.mxu0 0
        %1885 = vmatpush1.bf16.msra.mxu0 %v1876
        %1886 = vmatprep.subr.bf16.mxu0 0
        %1887 = vmatpush1.bf16.msra.mxu0 0
        %1888 = vmatprep.subr.bf16.mxu0 0
        %1889 = vmatpush1.bf16.msra.mxu0 0
        %1890 = vmatprep.subr.bf16.mxu0 0
        %1891 = vmatpush1.bf16.msra.mxu0 0
        %1892 = vmatprep.subr.bf16.mxu0 0
        %1893 = vmatpush1.bf16.msra.mxu0 0
        %1894 = vmatprep.subr.bf16.mxu0 0
        %1895 = vmatpush1.bf16.msra.mxu0 0
        %1896 = vmatprep.subr.bf16.mxu0 0
        %1897 = vmatpush1.bf16.msra.mxu0 0
        %1898 = vmatprep.subr.bf16.mxu0 0
        %1899 = vmatpush1.bf16.msra.mxu0 0
        %1900 = vmatprep.subr.bf16.mxu0 0
        %1901 = vmatpush1.bf16.msra.mxu0 0
        %1902 = vmatprep.subr.bf16.mxu0 0
        %1903 = vmatpush1.bf16.msra.mxu0 0
        %1904 = vmatprep.subr.bf16.mxu0 0
        %1905 = vmatpush1.bf16.msra.mxu0 0
        %1906 = vmatprep.subr.bf16.mxu0 0
        %1907 = vmatpush1.bf16.msra.mxu0 0
        %1908 = vmatprep.subr.bf16.mxu0 0
        %1909 = vmatpush1.bf16.msra.mxu0 0
        %1910 = vmatprep.subr.bf16.mxu0 0
        %1911 = vmatpush1.bf16.msra.mxu0 0
        %1912 = vmatprep.subr.bf16.mxu0 0
        %1913 = vmatpush1.bf16.msra.mxu0 0
        %1914 = vmatprep.mubr.bf16.mxu0 0
        %1915 = vmatmul.mubr.bf16.gmra.mrb[0].mxu0 %v1880
        %v1916 = vpop.f32.mrb[0].mxu0
        %v1917 = vadd.f32 %v1865, %v1916
        %v1918 = vpop.f32.mrb[0].mxu0
        %v1919 = vpop.f32.mrb[0].mxu0
        %v1920 = vpop.f32.mrb[0].mxu0
        %1921 = vdwg.mxu0
        %v1922 = vadd.f32 %v1325, %v1917
        %v1923 = vsel %vm1347, %v1922, 0.0
        %1924 = vadd.xlane.f32.xlu0 %v1923
        %v1925 = vpop.xlane.xlu0 %1924
        %v1926 = vrcp.pop 32.0
        %v1927 = vmul.f32 %v1925, %v1926
        %v1928 = vsub.f32 %v1922, %v1927
        %v1929 = vmul.f32 %v1928, %v1928
        %v1930 = vsel %vm1347, %v1929, 0.0
        %1931 = vadd.xlane.f32.xlu0 %v1930
        %v1932 = vpop.xlane.xlu0 %1931
        %v1933 = vmul.f32 %v1932, %v1926
        %v1934 = vadd.f32 %v1933, 1e-06
        %v1935 = vrsqrt.pop %v1934
        %v1936 = vmul.f32 %v1928, %v1935
        %v1937 = vlaneseq
        %v1938 = vshrl.u32 %v1937, 7
        %v1939 = vsub.s32 0, %v1938
        %v1940 = vrot.slane %v1319, %v1939
        %v1941 = vmul.f32 %v1936, %v1940
        %v1942 = vlaneseq
        %v1943 = vshrl.u32 %v1942, 7
        %v1944 = vsub.s32 0, %v1943
        %v1945 = vrot.slane %v1320, %v1944
        %v1946 = vadd.f32 %v1941, %v1945
        %v1947 = vpack.c.bf16 %v1946, %v1946
        %v1949 = vlaneseq
        %v1950 = vshrl.u32 %v1949, 7
        %v1951 = vsub.s32 0, %v1950
        %v1952 = vrot.slane %v1294, %v1951
        %v1958 = vunpack.c.l.b16 %v1290
        %v1959 = vunpack.c.l.b16 %v1291
        %v1960 = vunpack.c.l.b16 %v1292
        %v1961 = vunpack.c.l.b16 %v1293
        %v1962 = vpack.c.b16 %v1959, %v1958
        %v1963 = vpack.c.b16 %v1961, %v1960
        %v1967 = vsel %vm1347, %v1947, 0
        %1969 = vmatprep.subr.bf16.mxu0 0
        %1970 = vmatpush1.bf16.msra.mxu0 %v1962
        %1971 = vmatprep.subr.bf16.mxu0 0
        %1972 = vmatpush1.bf16.msra.mxu0 %v1963
        %1973 = vmatprep.subr.bf16.mxu0 0
        %1974 = vmatpush1.bf16.msra.mxu0 0
        %1975 = vmatprep.subr.bf16.mxu0 0
        %1976 = vmatpush1.bf16.msra.mxu0 0
        %1977 = vmatprep.subr.bf16.mxu0 0
        %1978 = vmatpush1.bf16.msra.mxu0 0
        %1979 = vmatprep.subr.bf16.mxu0 0
        %1980 = vmatpush1.bf16.msra.mxu0 0
        %1981 = vmatprep.subr.bf16.mxu0 0
        %1982 = vmatpush1.bf16.msra.mxu0 0
        %1983 = vmatprep.subr.bf16.mxu0 0
        %1984 = vmatpush1.bf16.msra.mxu0 0
        %1985 = vmatprep.subr.bf16.mxu0 0
        %1986 = vmatpush1.bf16.msra.mxu0 0
        %1987 = vmatprep.subr.bf16.mxu0 0
        %1988 = vmatpush1.bf16.msra.mxu0 0
        %1989 = vmatprep.subr.bf16.mxu0 0
        %1990 = vmatpush1.bf16.msra.mxu0 0
        %1991 = vmatprep.subr.bf16.mxu0 0
        %1992 = vmatpush1.bf16.msra.mxu0 0
        %1993 = vmatprep.subr.bf16.mxu0 0
        %1994 = vmatpush1.bf16.msra.mxu0 0
        %1995 = vmatprep.subr.bf16.mxu0 0
        %1996 = vmatpush1.bf16.msra.mxu0 0
        %1997 = vmatprep.subr.bf16.mxu0 0
        %1998 = vmatpush1.bf16.msra.mxu0 0
        %1999 = vmatprep.subr.bf16.mxu0 0
        %2000 = vmatpush1.bf16.msra.mxu0 0
        %2001 = vmatprep.mubr.bf16.mxu0 0
        %2002 = vmatmul.mubr.bf16.gmra.mrb[0].mxu0 %v1967
        %v2003 = vpop.f32.mrb[0].mxu0
        %v2004 = vadd.f32 %v1952, %v2003
        %v2005 = vpop.f32.mrb[0].mxu0
        %v2006 = vpop.f32.mrb[0].mxu0
        %v2007 = vpop.f32.mrb[0].mxu0
        %2008 = vdwg.mxu0
        %v2010 = vlaneseq
        %v2011 = vshrl.u32 %v2010, 7
        %v2012 = vsub.s32 0, %v2011
        %v2013 = vrot.slane %v1299, %v2012
        %v2019 = vunpack.c.l.b16 %v1295
        %v2020 = vunpack.c.l.b16 %v1296
        %v2021 = vunpack.c.l.b16 %v1297
        %v2022 = vunpack.c.l.b16 %v1298
        %v2023 = vpack.c.b16 %v2020, %v2019
        %v2024 = vpack.c.b16 %v2022, %v2021
        %v2028 = vsel %vm1347, %v1326, 0
        %2030 = vmatprep.subr.bf16.mxu0 0
        %2031 = vmatpush1.bf16.msra.mxu0 %v2023
        %2032 = vmatprep.subr.bf16.mxu0 0
        %2033 = vmatpush1.bf16.msra.mxu0 %v2024
        %2034 = vmatprep.subr.bf16.mxu0 0
        %2035 = vmatpush1.bf16.msra.mxu0 0
        %2036 = vmatprep.subr.bf16.mxu0 0
        %2037 = vmatpush1.bf16.msra.mxu0 0
        %2038 = vmatprep.subr.bf16.mxu0 0
        %2039 = vmatpush1.bf16.msra.mxu0 0
        %2040 = vmatprep.subr.bf16.mxu0 0
        %2041 = vmatpush1.bf16.msra.mxu0 0
        %2042 = vmatprep.subr.bf16.mxu0 0
        %2043 = vmatpush1.bf16.msra.mxu0 0
        %2044 = vmatprep.subr.bf16.mxu0 0
        %2045 = vmatpush1.bf16.msra.mxu0 0
        %2046 = vmatprep.subr.bf16.mxu0 0
        %2047 = vmatpush1.bf16.msra.mxu0 0
        %2048 = vmatprep.subr.bf16.mxu0 0
        %2049 = vmatpush1.bf16.msra.mxu0 0
        %2050 = vmatprep.subr.bf16.mxu0 0
        %2051 = vmatpush1.bf16.msra.mxu0 0
        %2052 = vmatprep.subr.bf16.mxu0 0
        %2053 = vmatpush1.bf16.msra.mxu0 0
        %2054 = vmatprep.subr.bf16.mxu0 0
        %2055 = vmatpush1.bf16.msra.mxu0 0
        %2056 = vmatprep.subr.bf16.mxu0 0
        %2057 = vmatpush1.bf16.msra.mxu0 0
        %2058 = vmatprep.subr.bf16.mxu0 0
        %2059 = vmatpush1.bf16.msra.mxu0 0
        %2060 = vmatprep.subr.bf16.mxu0 0
        %2061 = vmatpush1.bf16.msra.mxu0 0
        %2062 = vmatprep.mubr.bf16.mxu0 0
        %2063 = vmatmul.mubr.bf16.gmra.mrb[0].mxu0 %v2028
        %v2064 = vpop.f32.mrb[0].mxu0
        %v2065 = vadd.f32 %v2013, %v2064
        %v2066 = vpop.f32.mrb[0].mxu0
        %v2067 = vpop.f32.mrb[0].mxu0
        %v2068 = vpop.f32.mrb[0].mxu0
        %2069 = vdwg.mxu0
        %v2070 = vpack.c.bf16 %v2004, %v2004
        %v2071 = vpack.c.bf16 %v2065, %v2065
        %v2073 = vlaneseq
        %v2074 = vshrl.u32 %v2073, 7
        %v2075 = vsub.s32 0, %v2074
        %v2076 = vrot.slane %v1327, %v2075
        %v2079 = vsel %vm1395, %v2070, 0
        %v2082 = vsel %vm1395, %v2071, 0
        %2084 = vmatprep.subr.bf16.mxu0 0
        %2085 = vmatpush1.bf16.xpose.msra.mxu0 %v2082
        %2086 = vmatprep.subr.bf16.mxu0 0
        %2087 = vmatpush1.bf16.xpose.msra.mxu0 0
        %2088 = vmatprep.subr.bf16.mxu0 0
        %2089 = vmatpush1.bf16.xpose.msra.mxu0 0
        %2090 = vmatprep.subr.bf16.mxu0 0
        %2091 = vmatpush1.bf16.xpose.msra.mxu0 0
        %2092 = vmatprep.subr.bf16.mxu0 0
        %2093 = vmatpush1.bf16.xpose.msra.mxu0 0
        %2094 = vmatprep.subr.bf16.mxu0 0
        %2095 = vmatpush1.bf16.xpose.msra.mxu0 0
        %2096 = vmatprep.subr.bf16.mxu0 0
        %2097 = vmatpush1.bf16.xpose.msra.mxu0 0
        %2098 = vmatprep.subr.bf16.mxu0 0
        %2099 = vmatpush1.bf16.xpose.msra.mxu0 0
        %2100 = vmatprep.subr.bf16.mxu0 0
        %2101 = vmatpush1.bf16.xpose.msra.mxu0 0
        %2102 = vmatprep.subr.bf16.mxu0 0
        %2103 = vmatpush1.bf16.xpose.msra.mxu0 0
        %2104 = vmatprep.subr.bf16.mxu0 0
        %2105 = vmatpush1.bf16.xpose.msra.mxu0 0
        %2106 = vmatprep.subr.bf16.mxu0 0
        %2107 = vmatpush1.bf16.xpose.msra.mxu0 0
        %2108 = vmatprep.subr.bf16.mxu0 0
        %2109 = vmatpush1.bf16.xpose.msra.mxu0 0
        %2110 = vmatprep.subr.bf16.mxu0 0
        %2111 = vmatpush1.bf16.xpose.msra.mxu0 0
        %2112 = vmatprep.subr.bf16.mxu0 0
        %2113 = vmatpush1.bf16.xpose.msra.mxu0 0
        %2114 = vmatprep.subr.bf16.mxu0 0
        %2115 = vmatpush1.bf16.xpose.msra.mxu0 0
        %2116 = vmatprep.mubr.bf16.mxu0 0
        %2117 = vmatmul.mubr.bf16.gmra.mrb[0].mxu0 %v2079
        %v2118 = vpop.f32.mrb[0].mxu0
        %v2119 = vadd.f32 %v2076, %v2118
        %v2120 = vpop.f32.mrb[0].mxu0
        %v2121 = vpop.f32.mrb[0].mxu0
        %v2122 = vpop.f32.mrb[0].mxu0
        %2123 = vdwg.mxu0
        %v2124 = vsel %vm1395, %v2119, -inf
        %2125 = vmax.xlane.f32.xlu0 %v2124
        %v2126 = vpop.xlane.xlu0 %2125
        %v2127 = vsub.f32 %v2119, %v2126
        %v2128 = vmul.f32 %v2127, 1.442695
        %v2129 = vpow.pop %v2128
        %v2130 = vsel %vm1395, %v2129, 0.0
        %2131 = vadd.xlane.f32.xlu0 %v2130
        %v2132 = vpop.xlane.xlu0 %2131
        %v2133 = vrcp.pop %v2132
        %v2134 = vmul.f32 %v2129, %v2133
        %2135 = vst.msk [vmem:[%s1268] sm:$0xff] %vm1395, %v2134
        %v2136 = vpack.c.bf16 %v2134, %v2134
        %2138 = vrot.lane.b32.xlu0 %v2071, 96
        %v2139 = vpop.permute.xlu0 %2138
        %v2141 = vsel %vm1395, %v2136, 0
        %v2144 = vsel %vm1460, %v2139, 0
        %2146 = vmatprep.subr.bf16.mxu0 0
        %2147 = vmatpush1.bf16.msra.mxu0 %v2144
        %2148 = vmatprep.subr.bf16.mxu0 0
        %2149 = vmatpush1.bf16.msra.mxu0 0
        %2150 = vmatprep.subr.bf16.mxu0 0
        %2151 = vmatpush1.bf16.msra.mxu0 0
        %2152 = vmatprep.subr.bf16.mxu0 0
        %2153 = vmatpush1.bf16.msra.mxu0 0
        %2154 = vmatprep.subr.bf16.mxu0 0
        %2155 = vmatpush1.bf16.msra.mxu0 0
        %2156 = vmatprep.subr.bf16.mxu0 0
        %2157 = vmatpush1.bf16.msra.mxu0 0
        %2158 = vmatprep.subr.bf16.mxu0 0
        %2159 = vmatpush1.bf16.msra.mxu0 0
        %2160 = vmatprep.subr.bf16.mxu0 0
        %2161 = vmatpush1.bf16.msra.mxu0 0
        %2162 = vmatprep.subr.bf16.mxu0 0
        %2163 = vmatpush1.bf16.msra.mxu0 0
        %2164 = vmatprep.subr.bf16.mxu0 0
        %2165 = vmatpush1.bf16.msra.mxu0 0
        %2166 = vmatprep.subr.bf16.mxu0 0
        %2167 = vmatpush1.bf16.msra.mxu0 0
        %2168 = vmatprep.subr.bf16.mxu0 0
        %2169 = vmatpush1.bf16.msra.mxu0 0
        %2170 = vmatprep.subr.bf16.mxu0 0
        %2171 = vmatpush1.bf16.msra.mxu0 0
        %2172 = vmatprep.subr.bf16.mxu0 0
        %2173 = vmatpush1.bf16.msra.mxu0 0
        %2174 = vmatprep.subr.bf16.mxu0 0
        %2175 = vmatpush1.bf16.msra.mxu0 0
        %2176 = vmatprep.subr.bf16.mxu0 0
        %2177 = vmatpush1.bf16.msra.mxu0 0
        %2178 = vmatprep.mubr.bf16.mxu0 0
        %2179 = vmatmul.mubr.bf16.gmra.mrb[0].mxu0 %v2141
        %v2180 = vpop.f32.mrb[0].mxu0
        %v2181 = vadd.f32 0.0, %v2180
        %v2182 = vpop.f32.mrb[0].mxu0
        %v2183 = vpop.f32.mrb[0].mxu0
        %v2184 = vpop.f32.mrb[0].mxu0
        %2185 = vdwg.mxu0
        %2186 = vst.msk [vmem:[#allocation2] sm:$0xff] %vm1395, %v2181
        %2188 = vrot.lane.b32.xlu0 %v2070, 120
        %v2189 = vpop.permute.xlu0 %2188
        %2190 = vrot.lane.b32.xlu0 %v2071, 120
        %v2191 = vpop.permute.xlu0 %2190
        %v2193 = vsel %vm1395, %v2189, 0
        %v2196 = vsel %vm1395, %v2191, 0
        %2198 = vmatprep.subr.bf16.mxu0 0
        %2199 = vmatpush1.bf16.xpose.msra.mxu0 %v2196
        %2200 = vmatprep.subr.bf16.mxu0 0
        %2201 = vmatpush1.bf16.xpose.msra.mxu0 0
        %2202 = vmatprep.subr.bf16.mxu0 0
        %2203 = vmatpush1.bf16.xpose.msra.mxu0 0
        %2204 = vmatprep.subr.bf16.mxu0 0
        %2205 = vmatpush1.bf16.xpose.msra.mxu0 0
        %2206 = vmatprep.subr.bf16.mxu0 0
        %2207 = vmatpush1.bf16.xpose.msra.mxu0 0
        %2208 = vmatprep.subr.bf16.mxu0 0
        %2209 = vmatpush1.bf16.xpose.msra.mxu0 0
        %2210 = vmatprep.subr.bf16.mxu0 0
        %2211 = vmatpush1.bf16.xpose.msra.mxu0 0
        %2212 = vmatprep.subr.bf16.mxu0 0
        %2213 = vmatpush1.bf16.xpose.msra.mxu0 0
        %2214 = vmatprep.subr.bf16.mxu0 0
        %2215 = vmatpush1.bf16.xpose.msra.mxu0 0
        %2216 = vmatprep.subr.bf16.mxu0 0
        %2217 = vmatpush1.bf16.xpose.msra.mxu0 0
        %2218 = vmatprep.subr.bf16.mxu0 0
        %2219 = vmatpush1.bf16.xpose.msra.mxu0 0
        %2220 = vmatprep.subr.bf16.mxu0 0
        %2221 = vmatpush1.bf16.xpose.msra.mxu0 0
        %2222 = vmatprep.subr.bf16.mxu0 0
        %2223 = vmatpush1.bf16.xpose.msra.mxu0 0
        %2224 = vmatprep.subr.bf16.mxu0 0
        %2225 = vmatpush1.bf16.xpose.msra.mxu0 0
        %2226 = vmatprep.subr.bf16.mxu0 0
        %2227 = vmatpush1.bf16.xpose.msra.mxu0 0
        %2228 = vmatprep.subr.bf16.mxu0 0
        %2229 = vmatpush1.bf16.xpose.msra.mxu0 0
        %2230 = vmatprep.mubr.bf16.mxu0 0
        %2231 = vmatmul.mubr.bf16.gmra.mrb[0].mxu0 %v2193
        %v2232 = vpop.f32.mrb[0].mxu0
        %v2233 = vadd.f32 %v2076, %v2232
        %v2234 = vpop.f32.mrb[0].mxu0
        %v2235 = vpop.f32.mrb[0].mxu0
        %v2236 = vpop.f32.mrb[0].mxu0
        %2237 = vdwg.mxu0
        %v2238 = vsel %vm1395, %v2233, -inf
        %2239 = vmax.xlane.f32.xlu0 %v2238
        %v2240 = vpop.xlane.xlu0 %2239
        %v2241 = vsub.f32 %v2233, %v2240
        %v2242 = vmul.f32 %v2241, 1.442695
        %v2243 = vpow.pop %v2242
        %v2244 = vsel %vm1395, %v2243, 0.0
        %2245 = vadd.xlane.f32.xlu0 %v2244
        %v2246 = vpop.xlane.xlu0 %2245
        %v2247 = vrcp.pop %v2246
        %v2248 = vmul.f32 %v2243, %v2247
        %s2249 = scalar_lea.vmem %s1268, 8 [#allocation30]
        %2250 = vst.msk [vmem:[%s2249] sm:$0xff] %vm1395, %v2248
        %v2251 = vpack.c.bf16 %v2248, %v2248
        %2252 = vrot.lane.b32.xlu0 %v2071, 88
        %v2253 = vpop.permute.xlu0 %2252
        %v2255 = vsel %vm1395, %v2251, 0
        %v2258 = vsel %vm1460, %v2253, 0
        %2260 = vmatprep.subr.bf16.mxu0 0
        %2261 = vmatpush1.bf16.msra.mxu0 %v2258
        %2262 = vmatprep.subr.bf16.mxu0 0
        %2263 = vmatpush1.bf16.msra.mxu0 0
        %2264 = vmatprep.subr.bf16.mxu0 0
        %2265 = vmatpush1.bf16.msra.mxu0 0
        %2266 = vmatprep.subr.bf16.mxu0 0
        %2267 = vmatpush1.bf16.msra.mxu0 0
        %2268 = vmatprep.subr.bf16.mxu0 0
        %2269 = vmatpush1.bf16.msra.mxu0 0
        %2270 = vmatprep.subr.bf16.mxu0 0
        %2271 = vmatpush1.bf16.msra.mxu0 0
        %2272 = vmatprep.subr.bf16.mxu0 0
        %2273 = vmatpush1.bf16.msra.mxu0 0
        %2274 = vmatprep.subr.bf16.mxu0 0
        %2275 = vmatpush1.bf16.msra.mxu0 0
        %2276 = vmatprep.subr.bf16.mxu0 0
        %2277 = vmatpush1.bf16.msra.mxu0 0
        %2278 = vmatprep.subr.bf16.mxu0 0
        %2279 = vmatpush1.bf16.msra.mxu0 0
        %2280 = vmatprep.subr.bf16.mxu0 0
        %2281 = vmatpush1.bf16.msra.mxu0 0
        %2282 = vmatprep.subr.bf16.mxu0 0
        %2283 = vmatpush1.bf16.msra.mxu0 0
        %2284 = vmatprep.subr.bf16.mxu0 0
        %2285 = vmatpush1.bf16.msra.mxu0 0
        %2286 = vmatprep.subr.bf16.mxu0 0
        %2287 = vmatpush1.bf16.msra.mxu0 0
        %2288 = vmatprep.subr.bf16.mxu0 0
        %2289 = vmatpush1.bf16.msra.mxu0 0
        %2290 = vmatprep.subr.bf16.mxu0 0
        %2291 = vmatpush1.bf16.msra.mxu0 0
        %2292 = vmatprep.mubr.bf16.mxu0 0
        %2293 = vmatmul.mubr.bf16.gmra.mrb[0].mxu0 %v2255
        %v2294 = vpop.f32.mrb[0].mxu0
        %v2295 = vadd.f32 0.0, %v2294
        %v2296 = vpop.f32.mrb[0].mxu0
        %v2297 = vpop.f32.mrb[0].mxu0
        %v2298 = vpop.f32.mrb[0].mxu0
        %2299 = vdwg.mxu0
        %2301 = vrot.lane.b32.xlu0 %v2295, 8
        %v2302 = vpop.permute.xlu0 %2301
        %2304 = vst.msk [vmem:[#allocation2] sm:$0xff] %vm1621, %v2302
        %2305 = vrot.lane.b32.xlu0 %v2070, 112
        %v2306 = vpop.permute.xlu0 %2305
        %2307 = vrot.lane.b32.xlu0 %v2071, 112
        %v2308 = vpop.permute.xlu0 %2307
        %v2310 = vsel %vm1395, %v2306, 0
        %v2313 = vsel %vm1395, %v2308, 0
        %2315 = vmatprep.subr.bf16.mxu0 0
        %2316 = vmatpush1.bf16.xpose.msra.mxu0 %v2313
        %2317 = vmatprep.subr.bf16.mxu0 0
        %2318 = vmatpush1.bf16.xpose.msra.mxu0 0
        %2319 = vmatprep.subr.bf16.mxu0 0
        %2320 = vmatpush1.bf16.xpose.msra.mxu0 0
        %2321 = vmatprep.subr.bf16.mxu0 0
        %2322 = vmatpush1.bf16.xpose.msra.mxu0 0
        %2323 = vmatprep.subr.bf16.mxu0 0
        %2324 = vmatpush1.bf16.xpose.msra.mxu0 0
        %2325 = vmatprep.subr.bf16.mxu0 0
        %2326 = vmatpush1.bf16.xpose.msra.mxu0 0
        %2327 = vmatprep.subr.bf16.mxu0 0
        %2328 = vmatpush1.bf16.xpose.msra.mxu0 0
        %2329 = vmatprep.subr.bf16.mxu0 0
        %2330 = vmatpush1.bf16.xpose.msra.mxu0 0
        %2331 = vmatprep.subr.bf16.mxu0 0
        %2332 = vmatpush1.bf16.xpose.msra.mxu0 0
        %2333 = vmatprep.subr.bf16.mxu0 0
        %2334 = vmatpush1.bf16.xpose.msra.mxu0 0
        %2335 = vmatprep.subr.bf16.mxu0 0
        %2336 = vmatpush1.bf16.xpose.msra.mxu0 0
        %2337 = vmatprep.subr.bf16.mxu0 0
        %2338 = vmatpush1.bf16.xpose.msra.mxu0 0
        %2339 = vmatprep.subr.bf16.mxu0 0
        %2340 = vmatpush1.bf16.xpose.msra.mxu0 0
        %2341 = vmatprep.subr.bf16.mxu0 0
        %2342 = vmatpush1.bf16.xpose.msra.mxu0 0
        %2343 = vmatprep.subr.bf16.mxu0 0
        %2344 = vmatpush1.bf16.xpose.msra.mxu0 0
        %2345 = vmatprep.subr.bf16.mxu0 0
        %2346 = vmatpush1.bf16.xpose.msra.mxu0 0
        %2347 = vmatprep.mubr.bf16.mxu0 0
        %2348 = vmatmul.mubr.bf16.gmra.mrb[0].mxu0 %v2310
        %v2349 = vpop.f32.mrb[0].mxu0
        %v2350 = vadd.f32 %v2076, %v2349
        %v2351 = vpop.f32.mrb[0].mxu0
        %v2352 = vpop.f32.mrb[0].mxu0
        %v2353 = vpop.f32.mrb[0].mxu0
        %2354 = vdwg.mxu0
        %v2355 = vsel %vm1395, %v2350, -inf
        %2356 = vmax.xlane.f32.xlu0 %v2355
        %v2357 = vpop.xlane.xlu0 %2356
        %v2358 = vsub.f32 %v2350, %v2357
        %v2359 = vmul.f32 %v2358, 1.442695
        %v2360 = vpow.pop %v2359
        %v2361 = vsel %vm1395, %v2360, 0.0
        %2362 = vadd.xlane.f32.xlu0 %v2361
        %v2363 = vpop.xlane.xlu0 %2362
        %v2364 = vrcp.pop %v2363
        %v2365 = vmul.f32 %v2360, %v2364
        %s2366 = scalar_lea.vmem %s1268, 16 [#allocation30]
        %2367 = vst.msk [vmem:[%s2366] sm:$0xff] %vm1395, %v2365
        %v2368 = vpack.c.bf16 %v2365, %v2365
        %2369 = vrot.lane.b32.xlu0 %v2071, 80
        %v2370 = vpop.permute.xlu0 %2369
        %v2372 = vsel %vm1395, %v2368, 0
        %v2375 = vsel %vm1460, %v2370, 0
        %2377 = vmatprep.subr.bf16.mxu0 0
        %2378 = vmatpush1.bf16.msra.mxu0 %v2375
        %2379 = vmatprep.subr.bf16.mxu0 0
        %2380 = vmatpush1.bf16.msra.mxu0 0
        %2381 = vmatprep.subr.bf16.mxu0 0
        %2382 = vmatpush1.bf16.msra.mxu0 0
        %2383 = vmatprep.subr.bf16.mxu0 0
        %2384 = vmatpush1.bf16.msra.mxu0 0
        %2385 = vmatprep.subr.bf16.mxu0 0
        %2386 = vmatpush1.bf16.msra.mxu0 0
        %2387 = vmatprep.subr.bf16.mxu0 0
        %2388 = vmatpush1.bf16.msra.mxu0 0
        %2389 = vmatprep.subr.bf16.mxu0 0
        %2390 = vmatpush1.bf16.msra.mxu0 0
        %2391 = vmatprep.subr.bf16.mxu0 0
        %2392 = vmatpush1.bf16.msra.mxu0 0
        %2393 = vmatprep.subr.bf16.mxu0 0
        %2394 = vmatpush1.bf16.msra.mxu0 0
        %2395 = vmatprep.subr.bf16.mxu0 0
        %2396 = vmatpush1.bf16.msra.mxu0 0
        %2397 = vmatprep.subr.bf16.mxu0 0
        %2398 = vmatpush1.bf16.msra.mxu0 0
        %2399 = vmatprep.subr.bf16.mxu0 0
        %2400 = vmatpush1.bf16.msra.mxu0 0
        %2401 = vmatprep.subr.bf16.mxu0 0
        %2402 = vmatpush1.bf16.msra.mxu0 0
        %2403 = vmatprep.subr.bf16.mxu0 0
        %2404 = vmatpush1.bf16.msra.mxu0 0
        %2405 = vmatprep.subr.bf16.mxu0 0
        %2406 = vmatpush1.bf16.msra.mxu0 0
        %2407 = vmatprep.subr.bf16.mxu0 0
        %2408 = vmatpush1.bf16.msra.mxu0 0
        %2409 = vmatprep.mubr.bf16.mxu0 0
        %2410 = vmatmul.mubr.bf16.gmra.mrb[0].mxu0 %v2372
        %v2411 = vpop.f32.mrb[0].mxu0
        %v2412 = vadd.f32 0.0, %v2411
        %v2413 = vpop.f32.mrb[0].mxu0
        %v2414 = vpop.f32.mrb[0].mxu0
        %v2415 = vpop.f32.mrb[0].mxu0
        %2416 = vdwg.mxu0
        %2418 = vrot.lane.b32.xlu0 %v2412, 16
        %v2419 = vpop.permute.xlu0 %2418
        %2421 = vst.msk [vmem:[#allocation2] sm:$0xff] %vm1739, %v2419
        %2422 = vrot.lane.b32.xlu0 %v2070, 104
        %v2423 = vpop.permute.xlu0 %2422
        %2424 = vrot.lane.b32.xlu0 %v2071, 104
        %v2425 = vpop.permute.xlu0 %2424
        %v2427 = vsel %vm1395, %v2423, 0
        %v2430 = vsel %vm1395, %v2425, 0
        %2432 = vmatprep.subr.bf16.mxu0 0
        %2433 = vmatpush1.bf16.xpose.msra.mxu0 %v2430
        %2434 = vmatprep.subr.bf16.mxu0 0
        %2435 = vmatpush1.bf16.xpose.msra.mxu0 0
        %2436 = vmatprep.subr.bf16.mxu0 0
        %2437 = vmatpush1.bf16.xpose.msra.mxu0 0
        %2438 = vmatprep.subr.bf16.mxu0 0
        %2439 = vmatpush1.bf16.xpose.msra.mxu0 0
        %2440 = vmatprep.subr.bf16.mxu0 0
        %2441 = vmatpush1.bf16.xpose.msra.mxu0 0
        %2442 = vmatprep.subr.bf16.mxu0 0
        %2443 = vmatpush1.bf16.xpose.msra.mxu0 0
        %2444 = vmatprep.subr.bf16.mxu0 0
        %2445 = vmatpush1.bf16.xpose.msra.mxu0 0
        %2446 = vmatprep.subr.bf16.mxu0 0
        %2447 = vmatpush1.bf16.xpose.msra.mxu0 0
        %2448 = vmatprep.subr.bf16.mxu0 0
        %2449 = vmatpush1.bf16.xpose.msra.mxu0 0
        %2450 = vmatprep.subr.bf16.mxu0 0
        %2451 = vmatpush1.bf16.xpose.msra.mxu0 0
        %2452 = vmatprep.subr.bf16.mxu0 0
        %2453 = vmatpush1.bf16.xpose.msra.mxu0 0
        %2454 = vmatprep.subr.bf16.mxu0 0
        %2455 = vmatpush1.bf16.xpose.msra.mxu0 0
        %2456 = vmatprep.subr.bf16.mxu0 0
        %2457 = vmatpush1.bf16.xpose.msra.mxu0 0
        %2458 = vmatprep.subr.bf16.mxu0 0
        %2459 = vmatpush1.bf16.xpose.msra.mxu0 0
        %2460 = vmatprep.subr.bf16.mxu0 0
        %2461 = vmatpush1.bf16.xpose.msra.mxu0 0
        %2462 = vmatprep.subr.bf16.mxu0 0
        %2463 = vmatpush1.bf16.xpose.msra.mxu0 0
        %2464 = vmatprep.mubr.bf16.mxu0 0
        %2465 = vmatmul.mubr.bf16.gmra.mrb[0].mxu0 %v2427
        %v2466 = vpop.f32.mrb[0].mxu0
        %v2467 = vadd.f32 %v2076, %v2466
        %v2468 = vpop.f32.mrb[0].mxu0
        %v2469 = vpop.f32.mrb[0].mxu0
        %v2470 = vpop.f32.mrb[0].mxu0
        %2471 = vdwg.mxu0
        %v2472 = vsel %vm1395, %v2467, -inf
        %2473 = vmax.xlane.f32.xlu0 %v2472
        %v2474 = vpop.xlane.xlu0 %2473
        %v2475 = vsub.f32 %v2467, %v2474
        %v2476 = vmul.f32 %v2475, 1.442695
        %v2477 = vpow.pop %v2476
        %v2478 = vsel %vm1395, %v2477, 0.0
        %2479 = vadd.xlane.f32.xlu0 %v2478
        %v2480 = vpop.xlane.xlu0 %2479
        %v2481 = vrcp.pop %v2480
        %v2482 = vmul.f32 %v2477, %v2481
        %s2483 = scalar_lea.vmem %s1268, 24 [#allocation30]
        %2484 = vst.msk [vmem:[%s2483] sm:$0xff] %vm1395, %v2482
        %v2485 = vpack.c.bf16 %v2482, %v2482
        %2486 = vrot.lane.b32.xlu0 %v2071, 72
        %v2487 = vpop.permute.xlu0 %2486
        %v2489 = vsel %vm1395, %v2485, 0
        %v2492 = vsel %vm1460, %v2487, 0
        %2494 = vmatprep.subr.bf16.mxu0 0
        %2495 = vmatpush1.bf16.msra.mxu0 %v2492
        %2496 = vmatprep.subr.bf16.mxu0 0
        %2497 = vmatpush1.bf16.msra.mxu0 0
        %2498 = vmatprep.subr.bf16.mxu0 0
        %2499 = vmatpush1.bf16.msra.mxu0 0
        %2500 = vmatprep.subr.bf16.mxu0 0
        %2501 = vmatpush1.bf16.msra.mxu0 0
        %2502 = vmatprep.subr.bf16.mxu0 0
        %2503 = vmatpush1.bf16.msra.mxu0 0
        %2504 = vmatprep.subr.bf16.mxu0 0
        %2505 = vmatpush1.bf16.msra.mxu0 0
        %2506 = vmatprep.subr.bf16.mxu0 0
        %2507 = vmatpush1.bf16.msra.mxu0 0
        %2508 = vmatprep.subr.bf16.mxu0 0
        %2509 = vmatpush1.bf16.msra.mxu0 0
        %2510 = vmatprep.subr.bf16.mxu0 0
        %2511 = vmatpush1.bf16.msra.mxu0 0
        %2512 = vmatprep.subr.bf16.mxu0 0
        %2513 = vmatpush1.bf16.msra.mxu0 0
        %2514 = vmatprep.subr.bf16.mxu0 0
        %2515 = vmatpush1.bf16.msra.mxu0 0
        %2516 = vmatprep.subr.bf16.mxu0 0
        %2517 = vmatpush1.bf16.msra.mxu0 0
        %2518 = vmatprep.subr.bf16.mxu0 0
        %2519 = vmatpush1.bf16.msra.mxu0 0
        %2520 = vmatprep.subr.bf16.mxu0 0
        %2521 = vmatpush1.bf16.msra.mxu0 0
        %2522 = vmatprep.subr.bf16.mxu0 0
        %2523 = vmatpush1.bf16.msra.mxu0 0
        %2524 = vmatprep.subr.bf16.mxu0 0
        %2525 = vmatpush1.bf16.msra.mxu0 0
        %2526 = vmatprep.mubr.bf16.mxu0 0
        %2527 = vmatmul.mubr.bf16.gmra.mrb[0].mxu0 %v2489
        %v2528 = vpop.f32.mrb[0].mxu0
        %v2529 = vadd.f32 0.0, %v2528
        %v2530 = vpop.f32.mrb[0].mxu0
        %v2531 = vpop.f32.mrb[0].mxu0
        %v2532 = vpop.f32.mrb[0].mxu0
        %2533 = vdwg.mxu0
        %2535 = vrot.lane.b32.xlu0 %v2529, 24
        %v2536 = vpop.permute.xlu0 %2535
        %2538 = vst.msk [vmem:[#allocation2] sm:$0xff] %vm1857, %v2536
        %v2539 = vld [vmem:[#allocation2] sm:$0xff]
        %v2540 = vpack.c.bf16 %v2539, %v2539
        %v2542 = vlaneseq
        %v2543 = vshrl.u32 %v2542, 7
        %v2544 = vsub.s32 0, %v2543
        %v2545 = vrot.slane %v1304, %v2544
        %v2551 = vunpack.c.l.b16 %v1300
        %v2552 = vunpack.c.l.b16 %v1301
        %v2553 = vunpack.c.l.b16 %v1302
        %v2554 = vunpack.c.l.b16 %v1303
        %v2555 = vpack.c.b16 %v2552, %v2551
        %v2556 = vpack.c.b16 %v2554, %v2553
        %v2560 = vsel %vm1347, %v2540, 0
        %2562 = vmatprep.subr.bf16.mxu0 0
        %2563 = vmatpush1.bf16.msra.mxu0 %v2555
        %2564 = vmatprep.subr.bf16.mxu0 0
        %2565 = vmatpush1.bf16.msra.mxu0 %v2556
        %2566 = vmatprep.subr.bf16.mxu0 0
        %2567 = vmatpush1.bf16.msra.mxu0 0
        %2568 = vmatprep.subr.bf16.mxu0 0
        %2569 = vmatpush1.bf16.msra.mxu0 0
        %2570 = vmatprep.subr.bf16.mxu0 0
        %2571 = vmatpush1.bf16.msra.mxu0 0
        %2572 = vmatprep.subr.bf16.mxu0 0
        %2573 = vmatpush1.bf16.msra.mxu0 0
        %2574 = vmatprep.subr.bf16.mxu0 0
        %2575 = vmatpush1.bf16.msra.mxu0 0
        %2576 = vmatprep.subr.bf16.mxu0 0
        %2577 = vmatpush1.bf16.msra.mxu0 0
        %2578 = vmatprep.subr.bf16.mxu0 0
        %2579 = vmatpush1.bf16.msra.mxu0 0
        %2580 = vmatprep.subr.bf16.mxu0 0
        %2581 = vmatpush1.bf16.msra.mxu0 0
        %2582 = vmatprep.subr.bf16.mxu0 0
        %2583 = vmatpush1.bf16.msra.mxu0 0
        %2584 = vmatprep.subr.bf16.mxu0 0
        %2585 = vmatpush1.bf16.msra.mxu0 0
        %2586 = vmatprep.subr.bf16.mxu0 0
        %2587 = vmatpush1.bf16.msra.mxu0 0
        %2588 = vmatprep.subr.bf16.mxu0 0
        %2589 = vmatpush1.bf16.msra.mxu0 0
        %2590 = vmatprep.subr.bf16.mxu0 0
        %2591 = vmatpush1.bf16.msra.mxu0 0
        %2592 = vmatprep.subr.bf16.mxu0 0
        %2593 = vmatpush1.bf16.msra.mxu0 0
        %2594 = vmatprep.mubr.bf16.mxu0 0
        %2595 = vmatmul.mubr.bf16.gmra.mrb[0].mxu0 %v2560
        %v2596 = vpop.f32.mrb[0].mxu0
        %v2597 = vadd.f32 %v2545, %v2596
        %v2598 = vpop.f32.mrb[0].mxu0
        %v2599 = vpop.f32.mrb[0].mxu0
        %v2600 = vpop.f32.mrb[0].mxu0
        %2601 = vdwg.mxu0
        %v2602 = vadd.f32 %v1946, %v2597
        %v2603 = vsel %vm1347, %v2602, 0.0
        %2604 = vadd.xlane.f32.xlu0 %v2603
        %v2605 = vpop.xlane.xlu0 %2604
        %v2606 = vmul.f32 %v2605, %v1926
        %v2607 = vsub.f32 %v2602, %v2606
        %v2608 = vmul.f32 %v2607, %v2607
        %v2609 = vsel %vm1347, %v2608, 0.0
        %2610 = vadd.xlane.f32.xlu0 %v2609
        %v2611 = vpop.xlane.xlu0 %2610
        %v2612 = vmul.f32 %v2611, %v1926
        %v2613 = vadd.f32 %v2612, 1e-06
        %v2614 = vrsqrt.pop %v2613
        %v2615 = vmul.f32 %v2607, %v2614
        %v2616 = vlaneseq
        %v2617 = vshrl.u32 %v2616, 7
        %v2618 = vsub.s32 0, %v2617
        %v2619 = vrot.slane %v1321, %v2618
        %v2620 = vmul.f32 %v2615, %v2619
        %v2621 = vlaneseq
        %v2622 = vshrl.u32 %v2621, 7
        %v2623 = vsub.s32 0, %v2622
        %v2624 = vrot.slane %v1322, %v2623
        %v2625 = vadd.f32 %v2620, %v2624
        %v2626 = vpack.c.bf16 %v2625, %v2625
        %v2628 = vlaneseq
        %v2629 = vshrl.u32 %v2628, 7
        %v2630 = vsub.s32 0, %v2629
        %v2631 = vrot.slane %v1309, %v2630
        %v2637 = vunpack.c.l.b16 %v1305
        %v2638 = vunpack.c.l.b16 %v1306
        %v2639 = vunpack.c.l.b16 %v1307
        %v2640 = vunpack.c.l.b16 %v1308
        %v2641 = vpack.c.b16 %v2638, %v2637
        %v2642 = vpack.c.b16 %v2640, %v2639
        %v2646 = vsel %vm1347, %v2626, 0
        %2648 = vmatprep.subr.bf16.mxu0 0
        %2649 = vmatpush1.bf16.msra.mxu0 %v2641
        %2650 = vmatprep.subr.bf16.mxu0 0
        %2651 = vmatpush1.bf16.msra.mxu0 %v2642
        %2652 = vmatprep.subr.bf16.mxu0 0
        %2653 = vmatpush1.bf16.msra.mxu0 0
        %2654 = vmatprep.subr.bf16.mxu0 0
        %2655 = vmatpush1.bf16.msra.mxu0 0
        %2656 = vmatprep.subr.bf16.mxu0 0
        %2657 = vmatpush1.bf16.msra.mxu0 0
        %2658 = vmatprep.subr.bf16.mxu0 0
        %2659 = vmatpush1.bf16.msra.mxu0 0
        %2660 = vmatprep.subr.bf16.mxu0 0
        %2661 = vmatpush1.bf16.msra.mxu0 0
        %2662 = vmatprep.subr.bf16.mxu0 0
        %2663 = vmatpush1.bf16.msra.mxu0 0
        %2664 = vmatprep.subr.bf16.mxu0 0
        %2665 = vmatpush1.bf16.msra.mxu0 0
        %2666 = vmatprep.subr.bf16.mxu0 0
        %2667 = vmatpush1.bf16.msra.mxu0 0
        %2668 = vmatprep.subr.bf16.mxu0 0
        %2669 = vmatpush1.bf16.msra.mxu0 0
        %2670 = vmatprep.subr.bf16.mxu0 0
        %2671 = vmatpush1.bf16.msra.mxu0 0
        %2672 = vmatprep.subr.bf16.mxu0 0
        %2673 = vmatpush1.bf16.msra.mxu0 0
        %2674 = vmatprep.subr.bf16.mxu0 0
        %2675 = vmatpush1.bf16.msra.mxu0 0
        %2676 = vmatprep.subr.bf16.mxu0 0
        %2677 = vmatpush1.bf16.msra.mxu0 0
        %2678 = vmatprep.subr.bf16.mxu0 0
        %2679 = vmatpush1.bf16.msra.mxu0 0
        %2680 = vmatprep.mubr.bf16.mxu0 0
        %2681 = vmatmul.mubr.bf16.gmra.mrb[0].mxu0 %v2646
        %v2682 = vpop.f32.mrb[0].mxu0
        %v2683 = vadd.f32 %v2631, %v2682
        %v2684 = vpop.f32.mrb[0].mxu0
        %v2685 = vpop.f32.mrb[0].mxu0
        %v2686 = vpop.f32.mrb[0].mxu0
        %2687 = vdwg.mxu0
        %v2688 = vmax.f32 %v2683, 0.0
        %v2689 = vpack.c.bf16 %v2688, %v2688
        %v2691 = vlaneseq
        %v2692 = vshrl.u32 %v2691, 7
        %v2693 = vsub.s32 0, %v2692
        %v2694 = vrot.slane %v1318, %v2693
        %v2704 = vunpack.c.l.b16 %v1310
        %v2705 = vunpack.c.l.b16 %v1311
        %v2706 = vunpack.c.l.b16 %v1312
        %v2707 = vunpack.c.l.b16 %v1313
        %v2708 = vunpack.c.l.b16 %v1314
        %v2709 = vunpack.c.l.b16 %v1315
        %v2710 = vunpack.c.l.b16 %v1316
        %v2711 = vunpack.c.l.b16 %v1317
        %v2712 = vpack.c.b16 %v2705, %v2704
        %v2713 = vpack.c.b16 %v2707, %v2706
        %v2714 = vpack.c.b16 %v2709, %v2708
        %v2715 = vpack.c.b16 %v2711, %v2710
        %vm2720 = vcmask 523264
        %v2722 = vsel %vm2720, %v2689, 0
        %2724 = vmatprep.subr.bf16.mxu0 0
        %2725 = vmatpush1.bf16.msra.mxu0 %v2712
        %2726 = vmatprep.subr.bf16.mxu0 0
        %2727 = vmatpush1.bf16.msra.mxu0 %v2713
        %2728 = vmatprep.subr.bf16.mxu0 0
        %2729 = vmatpush1.bf16.msra.mxu0 %v2714
        %2730 = vmatprep.subr.bf16.mxu0 0
        %2731 = vmatpush1.bf16.msra.mxu0 %v2715
        %2732 = vmatprep.subr.bf16.mxu0 0
        %2733 = vmatpush1.bf16.msra.mxu0 0
        %2734 = vmatprep.subr.bf16.mxu0 0
        %2735 = vmatpush1.bf16.msra.mxu0 0
        %2736 = vmatprep.subr.bf16.mxu0 0
        %2737 = vmatpush1.bf16.msra.mxu0 0
        %2738 = vmatprep.subr.bf16.mxu0 0
        %2739 = vmatpush1.bf16.msra.mxu0 0
        %2740 = vmatprep.subr.bf16.mxu0 0
        %2741 = vmatpush1.bf16.msra.mxu0 0
        %2742 = vmatprep.subr.bf16.mxu0 0
        %2743 = vmatpush1.bf16.msra.mxu0 0
        %2744 = vmatprep.subr.bf16.mxu0 0
        %2745 = vmatpush1.bf16.msra.mxu0 0
        %2746 = vmatprep.subr.bf16.mxu0 0
        %2747 = vmatpush1.bf16.msra.mxu0 0
        %2748 = vmatprep.subr.bf16.mxu0 0
        %2749 = vmatpush1.bf16.msra.mxu0 0
        %2750 = vmatprep.subr.bf16.mxu0 0
        %2751 = vmatpush1.bf16.msra.mxu0 0
        %2752 = vmatprep.subr.bf16.mxu0 0
        %2753 = vmatpush1.bf16.msra.mxu0 0
        %2754 = vmatprep.subr.bf16.mxu0 0
        %2755 = vmatpush1.bf16.msra.mxu0 0
        %2756 = vmatprep.mubr.bf16.mxu0 0
        %2757 = vmatmul.mubr.bf16.gmra.mrb[0].mxu0 %v2722
        %v2758 = vpop.f32.mrb[0].mxu0
        %v2759 = vadd.f32 %v2694, %v2758
        %v2760 = vpop.f32.mrb[0].mxu0
        %v2761 = vpop.f32.mrb[0].mxu0
        %v2762 = vpop.f32.mrb[0].mxu0
        %2763 = vdwg.mxu0
        %v2764 = vadd.f32 %v2625, %v2759
        %v2765 = vsel %vm1347, %v2764, 0.0
        %2766 = vadd.xlane.f32.xlu0 %v2765
        %v2767 = vpop.xlane.xlu0 %2766
        %v2768 = vmul.f32 %v2767, %v1926
        %v2769 = vsub.f32 %v2764, %v2768
        %v2770 = vmul.f32 %v2769, %v2769
        %v2771 = vsel %vm1347, %v2770, 0.0
        %2772 = vadd.xlane.f32.xlu0 %v2771
        %v2773 = vpop.xlane.xlu0 %2772
        %v2774 = vmul.f32 %v2773, %v1926
        %v2775 = vadd.f32 %v2774, 1e-06
        %v2776 = vrsqrt.pop %v2775
        %v2777 = vmul.f32 %v2769, %v2776
        %v2778 = vlaneseq
        %v2779 = vshrl.u32 %v2778, 7
        %v2780 = vsub.s32 0, %v2779
        %v2781 = vrot.slane %v1323, %v2780
        %v2782 = vmul.f32 %v2777, %v2781
        %v2783 = vlaneseq
        %v2784 = vshrl.u32 %v2783, 7
        %v2785 = vsub.s32 0, %v2784
        %v2786 = vrot.slane %v1324, %v2785
        %v2787 = vadd.f32 %v2782, %v2786
        %2788 = vst.msk [vmem:[#allocation27] sm:$0xff] %vm1347, %v2787
        %s2789 = scalar_lea.vmem [#allocation27], 8
        %v2790 = vld [vmem:[%s2789] sm:$0xff]
        %s2791 = scalar_lea.vmem [#allocation6], 4
        %v2792 = vld [vmem:[%s2791] sm:$0xf]
        %s2793 = scalar_lea.vmem [#allocation9], 1
        %v2794 = vld [vmem:[%s2793] sm:$0x1]
        %v2795 = vpack.c.bf16 %v2790, %v2790
        %v2797 = vsel %vm1347, %v2795, 0
        %2799 = vmatprep.subr.bf16.mxu0 0
        %2800 = vmatpush1.bf16.msra.mxu0 %v1343
        %2801 = vmatprep.subr.bf16.mxu0 0
        %2802 = vmatpush1.bf16.msra.mxu0 %v1344
        %2803 = vmatprep.subr.bf16.mxu0 0
        %2804 = vmatpush1.bf16.msra.mxu0 0
        %2805 = vmatprep.subr.bf16.mxu0 0
        %2806 = vmatpush1.bf16.msra.mxu0 0
        %2807 = vmatprep.subr.bf16.mxu0 0
        %2808 = vmatpush1.bf16.msra.mxu0 0
        %2809 = vmatprep.subr.bf16.mxu0 0
        %2810 = vmatpush1.bf16.msra.mxu0 0
        %2811 = vmatprep.subr.bf16.mxu0 0
        %2812 = vmatpush1.bf16.msra.mxu0 0
        %2813 = vmatprep.subr.bf16.mxu0 0
        %2814 = vmatpush1.bf16.msra.mxu0 0
        %2815 = vmatprep.subr.bf16.mxu0 0
        %2816 = vmatpush1.bf16.msra.mxu0 0
        %2817 = vmatprep.subr.bf16.mxu0 0
        %2818 = vmatpush1.bf16.msra.mxu0 0
        %2819 = vmatprep.subr.bf16.mxu0 0
        %2820 = vmatpush1.bf16.msra.mxu0 0
        %2821 = vmatprep.subr.bf16.mxu0 0
        %2822 = vmatpush1.bf16.msra.mxu0 0
        %2823 = vmatprep.subr.bf16.mxu0 0
        %2824 = vmatpush1.bf16.msra.mxu0 0
        %2825 = vmatprep.subr.bf16.mxu0 0
        %2826 = vmatpush1.bf16.msra.mxu0 0
        %2827 = vmatprep.subr.bf16.mxu0 0
        %2828 = vmatpush1.bf16.msra.mxu0 0
        %2829 = vmatprep.subr.bf16.mxu0 0
        %2830 = vmatpush1.bf16.msra.mxu0 0
        %2831 = vmatprep.mubr.bf16.mxu0 0
        %2832 = vmatmul.mubr.bf16.gmra.mrb[0].mxu0 %v2797
        %v2833 = vpop.f32.mrb[0].mxu0
        %v2834 = vadd.f32 %v1333, %v2833
        %v2835 = vpop.f32.mrb[0].mxu0
        %v2836 = vpop.f32.mrb[0].mxu0
        %v2837 = vpop.f32.mrb[0].mxu0
        %2838 = vdwg.mxu0
        %v2839 = vpack.c.bf16 %v2834, %v2834
        %2841 = vrot.lane.b32.xlu0 %v2839, 96
        %v2842 = vpop.permute.xlu0 %2841
        %v2844 = vsel %vm1395, %v2839, 0
        %v2847 = vsel %vm1395, %v2842, 0
        %2849 = vmatprep.subr.bf16.mxu0 0
        %2850 = vmatpush1.bf16.xpose.msra.mxu0 %v2847
        %2851 = vmatprep.subr.bf16.mxu0 0
        %2852 = vmatpush1.bf16.xpose.msra.mxu0 0
        %2853 = vmatprep.subr.bf16.mxu0 0
        %2854 = vmatpush1.bf16.xpose.msra.mxu0 0
        %2855 = vmatprep.subr.bf16.mxu0 0
        %2856 = vmatpush1.bf16.xpose.msra.mxu0 0
        %2857 = vmatprep.subr.bf16.mxu0 0
        %2858 = vmatpush1.bf16.xpose.msra.mxu0 0
        %2859 = vmatprep.subr.bf16.mxu0 0
        %2860 = vmatpush1.bf16.xpose.msra.mxu0 0
        %2861 = vmatprep.subr.bf16.mxu0 0
        %2862 = vmatpush1.bf16.xpose.msra.mxu0 0
        %2863 = vmatprep.subr.bf16.mxu0 0
        %2864 = vmatpush1.bf16.xpose.msra.mxu0 0
        %2865 = vmatprep.subr.bf16.mxu0 0
        %2866 = vmatpush1.bf16.xpose.msra.mxu0 0
        %2867 = vmatprep.subr.bf16.mxu0 0
        %2868 = vmatpush1.bf16.xpose.msra.mxu0 0
        %2869 = vmatprep.subr.bf16.mxu0 0
        %2870 = vmatpush1.bf16.xpose.msra.mxu0 0
        %2871 = vmatprep.subr.bf16.mxu0 0
        %2872 = vmatpush1.bf16.xpose.msra.mxu0 0
        %2873 = vmatprep.subr.bf16.mxu0 0
        %2874 = vmatpush1.bf16.xpose.msra.mxu0 0
        %2875 = vmatprep.subr.bf16.mxu0 0
        %2876 = vmatpush1.bf16.xpose.msra.mxu0 0
        %2877 = vmatprep.subr.bf16.mxu0 0
        %2878 = vmatpush1.bf16.xpose.msra.mxu0 0
        %2879 = vmatprep.subr.bf16.mxu0 0
        %2880 = vmatpush1.bf16.xpose.msra.mxu0 0
        %2881 = vmatprep.mubr.bf16.mxu0 0
        %2882 = vmatmul.mubr.bf16.gmra.mrb[0].mxu0 %v2844
        %v2883 = vpop.f32.mrb[0].mxu0
        %v2884 = vadd.f32 %v1279, %v2883
        %v2885 = vpop.f32.mrb[0].mxu0
        %v2886 = vpop.f32.mrb[0].mxu0
        %v2887 = vpop.f32.mrb[0].mxu0
        %2888 = vdwg.mxu0
        %v2889 = vsel %vm1395, %v2884, -inf
        %2890 = vmax.xlane.f32.xlu0 %v2889
        %v2891 = vpop.xlane.xlu0 %2890
        %v2892 = vsub.f32 %v2884, %v2891
        %v2893 = vmul.f32 %v2892, 1.442695
        %v2894 = vpow.pop %v2893
        %v2895 = vsel %vm1395, %v2894, 0.0
        %2896 = vadd.xlane.f32.xlu0 %v2895
        %v2897 = vpop.xlane.xlu0 %2896
        %v2898 = vrcp.pop %v2897
        %v2899 = vmul.f32 %v2894, %v2898
        %s2900 = scalar_lea.vmem %s1261, 32 [#allocation28]
        %2901 = vst.msk [vmem:[%s2900] sm:$0xff] %vm1395, %v2899
        %v2902 = vpack.c.bf16 %v2899, %v2899
        %2903 = vrot.lane.b32.xlu0 %v2839, 64
        %v2904 = vpop.permute.xlu0 %2903
        %v2906 = vsel %vm1395, %v2902, 0
        %v2909 = vsel %vm1460, %v2904, 0
        %2911 = vmatprep.subr.bf16.mxu0 0
        %2912 = vmatpush1.bf16.msra.mxu0 %v2909
        %2913 = vmatprep.subr.bf16.mxu0 0
        %2914 = vmatpush1.bf16.msra.mxu0 0
        %2915 = vmatprep.subr.bf16.mxu0 0
        %2916 = vmatpush1.bf16.msra.mxu0 0
        %2917 = vmatprep.subr.bf16.mxu0 0
        %2918 = vmatpush1.bf16.msra.mxu0 0
        %2919 = vmatprep.subr.bf16.mxu0 0
        %2920 = vmatpush1.bf16.msra.mxu0 0
        %2921 = vmatprep.subr.bf16.mxu0 0
        %2922 = vmatpush1.bf16.msra.mxu0 0
        %2923 = vmatprep.subr.bf16.mxu0 0
        %2924 = vmatpush1.bf16.msra.mxu0 0
        %2925 = vmatprep.subr.bf16.mxu0 0
        %2926 = vmatpush1.bf16.msra.mxu0 0
        %2927 = vmatprep.subr.bf16.mxu0 0
        %2928 = vmatpush1.bf16.msra.mxu0 0
        %2929 = vmatprep.subr.bf16.mxu0 0
        %2930 = vmatpush1.bf16.msra.mxu0 0
        %2931 = vmatprep.subr.bf16.mxu0 0
        %2932 = vmatpush1.bf16.msra.mxu0 0
        %2933 = vmatprep.subr.bf16.mxu0 0
        %2934 = vmatpush1.bf16.msra.mxu0 0
        %2935 = vmatprep.subr.bf16.mxu0 0
        %2936 = vmatpush1.bf16.msra.mxu0 0
        %2937 = vmatprep.subr.bf16.mxu0 0
        %2938 = vmatpush1.bf16.msra.mxu0 0
        %2939 = vmatprep.subr.bf16.mxu0 0
        %2940 = vmatpush1.bf16.msra.mxu0 0
        %2941 = vmatprep.subr.bf16.mxu0 0
        %2942 = vmatpush1.bf16.msra.mxu0 0
        %2943 = vmatprep.mubr.bf16.mxu0 0
        %2944 = vmatmul.mubr.bf16.gmra.mrb[0].mxu0 %v2906
        %v2945 = vpop.f32.mrb[0].mxu0
        %v2946 = vadd.f32 0.0, %v2945
        %v2947 = vpop.f32.mrb[0].mxu0
        %v2948 = vpop.f32.mrb[0].mxu0
        %v2949 = vpop.f32.mrb[0].mxu0
        %2950 = vdwg.mxu0
        %2951 = vst.msk [vmem:[#allocation2] sm:$0xff] %vm1395, %v2946
        %2952 = vrot.lane.b32.xlu0 %v2839, 120
        %v2953 = vpop.permute.xlu0 %2952
        %2954 = vrot.lane.b32.xlu0 %v2839, 88
        %v2955 = vpop.permute.xlu0 %2954
        %v2957 = vsel %vm1395, %v2953, 0
        %v2960 = vsel %vm1395, %v2955, 0
        %2962 = vmatprep.subr.bf16.mxu0 0
        %2963 = vmatpush1.bf16.xpose.msra.mxu0 %v2960
        %2964 = vmatprep.subr.bf16.mxu0 0
        %2965 = vmatpush1.bf16.xpose.msra.mxu0 0
        %2966 = vmatprep.subr.bf16.mxu0 0
        %2967 = vmatpush1.bf16.xpose.msra.mxu0 0
        %2968 = vmatprep.subr.bf16.mxu0 0
        %2969 = vmatpush1.bf16.xpose.msra.mxu0 0
        %2970 = vmatprep.subr.bf16.mxu0 0
        %2971 = vmatpush1.bf16.xpose.msra.mxu0 0
        %2972 = vmatprep.subr.bf16.mxu0 0
        %2973 = vmatpush1.bf16.xpose.msra.mxu0 0
        %2974 = vmatprep.subr.bf16.mxu0 0
        %2975 = vmatpush1.bf16.xpose.msra.mxu0 0
        %2976 = vmatprep.subr.bf16.mxu0 0
        %2977 = vmatpush1.bf16.xpose.msra.mxu0 0
        %2978 = vmatprep.subr.bf16.mxu0 0
        %2979 = vmatpush1.bf16.xpose.msra.mxu0 0
        %2980 = vmatprep.subr.bf16.mxu0 0
        %2981 = vmatpush1.bf16.xpose.msra.mxu0 0
        %2982 = vmatprep.subr.bf16.mxu0 0
        %2983 = vmatpush1.bf16.xpose.msra.mxu0 0
        %2984 = vmatprep.subr.bf16.mxu0 0
        %2985 = vmatpush1.bf16.xpose.msra.mxu0 0
        %2986 = vmatprep.subr.bf16.mxu0 0
        %2987 = vmatpush1.bf16.xpose.msra.mxu0 0
        %2988 = vmatprep.subr.bf16.mxu0 0
        %2989 = vmatpush1.bf16.xpose.msra.mxu0 0
        %2990 = vmatprep.subr.bf16.mxu0 0
        %2991 = vmatpush1.bf16.xpose.msra.mxu0 0
        %2992 = vmatprep.subr.bf16.mxu0 0
        %2993 = vmatpush1.bf16.xpose.msra.mxu0 0
        %2994 = vmatprep.mubr.bf16.mxu0 0
        %2995 = vmatmul.mubr.bf16.gmra.mrb[0].mxu0 %v2957
        %v2996 = vpop.f32.mrb[0].mxu0
        %v2997 = vadd.f32 %v1279, %v2996
        %v2998 = vpop.f32.mrb[0].mxu0
        %v2999 = vpop.f32.mrb[0].mxu0
        %v3000 = vpop.f32.mrb[0].mxu0
        %3001 = vdwg.mxu0
        %v3002 = vsel %vm1395, %v2997, -inf
        %3003 = vmax.xlane.f32.xlu0 %v3002
        %v3004 = vpop.xlane.xlu0 %3003
        %v3005 = vsub.f32 %v2997, %v3004
        %v3006 = vmul.f32 %v3005, 1.442695
        %v3007 = vpow.pop %v3006
        %v3008 = vsel %vm1395, %v3007, 0.0
        %3009 = vadd.xlane.f32.xlu0 %v3008
        %v3010 = vpop.xlane.xlu0 %3009
        %v3011 = vrcp.pop %v3010
        %v3012 = vmul.f32 %v3007, %v3011
        %s3013 = scalar_lea.vmem %s1261, 40 [#allocation28]
        %3014 = vst.msk [vmem:[%s3013] sm:$0xff] %vm1395, %v3012
        %v3015 = vpack.c.bf16 %v3012, %v3012
        %3016 = vrot.lane.b32.xlu0 %v2839, 56
        %v3017 = vpop.permute.xlu0 %3016
        %v3019 = vsel %vm1395, %v3015, 0
        %v3022 = vsel %vm1460, %v3017, 0
        %3024 = vmatprep.subr.bf16.mxu0 0
        %3025 = vmatpush1.bf16.msra.mxu0 %v3022
        %3026 = vmatprep.subr.bf16.mxu0 0
        %3027 = vmatpush1.bf16.msra.mxu0 0
        %3028 = vmatprep.subr.bf16.mxu0 0
        %3029 = vmatpush1.bf16.msra.mxu0 0
        %3030 = vmatprep.subr.bf16.mxu0 0
        %3031 = vmatpush1.bf16.msra.mxu0 0
        %3032 = vmatprep.subr.bf16.mxu0 0
        %3033 = vmatpush1.bf16.msra.mxu0 0
        %3034 = vmatprep.subr.bf16.mxu0 0
        %3035 = vmatpush1.bf16.msra.mxu0 0
        %3036 = vmatprep.subr.bf16.mxu0 0
        %3037 = vmatpush1.bf16.msra.mxu0 0
        %3038 = vmatprep.subr.bf16.mxu0 0
        %3039 = vmatpush1.bf16.msra.mxu0 0
        %3040 = vmatprep.subr.bf16.mxu0 0
        %3041 = vmatpush1.bf16.msra.mxu0 0
        %3042 = vmatprep.subr.bf16.mxu0 0
        %3043 = vmatpush1.bf16.msra.mxu0 0
        %3044 = vmatprep.subr.bf16.mxu0 0
        %3045 = vmatpush1.bf16.msra.mxu0 0
        %3046 = vmatprep.subr.bf16.mxu0 0
        %3047 = vmatpush1.bf16.msra.mxu0 0
        %3048 = vmatprep.subr.bf16.mxu0 0
        %3049 = vmatpush1.bf16.msra.mxu0 0
        %3050 = vmatprep.subr.bf16.mxu0 0
        %3051 = vmatpush1.bf16.msra.mxu0 0
        %3052 = vmatprep.subr.bf16.mxu0 0
        %3053 = vmatpush1.bf16.msra.mxu0 0
        %3054 = vmatprep.subr.bf16.mxu0 0
        %3055 = vmatpush1.bf16.msra.mxu0 0
        %3056 = vmatprep.mubr.bf16.mxu0 0
        %3057 = vmatmul.mubr.bf16.gmra.mrb[0].mxu0 %v3019
        %v3058 = vpop.f32.mrb[0].mxu0
        %v3059 = vadd.f32 0.0, %v3058
        %v3060 = vpop.f32.mrb[0].mxu0
        %v3061 = vpop.f32.mrb[0].mxu0
        %v3062 = vpop.f32.mrb[0].mxu0
        %3063 = vdwg.mxu0
        %3065 = vrot.lane.b32.xlu0 %v3059, 8
        %v3066 = vpop.permute.xlu0 %3065
        %3068 = vst.msk [vmem:[#allocation2] sm:$0xff] %vm1621, %v3066
        %3069 = vrot.lane.b32.xlu0 %v2839, 112
        %v3070 = vpop.permute.xlu0 %3069
        %3071 = vrot.lane.b32.xlu0 %v2839, 80
        %v3072 = vpop.permute.xlu0 %3071
        %v3074 = vsel %vm1395, %v3070, 0
        %v3077 = vsel %vm1395, %v3072, 0
        %3079 = vmatprep.subr.bf16.mxu0 0
        %3080 = vmatpush1.bf16.xpose.msra.mxu0 %v3077
        %3081 = vmatprep.subr.bf16.mxu0 0
        %3082 = vmatpush1.bf16.xpose.msra.mxu0 0
        %3083 = vmatprep.subr.bf16.mxu0 0
        %3084 = vmatpush1.bf16.xpose.msra.mxu0 0
        %3085 = vmatprep.subr.bf16.mxu0 0
        %3086 = vmatpush1.bf16.xpose.msra.mxu0 0
        %3087 = vmatprep.subr.bf16.mxu0 0
        %3088 = vmatpush1.bf16.xpose.msra.mxu0 0
        %3089 = vmatprep.subr.bf16.mxu0 0
        %3090 = vmatpush1.bf16.xpose.msra.mxu0 0
        %3091 = vmatprep.subr.bf16.mxu0 0
        %3092 = vmatpush1.bf16.xpose.msra.mxu0 0
        %3093 = vmatprep.subr.bf16.mxu0 0
        %3094 = vmatpush1.bf16.xpose.msra.mxu0 0
        %3095 = vmatprep.subr.bf16.mxu0 0
        %3096 = vmatpush1.bf16.xpose.msra.mxu0 0
        %3097 = vmatprep.subr.bf16.mxu0 0
        %3098 = vmatpush1.bf16.xpose.msra.mxu0 0
        %3099 = vmatprep.subr.bf16.mxu0 0
        %3100 = vmatpush1.bf16.xpose.msra.mxu0 0
        %3101 = vmatprep.subr.bf16.mxu0 0
        %3102 = vmatpush1.bf16.xpose.msra.mxu0 0
        %3103 = vmatprep.subr.bf16.mxu0 0
        %3104 = vmatpush1.bf16.xpose.msra.mxu0 0
        %3105 = vmatprep.subr.bf16.mxu0 0
        %3106 = vmatpush1.bf16.xpose.msra.mxu0 0
        %3107 = vmatprep.subr.bf16.mxu0 0
        %3108 = vmatpush1.bf16.xpose.msra.mxu0 0
        %3109 = vmatprep.subr.bf16.mxu0 0
        %3110 = vmatpush1.bf16.xpose.msra.mxu0 0
        %3111 = vmatprep.mubr.bf16.mxu0 0
        %3112 = vmatmul.mubr.bf16.gmra.mrb[0].mxu0 %v3074
        %v3113 = vpop.f32.mrb[0].mxu0
        %v3114 = vadd.f32 %v1279, %v3113
        %v3115 = vpop.f32.mrb[0].mxu0
        %v3116 = vpop.f32.mrb[0].mxu0
        %v3117 = vpop.f32.mrb[0].mxu0
        %3118 = vdwg.mxu0
        %v3119 = vsel %vm1395, %v3114, -inf
        %3120 = vmax.xlane.f32.xlu0 %v3119
        %v3121 = vpop.xlane.xlu0 %3120
        %v3122 = vsub.f32 %v3114, %v3121
        %v3123 = vmul.f32 %v3122, 1.442695
        %v3124 = vpow.pop %v3123
        %v3125 = vsel %vm1395, %v3124, 0.0
        %3126 = vadd.xlane.f32.xlu0 %v3125
        %v3127 = vpop.xlane.xlu0 %3126
        %v3128 = vrcp.pop %v3127
        %v3129 = vmul.f32 %v3124, %v3128
        %s3130 = scalar_lea.vmem %s1261, 48 [#allocation28]
        %3131 = vst.msk [vmem:[%s3130] sm:$0xff] %vm1395, %v3129
        %v3132 = vpack.c.bf16 %v3129, %v3129
        %3133 = vrot.lane.b32.xlu0 %v2839, 48
        %v3134 = vpop.permute.xlu0 %3133
        %v3136 = vsel %vm1395, %v3132, 0
        %v3139 = vsel %vm1460, %v3134, 0
        %3141 = vmatprep.subr.bf16.mxu0 0
        %3142 = vmatpush1.bf16.msra.mxu0 %v3139
        %3143 = vmatprep.subr.bf16.mxu0 0
        %3144 = vmatpush1.bf16.msra.mxu0 0
        %3145 = vmatprep.subr.bf16.mxu0 0
        %3146 = vmatpush1.bf16.msra.mxu0 0
        %3147 = vmatprep.subr.bf16.mxu0 0
        %3148 = vmatpush1.bf16.msra.mxu0 0
        %3149 = vmatprep.subr.bf16.mxu0 0
        %3150 = vmatpush1.bf16.msra.mxu0 0
        %3151 = vmatprep.subr.bf16.mxu0 0
        %3152 = vmatpush1.bf16.msra.mxu0 0
        %3153 = vmatprep.subr.bf16.mxu0 0
        %3154 = vmatpush1.bf16.msra.mxu0 0
        %3155 = vmatprep.subr.bf16.mxu0 0
        %3156 = vmatpush1.bf16.msra.mxu0 0
        %3157 = vmatprep.subr.bf16.mxu0 0
        %3158 = vmatpush1.bf16.msra.mxu0 0
        %3159 = vmatprep.subr.bf16.mxu0 0
        %3160 = vmatpush1.bf16.msra.mxu0 0
        %3161 = vmatprep.subr.bf16.mxu0 0
        %3162 = vmatpush1.bf16.msra.mxu0 0
        %3163 = vmatprep.subr.bf16.mxu0 0
        %3164 = vmatpush1.bf16.msra.mxu0 0
        %3165 = vmatprep.subr.bf16.mxu0 0
        %3166 = vmatpush1.bf16.msra.mxu0 0
        %3167 = vmatprep.subr.bf16.mxu0 0
        %3168 = vmatpush1.bf16.msra.mxu0 0
        %3169 = vmatprep.subr.bf16.mxu0 0
        %3170 = vmatpush1.bf16.msra.mxu0 0
        %3171 = vmatprep.subr.bf16.mxu0 0
        %3172 = vmatpush1.bf16.msra.mxu0 0
        %3173 = vmatprep.mubr.bf16.mxu0 0
        %3174 = vmatmul.mubr.bf16.gmra.mrb[0].mxu0 %v3136
        %v3175 = vpop.f32.mrb[0].mxu0
        %v3176 = vadd.f32 0.0, %v3175
        %v3177 = vpop.f32.mrb[0].mxu0
        %v3178 = vpop.f32.mrb[0].mxu0
        %v3179 = vpop.f32.mrb[0].mxu0
        %3180 = vdwg.mxu0
        %3182 = vrot.lane.b32.xlu0 %v3176, 16
        %v3183 = vpop.permute.xlu0 %3182
        %3185 = vst.msk [vmem:[#allocation2] sm:$0xff] %vm1739, %v3183
        %3186 = vrot.lane.b32.xlu0 %v2839, 104
        %v3187 = vpop.permute.xlu0 %3186
        %3188 = vrot.lane.b32.xlu0 %v2839, 72
        %v3189 = vpop.permute.xlu0 %3188
        %v3191 = vsel %vm1395, %v3187, 0
        %v3194 = vsel %vm1395, %v3189, 0
        %3196 = vmatprep.subr.bf16.mxu0 0
        %3197 = vmatpush1.bf16.xpose.msra.mxu0 %v3194
        %3198 = vmatprep.subr.bf16.mxu0 0
        %3199 = vmatpush1.bf16.xpose.msra.mxu0 0
        %3200 = vmatprep.subr.bf16.mxu0 0
        %3201 = vmatpush1.bf16.xpose.msra.mxu0 0
        %3202 = vmatprep.subr.bf16.mxu0 0
        %3203 = vmatpush1.bf16.xpose.msra.mxu0 0
        %3204 = vmatprep.subr.bf16.mxu0 0
        %3205 = vmatpush1.bf16.xpose.msra.mxu0 0
        %3206 = vmatprep.subr.bf16.mxu0 0
        %3207 = vmatpush1.bf16.xpose.msra.mxu0 0
        %3208 = vmatprep.subr.bf16.mxu0 0
        %3209 = vmatpush1.bf16.xpose.msra.mxu0 0
        %3210 = vmatprep.subr.bf16.mxu0 0
        %3211 = vmatpush1.bf16.xpose.msra.mxu0 0
        %3212 = vmatprep.subr.bf16.mxu0 0
        %3213 = vmatpush1.bf16.xpose.msra.mxu0 0
        %3214 = vmatprep.subr.bf16.mxu0 0
        %3215 = vmatpush1.bf16.xpose.msra.mxu0 0
        %3216 = vmatprep.subr.bf16.mxu0 0
        %3217 = vmatpush1.bf16.xpose.msra.mxu0 0
        %3218 = vmatprep.subr.bf16.mxu0 0
        %3219 = vmatpush1.bf16.xpose.msra.mxu0 0
        %3220 = vmatprep.subr.bf16.mxu0 0
        %3221 = vmatpush1.bf16.xpose.msra.mxu0 0
        %3222 = vmatprep.subr.bf16.mxu0 0
        %3223 = vmatpush1.bf16.xpose.msra.mxu0 0
        %3224 = vmatprep.subr.bf16.mxu0 0
        %3225 = vmatpush1.bf16.xpose.msra.mxu0 0
        %3226 = vmatprep.subr.bf16.mxu0 0
        %3227 = vmatpush1.bf16.xpose.msra.mxu0 0
        %3228 = vmatprep.mubr.bf16.mxu0 0
        %3229 = vmatmul.mubr.bf16.gmra.mrb[0].mxu0 %v3191
        %v3230 = vpop.f32.mrb[0].mxu0
        %v3231 = vadd.f32 %v1279, %v3230
        %v3232 = vpop.f32.mrb[0].mxu0
        %v3233 = vpop.f32.mrb[0].mxu0
        %v3234 = vpop.f32.mrb[0].mxu0
        %3235 = vdwg.mxu0
        %v3236 = vsel %vm1395, %v3231, -inf
        %3237 = vmax.xlane.f32.xlu0 %v3236
        %v3238 = vpop.xlane.xlu0 %3237
        %v3239 = vsub.f32 %v3231, %v3238
        %v3240 = vmul.f32 %v3239, 1.442695
        %v3241 = vpow.pop %v3240
        %v3242 = vsel %vm1395, %v3241, 0.0
        %3243 = vadd.xlane.f32.xlu0 %v3242
        %v3244 = vpop.xlane.xlu0 %3243
        %v3245 = vrcp.pop %v3244
        %v3246 = vmul.f32 %v3241, %v3245
        %s3247 = scalar_lea.vmem %s1261, 56 [#allocation28]
        %3248 = vst.msk [vmem:[%s3247] sm:$0xff] %vm1395, %v3246
        %v3249 = vpack.c.bf16 %v3246, %v3246
        %3250 = vrot.lane.b32.xlu0 %v2839, 40
        %v3251 = vpop.permute.xlu0 %3250
        %v3253 = vsel %vm1395, %v3249, 0
        %v3256 = vsel %vm1460, %v3251, 0
        %3258 = vmatprep.subr.bf16.mxu0 0
        %3259 = vmatpush1.bf16.msra.mxu0 %v3256
        %3260 = vmatprep.subr.bf16.mxu0 0
        %3261 = vmatpush1.bf16.msra.mxu0 0
        %3262 = vmatprep.subr.bf16.mxu0 0
        %3263 = vmatpush1.bf16.msra.mxu0 0
        %3264 = vmatprep.subr.bf16.mxu0 0
        %3265 = vmatpush1.bf16.msra.mxu0 0
        %3266 = vmatprep.subr.bf16.mxu0 0
        %3267 = vmatpush1.bf16.msra.mxu0 0
        %3268 = vmatprep.subr.bf16.mxu0 0
        %3269 = vmatpush1.bf16.msra.mxu0 0
        %3270 = vmatprep.subr.bf16.mxu0 0
        %3271 = vmatpush1.bf16.msra.mxu0 0
        %3272 = vmatprep.subr.bf16.mxu0 0
        %3273 = vmatpush1.bf16.msra.mxu0 0
        %3274 = vmatprep.subr.bf16.mxu0 0
        %3275 = vmatpush1.bf16.msra.mxu0 0
        %3276 = vmatprep.subr.bf16.mxu0 0
        %3277 = vmatpush1.bf16.msra.mxu0 0
        %3278 = vmatprep.subr.bf16.mxu0 0
        %3279 = vmatpush1.bf16.msra.mxu0 0
        %3280 = vmatprep.subr.bf16.mxu0 0
        %3281 = vmatpush1.bf16.msra.mxu0 0
        %3282 = vmatprep.subr.bf16.mxu0 0
        %3283 = vmatpush1.bf16.msra.mxu0 0
        %3284 = vmatprep.subr.bf16.mxu0 0
        %3285 = vmatpush1.bf16.msra.mxu0 0
        %3286 = vmatprep.subr.bf16.mxu0 0
        %3287 = vmatpush1.bf16.msra.mxu0 0
        %3288 = vmatprep.subr.bf16.mxu0 0
        %3289 = vmatpush1.bf16.msra.mxu0 0
        %3290 = vmatprep.mubr.bf16.mxu0 0
        %3291 = vmatmul.mubr.bf16.gmra.mrb[0].mxu0 %v3253
        %v3292 = vpop.f32.mrb[0].mxu0
        %v3293 = vadd.f32 0.0, %v3292
        %v3294 = vpop.f32.mrb[0].mxu0
        %v3295 = vpop.f32.mrb[0].mxu0
        %v3296 = vpop.f32.mrb[0].mxu0
        %3297 = vdwg.mxu0
        %3299 = vrot.lane.b32.xlu0 %v3293, 24
        %v3300 = vpop.permute.xlu0 %3299
        %3302 = vst.msk [vmem:[#allocation2] sm:$0xff] %vm1857, %v3300
        %v3303 = vld [vmem:[#allocation2] sm:$0xff]
        %v3304 = vpack.c.bf16 %v3303, %v3303
        %v3306 = vsel %vm1347, %v3304, 0
        %3308 = vmatprep.subr.bf16.mxu0 0
        %3309 = vmatpush1.bf16.msra.mxu0 %v1875
        %3310 = vmatprep.subr.bf16.mxu0 0
        %3311 = vmatpush1.bf16.msra.mxu0 %v1876
        %3312 = vmatprep.subr.bf16.mxu0 0
        %3313 = vmatpush1.bf16.msra.mxu0 0
        %3314 = vmatprep.subr.bf16.mxu0 0
        %3315 = vmatpush1.bf16.msra.mxu0 0
        %3316 = vmatprep.subr.bf16.mxu0 0
        %3317 = vmatpush1.bf16.msra.mxu0 0
        %3318 = vmatprep.subr.bf16.mxu0 0
        %3319 = vmatpush1.bf16.msra.mxu0 0
        %3320 = vmatprep.subr.bf16.mxu0 0
        %3321 = vmatpush1.bf16.msra.mxu0 0
        %3322 = vmatprep.subr.bf16.mxu0 0
        %3323 = vmatpush1.bf16.msra.mxu0 0
        %3324 = vmatprep.subr.bf16.mxu0 0
        %3325 = vmatpush1.bf16.msra.mxu0 0
        %3326 = vmatprep.subr.bf16.mxu0 0
        %3327 = vmatpush1.bf16.msra.mxu0 0
        %3328 = vmatprep.subr.bf16.mxu0 0
        %3329 = vmatpush1.bf16.msra.mxu0 0
        %3330 = vmatprep.subr.bf16.mxu0 0
        %3331 = vmatpush1.bf16.msra.mxu0 0
        %3332 = vmatprep.subr.bf16.mxu0 0
        %3333 = vmatpush1.bf16.msra.mxu0 0
        %3334 = vmatprep.subr.bf16.mxu0 0
        %3335 = vmatpush1.bf16.msra.mxu0 0
        %3336 = vmatprep.subr.bf16.mxu0 0
        %3337 = vmatpush1.bf16.msra.mxu0 0
        %3338 = vmatprep.subr.bf16.mxu0 0
        %3339 = vmatpush1.bf16.msra.mxu0 0
        %3340 = vmatprep.mubr.bf16.mxu0 0
        %3341 = vmatmul.mubr.bf16.gmra.mrb[0].mxu0 %v3306
        %v3342 = vpop.f32.mrb[0].mxu0
        %v3343 = vadd.f32 %v1865, %v3342
        %v3344 = vpop.f32.mrb[0].mxu0
        %v3345 = vpop.f32.mrb[0].mxu0
        %v3346 = vpop.f32.mrb[0].mxu0
        %3347 = vdwg.mxu0
        %v3348 = vadd.f32 %v2790, %v3343
        %v3349 = vsel %vm1347, %v3348, 0.0
        %3350 = vadd.xlane.f32.xlu0 %v3349
        %v3351 = vpop.xlane.xlu0 %3350
        %v3352 = vmul.f32 %v3351, %v1926
        %v3353 = vsub.f32 %v3348, %v3352
        %v3354 = vmul.f32 %v3353, %v3353
        %v3355 = vsel %vm1347, %v3354, 0.0
        %3356 = vadd.xlane.f32.xlu0 %v3355
        %v3357 = vpop.xlane.xlu0 %3356
        %v3358 = vmul.f32 %v3357, %v1926
        %v3359 = vadd.f32 %v3358, 1e-06
        %v3360 = vrsqrt.pop %v3359
        %v3361 = vmul.f32 %v3353, %v3360
        %v3362 = vmul.f32 %v3361, %v1940
        %v3363 = vadd.f32 %v3362, %v1945
        %v3364 = vpack.c.bf16 %v3363, %v3363
        %v3366 = vsel %vm1347, %v3364, 0
        %3368 = vmatprep.subr.bf16.mxu0 0
        %3369 = vmatpush1.bf16.msra.mxu0 %v1962
        %3370 = vmatprep.subr.bf16.mxu0 0
        %3371 = vmatpush1.bf16.msra.mxu0 %v1963
        %3372 = vmatprep.subr.bf16.mxu0 0
        %3373 = vmatpush1.bf16.msra.mxu0 0
        %3374 = vmatprep.subr.bf16.mxu0 0
        %3375 = vmatpush1.bf16.msra.mxu0 0
        %3376 = vmatprep.subr.bf16.mxu0 0
        %3377 = vmatpush1.bf16.msra.mxu0 0
        %3378 = vmatprep.subr.bf16.mxu0 0
        %3379 = vmatpush1.bf16.msra.mxu0 0
        %3380 = vmatprep.subr.bf16.mxu0 0
        %3381 = vmatpush1.bf16.msra.mxu0 0
        %3382 = vmatprep.subr.bf16.mxu0 0
        %3383 = vmatpush1.bf16.msra.mxu0 0
        %3384 = vmatprep.subr.bf16.mxu0 0
        %3385 = vmatpush1.bf16.msra.mxu0 0
        %3386 = vmatprep.subr.bf16.mxu0 0
        %3387 = vmatpush1.bf16.msra.mxu0 0
        %3388 = vmatprep.subr.bf16.mxu0 0
        %3389 = vmatpush1.bf16.msra.mxu0 0
        %3390 = vmatprep.subr.bf16.mxu0 0
        %3391 = vmatpush1.bf16.msra.mxu0 0
        %3392 = vmatprep.subr.bf16.mxu0 0
        %3393 = vmatpush1.bf16.msra.mxu0 0
        %3394 = vmatprep.subr.bf16.mxu0 0
        %3395 = vmatpush1.bf16.msra.mxu0 0
        %3396 = vmatprep.subr.bf16.mxu0 0
        %3397 = vmatpush1.bf16.msra.mxu0 0
        %3398 = vmatprep.subr.bf16.mxu0 0
        %3399 = vmatpush1.bf16.msra.mxu0 0
        %3400 = vmatprep.mubr.bf16.mxu0 0
        %3401 = vmatmul.mubr.bf16.gmra.mrb[0].mxu0 %v3366
        %v3402 = vpop.f32.mrb[0].mxu0
        %v3403 = vadd.f32 %v1952, %v3402
        %v3404 = vpop.f32.mrb[0].mxu0
        %v3405 = vpop.f32.mrb[0].mxu0
        %v3406 = vpop.f32.mrb[0].mxu0
        %3407 = vdwg.mxu0
        %v3409 = vsel %vm1347, %v2792, 0
        %3411 = vmatprep.subr.bf16.mxu0 0
        %3412 = vmatpush1.bf16.msra.mxu0 %v2023
        %3413 = vmatprep.subr.bf16.mxu0 0
        %3414 = vmatpush1.bf16.msra.mxu0 %v2024
        %3415 = vmatprep.subr.bf16.mxu0 0
        %3416 = vmatpush1.bf16.msra.mxu0 0
        %3417 = vmatprep.subr.bf16.mxu0 0
        %3418 = vmatpush1.bf16.msra.mxu0 0
        %3419 = vmatprep.subr.bf16.mxu0 0
        %3420 = vmatpush1.bf16.msra.mxu0 0
        %3421 = vmatprep.subr.bf16.mxu0 0
        %3422 = vmatpush1.bf16.msra.mxu0 0
        %3423 = vmatprep.subr.bf16.mxu0 0
        %3424 = vmatpush1.bf16.msra.mxu0 0
        %3425 = vmatprep.subr.bf16.mxu0 0
        %3426 = vmatpush1.bf16.msra.mxu0 0
        %3427 = vmatprep.subr.bf16.mxu0 0
        %3428 = vmatpush1.bf16.msra.mxu0 0
        %3429 = vmatprep.subr.bf16.mxu0 0
        %3430 = vmatpush1.bf16.msra.mxu0 0
        %3431 = vmatprep.subr.bf16.mxu0 0
        %3432 = vmatpush1.bf16.msra.mxu0 0
        %3433 = vmatprep.subr.bf16.mxu0 0
        %3434 = vmatpush1.bf16.msra.mxu0 0
        %3435 = vmatprep.subr.bf16.mxu0 0
        %3436 = vmatpush1.bf16.msra.mxu0 0
        %3437 = vmatprep.subr.bf16.mxu0 0
        %3438 = vmatpush1.bf16.msra.mxu0 0
        %3439 = vmatprep.subr.bf16.mxu0 0
        %3440 = vmatpush1.bf16.msra.mxu0 0
        %3441 = vmatprep.subr.bf16.mxu0 0
        %3442 = vmatpush1.bf16.msra.mxu0 0
        %3443 = vmatprep.mubr.bf16.mxu0 0
        %3444 = vmatmul.mubr.bf16.gmra.mrb[0].mxu0 %v3409
        %v3445 = vpop.f32.mrb[0].mxu0
        %v3446 = vadd.f32 %v2013, %v3445
        %v3447 = vpop.f32.mrb[0].mxu0
        %v3448 = vpop.f32.mrb[0].mxu0
        %v3449 = vpop.f32.mrb[0].mxu0
        %3450 = vdwg.mxu0
        %v3451 = vpack.c.bf16 %v3403, %v3403
        %v3452 = vpack.c.bf16 %v3446, %v3446
        %v3454 = vlaneseq
        %v3455 = vshrl.u32 %v3454, 7
        %v3456 = vsub.s32 0, %v3455
        %v3457 = vrot.slane %v2794, %v3456
        %v3460 = vsel %vm1395, %v3451, 0
        %v3463 = vsel %vm1395, %v3452, 0
        %3465 = vmatprep.subr.bf16.mxu0 0
        %3466 = vmatpush1.bf16.xpose.msra.mxu0 %v3463
        %3467 = vmatprep.subr.bf16.mxu0 0
        %3468 = vmatpush1.bf16.xpose.msra.mxu0 0
        %3469 = vmatprep.subr.bf16.mxu0 0
        %3470 = vmatpush1.bf16.xpose.msra.mxu0 0
        %3471 = vmatprep.subr.bf16.mxu0 0
        %3472 = vmatpush1.bf16.xpose.msra.mxu0 0
        %3473 = vmatprep.subr.bf16.mxu0 0
        %3474 = vmatpush1.bf16.xpose.msra.mxu0 0
        %3475 = vmatprep.subr.bf16.mxu0 0
        %3476 = vmatpush1.bf16.xpose.msra.mxu0 0
        %3477 = vmatprep.subr.bf16.mxu0 0
        %3478 = vmatpush1.bf16.xpose.msra.mxu0 0
        %3479 = vmatprep.subr.bf16.mxu0 0
        %3480 = vmatpush1.bf16.xpose.msra.mxu0 0
        %3481 = vmatprep.subr.bf16.mxu0 0
        %3482 = vmatpush1.bf16.xpose.msra.mxu0 0
        %3483 = vmatprep.subr.bf16.mxu0 0
        %3484 = vmatpush1.bf16.xpose.msra.mxu0 0
        %3485 = vmatprep.subr.bf16.mxu0 0
        %3486 = vmatpush1.bf16.xpose.msra.mxu0 0
        %3487 = vmatprep.subr.bf16.mxu0 0
        %3488 = vmatpush1.bf16.xpose.msra.mxu0 0
        %3489 = vmatprep.subr.bf16.mxu0 0
        %3490 = vmatpush1.bf16.xpose.msra.mxu0 0
        %3491 = vmatprep.subr.bf16.mxu0 0
        %3492 = vmatpush1.bf16.xpose.msra.mxu0 0
        %3493 = vmatprep.subr.bf16.mxu0 0
        %3494 = vmatpush1.bf16.xpose.msra.mxu0 0
        %3495 = vmatprep.subr.bf16.mxu0 0
        %3496 = vmatpush1.bf16.xpose.msra.mxu0 0
        %3497 = vmatprep.mubr.bf16.mxu0 0
        %3498 = vmatmul.mubr.bf16.gmra.mrb[0].mxu0 %v3460
        %v3499 = vpop.f32.mrb[0].mxu0
        %v3500 = vadd.f32 %v3457, %v3499
        %v3501 = vpop.f32.mrb[0].mxu0
        %v3502 = vpop.f32.mrb[0].mxu0
        %v3503 = vpop.f32.mrb[0].mxu0
        %3504 = vdwg.mxu0
        %v3505 = vsel %vm1395, %v3500, -inf
        %3506 = vmax.xlane.f32.xlu0 %v3505
        %v3507 = vpop.xlane.xlu0 %3506
        %v3508 = vsub.f32 %v3500, %v3507
        %v3509 = vmul.f32 %v3508, 1.442695
        %v3510 = vpow.pop %v3509
        %v3511 = vsel %vm1395, %v3510, 0.0
        %3512 = vadd.xlane.f32.xlu0 %v3511
        %v3513 = vpop.xlane.xlu0 %3512
        %v3514 = vrcp.pop %v3513
        %v3515 = vmul.f32 %v3510, %v3514
        %s3516 = scalar_lea.vmem %s1268, 32 [#allocation30]
        %3517 = vst.msk [vmem:[%s3516] sm:$0xff] %vm1395, %v3515
        %v3518 = vpack.c.bf16 %v3515, %v3515
        %3520 = vrot.lane.b32.xlu0 %v3452, 96
        %v3521 = vpop.permute.xlu0 %3520
        %v3523 = vsel %vm1395, %v3518, 0
        %v3526 = vsel %vm1460, %v3521, 0
        %3528 = vmatprep.subr.bf16.mxu0 0
        %3529 = vmatpush1.bf16.msra.mxu0 %v3526
        %3530 = vmatprep.subr.bf16.mxu0 0
        %3531 = vmatpush1.bf16.msra.mxu0 0
        %3532 = vmatprep.subr.bf16.mxu0 0
        %3533 = vmatpush1.bf16.msra.mxu0 0
        %3534 = vmatprep.subr.bf16.mxu0 0
        %3535 = vmatpush1.bf16.msra.mxu0 0
        %3536 = vmatprep.subr.bf16.mxu0 0
        %3537 = vmatpush1.bf16.msra.mxu0 0
        %3538 = vmatprep.subr.bf16.mxu0 0
        %3539 = vmatpush1.bf16.msra.mxu0 0
        %3540 = vmatprep.subr.bf16.mxu0 0
        %3541 = vmatpush1.bf16.msra.mxu0 0
        %3542 = vmatprep.subr.bf16.mxu0 0
        %3543 = vmatpush1.bf16.msra.mxu0 0
        %3544 = vmatprep.subr.bf16.mxu0 0
        %3545 = vmatpush1.bf16.msra.mxu0 0
        %3546 = vmatprep.subr.bf16.mxu0 0
        %3547 = vmatpush1.bf16.msra.mxu0 0
        %3548 = vmatprep.subr.bf16.mxu0 0
        %3549 = vmatpush1.bf16.msra.mxu0 0
        %3550 = vmatprep.subr.bf16.mxu0 0
        %3551 = vmatpush1.bf16.msra.mxu0 0
        %3552 = vmatprep.subr.bf16.mxu0 0
        %3553 = vmatpush1.bf16.msra.mxu0 0
        %3554 = vmatprep.subr.bf16.mxu0 0
        %3555 = vmatpush1.bf16.msra.mxu0 0
        %3556 = vmatprep.subr.bf16.mxu0 0
        %3557 = vmatpush1.bf16.msra.mxu0 0
        %3558 = vmatprep.subr.bf16.mxu0 0
        %3559 = vmatpush1.bf16.msra.mxu0 0
        %3560 = vmatprep.mubr.bf16.mxu0 0
        %3561 = vmatmul.mubr.bf16.gmra.mrb[0].mxu0 %v3523
        %v3562 = vpop.f32.mrb[0].mxu0
        %v3563 = vadd.f32 0.0, %v3562
        %v3564 = vpop.f32.mrb[0].mxu0
        %v3565 = vpop.f32.mrb[0].mxu0
        %v3566 = vpop.f32.mrb[0].mxu0
        %3567 = vdwg.mxu0
        %3568 = vst.msk [vmem:[#allocation2] sm:$0xff] %vm1395, %v3563
        %3570 = vrot.lane.b32.xlu0 %v3451, 120
        %v3571 = vpop.permute.xlu0 %3570
        %3572 = vrot.lane.b32.xlu0 %v3452, 120
        %v3573 = vpop.permute.xlu0 %3572
        %v3575 = vsel %vm1395, %v3571, 0
        %v3578 = vsel %vm1395, %v3573, 0
        %3580 = vmatprep.subr.bf16.mxu0 0
        %3581 = vmatpush1.bf16.xpose.msra.mxu0 %v3578
        %3582 = vmatprep.subr.bf16.mxu0 0
        %3583 = vmatpush1.bf16.xpose.msra.mxu0 0
        %3584 = vmatprep.subr.bf16.mxu0 0
        %3585 = vmatpush1.bf16.xpose.msra.mxu0 0
        %3586 = vmatprep.subr.bf16.mxu0 0
        %3587 = vmatpush1.bf16.xpose.msra.mxu0 0
        %3588 = vmatprep.subr.bf16.mxu0 0
        %3589 = vmatpush1.bf16.xpose.msra.mxu0 0
        %3590 = vmatprep.subr.bf16.mxu0 0
        %3591 = vmatpush1.bf16.xpose.msra.mxu0 0
        %3592 = vmatprep.subr.bf16.mxu0 0
        %3593 = vmatpush1.bf16.xpose.msra.mxu0 0
        %3594 = vmatprep.subr.bf16.mxu0 0
        %3595 = vmatpush1.bf16.xpose.msra.mxu0 0
        %3596 = vmatprep.subr.bf16.mxu0 0
        %3597 = vmatpush1.bf16.xpose.msra.mxu0 0
        %3598 = vmatprep.subr.bf16.mxu0 0
        %3599 = vmatpush1.bf16.xpose.msra.mxu0 0
        %3600 = vmatprep.subr.bf16.mxu0 0
        %3601 = vmatpush1.bf16.xpose.msra.mxu0 0
        %3602 = vmatprep.subr.bf16.mxu0 0
        %3603 = vmatpush1.bf16.xpose.msra.mxu0 0
        %3604 = vmatprep.subr.bf16.mxu0 0
        %3605 = vmatpush1.bf16.xpose.msra.mxu0 0
        %3606 = vmatprep.subr.bf16.mxu0 0
        %3607 = vmatpush1.bf16.xpose.msra.mxu0 0
        %3608 = vmatprep.subr.bf16.mxu0 0
        %3609 = vmatpush1.bf16.xpose.msra.mxu0 0
        %3610 = vmatprep.subr.bf16.mxu0 0
        %3611 = vmatpush1.bf16.xpose.msra.mxu0 0
        %3612 = vmatprep.mubr.bf16.mxu0 0
        %3613 = vmatmul.mubr.bf16.gmra.mrb[0].mxu0 %v3575
        %v3614 = vpop.f32.mrb[0].mxu0
        %v3615 = vadd.f32 %v3457, %v3614
        %v3616 = vpop.f32.mrb[0].mxu0
        %v3617 = vpop.f32.mrb[0].mxu0
        %v3618 = vpop.f32.mrb[0].mxu0
        %3619 = vdwg.mxu0
        %v3620 = vsel %vm1395, %v3615, -inf
        %3621 = vmax.xlane.f32.xlu0 %v3620
        %v3622 = vpop.xlane.xlu0 %3621
        %v3623 = vsub.f32 %v3615, %v3622
        %v3624 = vmul.f32 %v3623, 1.442695
        %v3625 = vpow.pop %v3624
        %v3626 = vsel %vm1395, %v3625, 0.0
        %3627 = vadd.xlane.f32.xlu0 %v3626
        %v3628 = vpop.xlane.xlu0 %3627
        %v3629 = vrcp.pop %v3628
        %v3630 = vmul.f32 %v3625, %v3629
        %s3631 = scalar_lea.vmem %s1268, 40 [#allocation30]
        %3632 = vst.msk [vmem:[%s3631] sm:$0xff] %vm1395, %v3630
        %v3633 = vpack.c.bf16 %v3630, %v3630
        %3634 = vrot.lane.b32.xlu0 %v3452, 88
        %v3635 = vpop.permute.xlu0 %3634
        %v3637 = vsel %vm1395, %v3633, 0
        %v3640 = vsel %vm1460, %v3635, 0
        %3642 = vmatprep.subr.bf16.mxu0 0
        %3643 = vmatpush1.bf16.msra.mxu0 %v3640
        %3644 = vmatprep.subr.bf16.mxu0 0
        %3645 = vmatpush1.bf16.msra.mxu0 0
        %3646 = vmatprep.subr.bf16.mxu0 0
        %3647 = vmatpush1.bf16.msra.mxu0 0
        %3648 = vmatprep.subr.bf16.mxu0 0
        %3649 = vmatpush1.bf16.msra.mxu0 0
        %3650 = vmatprep.subr.bf16.mxu0 0
        %3651 = vmatpush1.bf16.msra.mxu0 0
        %3652 = vmatprep.subr.bf16.mxu0 0
        %3653 = vmatpush1.bf16.msra.mxu0 0
        %3654 = vmatprep.subr.bf16.mxu0 0
        %3655 = vmatpush1.bf16.msra.mxu0 0
        %3656 = vmatprep.subr.bf16.mxu0 0
        %3657 = vmatpush1.bf16.msra.mxu0 0
        %3658 = vmatprep.subr.bf16.mxu0 0
        %3659 = vmatpush1.bf16.msra.mxu0 0
        %3660 = vmatprep.subr.bf16.mxu0 0
        %3661 = vmatpush1.bf16.msra.mxu0 0
        %3662 = vmatprep.subr.bf16.mxu0 0
        %3663 = vmatpush1.bf16.msra.mxu0 0
        %3664 = vmatprep.subr.bf16.mxu0 0
        %3665 = vmatpush1.bf16.msra.mxu0 0
        %3666 = vmatprep.subr.bf16.mxu0 0
        %3667 = vmatpush1.bf16.msra.mxu0 0
        %3668 = vmatprep.subr.bf16.mxu0 0
        %3669 = vmatpush1.bf16.msra.mxu0 0
        %3670 = vmatprep.subr.bf16.mxu0 0
        %3671 = vmatpush1.bf16.msra.mxu0 0
        %3672 = vmatprep.subr.bf16.mxu0 0
        %3673 = vmatpush1.bf16.msra.mxu0 0
        %3674 = vmatprep.mubr.bf16.mxu0 0
        %3675 = vmatmul.mubr.bf16.gmra.mrb[0].mxu0 %v3637
        %v3676 = vpop.f32.mrb[0].mxu0
        %v3677 = vadd.f32 0.0, %v3676
        %v3678 = vpop.f32.mrb[0].mxu0
        %v3679 = vpop.f32.mrb[0].mxu0
        %v3680 = vpop.f32.mrb[0].mxu0
        %3681 = vdwg.mxu0
        %3683 = vrot.lane.b32.xlu0 %v3677, 8
        %v3684 = vpop.permute.xlu0 %3683
        %3686 = vst.msk [vmem:[#allocation2] sm:$0xff] %vm1621, %v3684
        %3687 = vrot.lane.b32.xlu0 %v3451, 112
        %v3688 = vpop.permute.xlu0 %3687
        %3689 = vrot.lane.b32.xlu0 %v3452, 112
        %v3690 = vpop.permute.xlu0 %3689
        %v3692 = vsel %vm1395, %v3688, 0
        %v3695 = vsel %vm1395, %v3690, 0
        %3697 = vmatprep.subr.bf16.mxu0 0
        %3698 = vmatpush1.bf16.xpose.msra.mxu0 %v3695
        %3699 = vmatprep.subr.bf16.mxu0 0
        %3700 = vmatpush1.bf16.xpose.msra.mxu0 0
        %3701 = vmatprep.subr.bf16.mxu0 0
        %3702 = vmatpush1.bf16.xpose.msra.mxu0 0
        %3703 = vmatprep.subr.bf16.mxu0 0
        %3704 = vmatpush1.bf16.xpose.msra.mxu0 0
        %3705 = vmatprep.subr.bf16.mxu0 0
        %3706 = vmatpush1.bf16.xpose.msra.mxu0 0
        %3707 = vmatprep.subr.bf16.mxu0 0
        %3708 = vmatpush1.bf16.xpose.msra.mxu0 0
        %3709 = vmatprep.subr.bf16.mxu0 0
        %3710 = vmatpush1.bf16.xpose.msra.mxu0 0
        %3711 = vmatprep.subr.bf16.mxu0 0
        %3712 = vmatpush1.bf16.xpose.msra.mxu0 0
        %3713 = vmatprep.subr.bf16.mxu0 0
        %3714 = vmatpush1.bf16.xpose.msra.mxu0 0
        %3715 = vmatprep.subr.bf16.mxu0 0
        %3716 = vmatpush1.bf16.xpose.msra.mxu0 0
        %3717 = vmatprep.subr.bf16.mxu0 0
        %3718 = vmatpush1.bf16.xpose.msra.mxu0 0
        %3719 = vmatprep.subr.bf16.mxu0 0
        %3720 = vmatpush1.bf16.xpose.msra.mxu0 0
        %3721 = vmatprep.subr.bf16.mxu0 0
        %3722 = vmatpush1.bf16.xpose.msra.mxu0 0
        %3723 = vmatprep.subr.bf16.mxu0 0
        %3724 = vmatpush1.bf16.xpose.msra.mxu0 0
        %3725 = vmatprep.subr.bf16.mxu0 0
        %3726 = vmatpush1.bf16.xpose.msra.mxu0 0
        %3727 = vmatprep.subr.bf16.mxu0 0
        %3728 = vmatpush1.bf16.xpose.msra.mxu0 0
        %3729 = vmatprep.mubr.bf16.mxu0 0
        %3730 = vmatmul.mubr.bf16.gmra.mrb[0].mxu0 %v3692
        %v3731 = vpop.f32.mrb[0].mxu0
        %v3732 = vadd.f32 %v3457, %v3731
        %v3733 = vpop.f32.mrb[0].mxu0
        %v3734 = vpop.f32.mrb[0].mxu0
        %v3735 = vpop.f32.mrb[0].mxu0
        %3736 = vdwg.mxu0
        %v3737 = vsel %vm1395, %v3732, -inf
        %3738 = vmax.xlane.f32.xlu0 %v3737
        %v3739 = vpop.xlane.xlu0 %3738
        %v3740 = vsub.f32 %v3732, %v3739
        %v3741 = vmul.f32 %v3740, 1.442695
        %v3742 = vpow.pop %v3741
        %v3743 = vsel %vm1395, %v3742, 0.0
        %3744 = vadd.xlane.f32.xlu0 %v3743
        %v3745 = vpop.xlane.xlu0 %3744
        %v3746 = vrcp.pop %v3745
        %v3747 = vmul.f32 %v3742, %v3746
        %s3748 = scalar_lea.vmem %s1268, 48 [#allocation30]
        %3749 = vst.msk [vmem:[%s3748] sm:$0xff] %vm1395, %v3747
        %v3750 = vpack.c.bf16 %v3747, %v3747
        %3751 = vrot.lane.b32.xlu0 %v3452, 80
        %v3752 = vpop.permute.xlu0 %3751
        %v3754 = vsel %vm1395, %v3750, 0
        %v3757 = vsel %vm1460, %v3752, 0
        %3759 = vmatprep.subr.bf16.mxu0 0
        %3760 = vmatpush1.bf16.msra.mxu0 %v3757
        %3761 = vmatprep.subr.bf16.mxu0 0
        %3762 = vmatpush1.bf16.msra.mxu0 0
        %3763 = vmatprep.subr.bf16.mxu0 0
        %3764 = vmatpush1.bf16.msra.mxu0 0
        %3765 = vmatprep.subr.bf16.mxu0 0
        %3766 = vmatpush1.bf16.msra.mxu0 0
        %3767 = vmatprep.subr.bf16.mxu0 0
        %3768 = vmatpush1.bf16.msra.mxu0 0
        %3769 = vmatprep.subr.bf16.mxu0 0
        %3770 = vmatpush1.bf16.msra.mxu0 0
        %3771 = vmatprep.subr.bf16.mxu0 0
        %3772 = vmatpush1.bf16.msra.mxu0 0
        %3773 = vmatprep.subr.bf16.mxu0 0
        %3774 = vmatpush1.bf16.msra.mxu0 0
        %3775 = vmatprep.subr.bf16.mxu0 0
        %3776 = vmatpush1.bf16.msra.mxu0 0
        %3777 = vmatprep.subr.bf16.mxu0 0
        %3778 = vmatpush1.bf16.msra.mxu0 0
        %3779 = vmatprep.subr.bf16.mxu0 0
        %3780 = vmatpush1.bf16.msra.mxu0 0
        %3781 = vmatprep.subr.bf16.mxu0 0
        %3782 = vmatpush1.bf16.msra.mxu0 0
        %3783 = vmatprep.subr.bf16.mxu0 0
        %3784 = vmatpush1.bf16.msra.mxu0 0
        %3785 = vmatprep.subr.bf16.mxu0 0
        %3786 = vmatpush1.bf16.msra.mxu0 0
        %3787 = vmatprep.subr.bf16.mxu0 0
        %3788 = vmatpush1.bf16.msra.mxu0 0
        %3789 = vmatprep.subr.bf16.mxu0 0
        %3790 = vmatpush1.bf16.msra.mxu0 0
        %3791 = vmatprep.mubr.bf16.mxu0 0
        %3792 = vmatmul.mubr.bf16.gmra.mrb[0].mxu0 %v3754
        %v3793 = vpop.f32.mrb[0].mxu0
        %v3794 = vadd.f32 0.0, %v3793
        %v3795 = vpop.f32.mrb[0].mxu0
        %v3796 = vpop.f32.mrb[0].mxu0
        %v3797 = vpop.f32.mrb[0].mxu0
        %3798 = vdwg.mxu0
        %3800 = vrot.lane.b32.xlu0 %v3794, 16
        %v3801 = vpop.permute.xlu0 %3800
        %3803 = vst.msk [vmem:[#allocation2] sm:$0xff] %vm1739, %v3801
        %3804 = vrot.lane.b32.xlu0 %v3451, 104
        %v3805 = vpop.permute.xlu0 %3804
        %3806 = vrot.lane.b32.xlu0 %v3452, 104
        %v3807 = vpop.permute.xlu0 %3806
        %v3809 = vsel %vm1395, %v3805, 0
        %v3812 = vsel %vm1395, %v3807, 0
        %3814 = vmatprep.subr.bf16.mxu0 0
        %3815 = vmatpush1.bf16.xpose.msra.mxu0 %v3812
        %3816 = vmatprep.subr.bf16.mxu0 0
        %3817 = vmatpush1.bf16.xpose.msra.mxu0 0
        %3818 = vmatprep.subr.bf16.mxu0 0
        %3819 = vmatpush1.bf16.xpose.msra.mxu0 0
        %3820 = vmatprep.subr.bf16.mxu0 0
        %3821 = vmatpush1.bf16.xpose.msra.mxu0 0
        %3822 = vmatprep.subr.bf16.mxu0 0
        %3823 = vmatpush1.bf16.xpose.msra.mxu0 0
        %3824 = vmatprep.subr.bf16.mxu0 0
        %3825 = vmatpush1.bf16.xpose.msra.mxu0 0
        %3826 = vmatprep.subr.bf16.mxu0 0
        %3827 = vmatpush1.bf16.xpose.msra.mxu0 0
        %3828 = vmatprep.subr.bf16.mxu0 0
        %3829 = vmatpush1.bf16.xpose.msra.mxu0 0
        %3830 = vmatprep.subr.bf16.mxu0 0
        %3831 = vmatpush1.bf16.xpose.msra.mxu0 0
        %3832 = vmatprep.subr.bf16.mxu0 0
        %3833 = vmatpush1.bf16.xpose.msra.mxu0 0
        %3834 = vmatprep.subr.bf16.mxu0 0
        %3835 = vmatpush1.bf16.xpose.msra.mxu0 0
        %3836 = vmatprep.subr.bf16.mxu0 0
        %3837 = vmatpush1.bf16.xpose.msra.mxu0 0
        %3838 = vmatprep.subr.bf16.mxu0 0
        %3839 = vmatpush1.bf16.xpose.msra.mxu0 0
        %3840 = vmatprep.subr.bf16.mxu0 0
        %3841 = vmatpush1.bf16.xpose.msra.mxu0 0
        %3842 = vmatprep.subr.bf16.mxu0 0
        %3843 = vmatpush1.bf16.xpose.msra.mxu0 0
        %3844 = vmatprep.subr.bf16.mxu0 0
        %3845 = vmatpush1.bf16.xpose.msra.mxu0 0
        %3846 = vmatprep.mubr.bf16.mxu0 0
        %3847 = vmatmul.mubr.bf16.gmra.mrb[0].mxu0 %v3809
        %v3848 = vpop.f32.mrb[0].mxu0
        %v3849 = vadd.f32 %v3457, %v3848
        %v3850 = vpop.f32.mrb[0].mxu0
        %v3851 = vpop.f32.mrb[0].mxu0
        %v3852 = vpop.f32.mrb[0].mxu0
        %3853 = vdwg.mxu0
        %v3854 = vsel %vm1395, %v3849, -inf
        %3855 = vmax.xlane.f32.xlu0 %v3854
        %v3856 = vpop.xlane.xlu0 %3855
        %v3857 = vsub.f32 %v3849, %v3856
        %v3858 = vmul.f32 %v3857, 1.442695
        %v3859 = vpow.pop %v3858
        %v3860 = vsel %vm1395, %v3859, 0.0
        %3861 = vadd.xlane.f32.xlu0 %v3860
        %v3862 = vpop.xlane.xlu0 %3861
        %v3863 = vrcp.pop %v3862
        %v3864 = vmul.f32 %v3859, %v3863
        %s3865 = scalar_lea.vmem %s1268, 56 [#allocation30]
        %3866 = vst.msk [vmem:[%s3865] sm:$0xff] %vm1395, %v3864
        %v3867 = vpack.c.bf16 %v3864, %v3864
        %3868 = vrot.lane.b32.xlu0 %v3452, 72
        %v3869 = vpop.permute.xlu0 %3868
        %v3871 = vsel %vm1395, %v3867, 0
        %v3874 = vsel %vm1460, %v3869, 0
        %3876 = vmatprep.subr.bf16.mxu0 0
        %3877 = vmatpush1.bf16.msra.mxu0 %v3874
        %3878 = vmatprep.subr.bf16.mxu0 0
        %3879 = vmatpush1.bf16.msra.mxu0 0
        %3880 = vmatprep.subr.bf16.mxu0 0
        %3881 = vmatpush1.bf16.msra.mxu0 0
        %3882 = vmatprep.subr.bf16.mxu0 0
        %3883 = vmatpush1.bf16.msra.mxu0 0
        %3884 = vmatprep.subr.bf16.mxu0 0
        %3885 = vmatpush1.bf16.msra.mxu0 0
        %3886 = vmatprep.subr.bf16.mxu0 0
        %3887 = vmatpush1.bf16.msra.mxu0 0
        %3888 = vmatprep.subr.bf16.mxu0 0
        %3889 = vmatpush1.bf16.msra.mxu0 0
        %3890 = vmatprep.subr.bf16.mxu0 0
        %3891 = vmatpush1.bf16.msra.mxu0 0
        %3892 = vmatprep.subr.bf16.mxu0 0
        %3893 = vmatpush1.bf16.msra.mxu0 0
        %3894 = vmatprep.subr.bf16.mxu0 0
        %3895 = vmatpush1.bf16.msra.mxu0 0
        %3896 = vmatprep.subr.bf16.mxu0 0
        %3897 = vmatpush1.bf16.msra.mxu0 0
        %3898 = vmatprep.subr.bf16.mxu0 0
        %3899 = vmatpush1.bf16.msra.mxu0 0
        %3900 = vmatprep.subr.bf16.mxu0 0
        %3901 = vmatpush1.bf16.msra.mxu0 0
        %3902 = vmatprep.subr.bf16.mxu0 0
        %3903 = vmatpush1.bf16.msra.mxu0 0
        %3904 = vmatprep.subr.bf16.mxu0 0
        %3905 = vmatpush1.bf16.msra.mxu0 0
        %3906 = vmatprep.subr.bf16.mxu0 0
        %3907 = vmatpush1.bf16.msra.mxu0 0
        %3908 = vmatprep.mubr.bf16.mxu0 0
        %3909 = vmatmul.mubr.bf16.gmra.mrb[0].mxu0 %v3871
        %v3910 = vpop.f32.mrb[0].mxu0
        %v3911 = vadd.f32 0.0, %v3910
        %v3912 = vpop.f32.mrb[0].mxu0
        %v3913 = vpop.f32.mrb[0].mxu0
        %v3914 = vpop.f32.mrb[0].mxu0
        %3915 = vdwg.mxu0
        %3917 = vrot.lane.b32.xlu0 %v3911, 24
        %v3918 = vpop.permute.xlu0 %3917
        %3920 = vst.msk [vmem:[#allocation2] sm:$0xff] %vm1857, %v3918
        %v3921 = vld [vmem:[#allocation2] sm:$0xff]
        %v3922 = vpack.c.bf16 %v3921, %v3921
        %v3924 = vsel %vm1347, %v3922, 0
        %3926 = vmatprep.subr.bf16.mxu0 0
        %3927 = vmatpush1.bf16.msra.mxu0 %v2555
        %3928 = vmatprep.subr.bf16.mxu0 0
        %3929 = vmatpush1.bf16.msra.mxu0 %v2556
        %3930 = vmatprep.subr.bf16.mxu0 0
        %3931 = vmatpush1.bf16.msra.mxu0 0
        %3932 = vmatprep.subr.bf16.mxu0 0
        %3933 = vmatpush1.bf16.msra.mxu0 0
        %3934 = vmatprep.subr.bf16.mxu0 0
        %3935 = vmatpush1.bf16.msra.mxu0 0
        %3936 = vmatprep.subr.bf16.mxu0 0
        %3937 = vmatpush1.bf16.msra.mxu0 0
        %3938 = vmatprep.subr.bf16.mxu0 0
        %3939 = vmatpush1.bf16.msra.mxu0 0
        %3940 = vmatprep.subr.bf16.mxu0 0
        %3941 = vmatpush1.bf16.msra.mxu0 0
        %3942 = vmatprep.subr.bf16.mxu0 0
        %3943 = vmatpush1.bf16.msra.mxu0 0
        %3944 = vmatprep.subr.bf16.mxu0 0
        %3945 = vmatpush1.bf16.msra.mxu0 0
        %3946 = vmatprep.subr.bf16.mxu0 0
        %3947 = vmatpush1.bf16.msra.mxu0 0
        %3948 = vmatprep.subr.bf16.mxu0 0
        %3949 = vmatpush1.bf16.msra.mxu0 0
        %3950 = vmatprep.subr.bf16.mxu0 0
        %3951 = vmatpush1.bf16.msra.mxu0 0
        %3952 = vmatprep.subr.bf16.mxu0 0
        %3953 = vmatpush1.bf16.msra.mxu0 0
        %3954 = vmatprep.subr.bf16.mxu0 0
        %3955 = vmatpush1.bf16.msra.mxu0 0
        %3956 = vmatprep.subr.bf16.mxu0 0
        %3957 = vmatpush1.bf16.msra.mxu0 0
        %3958 = vmatprep.mubr.bf16.mxu0 0
        %3959 = vmatmul.mubr.bf16.gmra.mrb[0].mxu0 %v3924
        %v3960 = vpop.f32.mrb[0].mxu0
        %v3961 = vadd.f32 %v2545, %v3960
        %v3962 = vpop.f32.mrb[0].mxu0
        %v3963 = vpop.f32.mrb[0].mxu0
        %v3964 = vpop.f32.mrb[0].mxu0
        %3965 = vdwg.mxu0
        %v3966 = vadd.f32 %v3363, %v3961
        %v3967 = vsel %vm1347, %v3966, 0.0
        %3968 = vadd.xlane.f32.xlu0 %v3967
        %v3969 = vpop.xlane.xlu0 %3968
        %v3970 = vmul.f32 %v3969, %v1926
        %v3971 = vsub.f32 %v3966, %v3970
        %v3972 = vmul.f32 %v3971, %v3971
        %v3973 = vsel %vm1347, %v3972, 0.0
        %3974 = vadd.xlane.f32.xlu0 %v3973
        %v3975 = vpop.xlane.xlu0 %3974
        %v3976 = vmul.f32 %v3975, %v1926
        %v3977 = vadd.f32 %v3976, 1e-06
        %v3978 = vrsqrt.pop %v3977
        %v3979 = vmul.f32 %v3971, %v3978
        %v3980 = vmul.f32 %v3979, %v2619
        %v3981 = vadd.f32 %v3980, %v2624
        %v3982 = vpack.c.bf16 %v3981, %v3981
        %v3984 = vsel %vm1347, %v3982, 0
        %3986 = vmatprep.subr.bf16.mxu0 0
        %3987 = vmatpush1.bf16.msra.mxu0 %v2641
        %3988 = vmatprep.subr.bf16.mxu0 0
        %3989 = vmatpush1.bf16.msra.mxu0 %v2642
        %3990 = vmatprep.subr.bf16.mxu0 0
        %3991 = vmatpush1.bf16.msra.mxu0 0
        %3992 = vmatprep.subr.bf16.mxu0 0
        %3993 = vmatpush1.bf16.msra.mxu0 0
        %3994 = vmatprep.subr.bf16.mxu0 0
        %3995 = vmatpush1.bf16.msra.mxu0 0
        %3996 = vmatprep.subr.bf16.mxu0 0
        %3997 = vmatpush1.bf16.msra.mxu0 0
        %3998 = vmatprep.subr.bf16.mxu0 0
        %3999 = vmatpush1.bf16.msra.mxu0 0
        %4000 = vmatprep.subr.bf16.mxu0 0
        %4001 = vmatpush1.bf16.msra.mxu0 0
        %4002 = vmatprep.subr.bf16.mxu0 0
        %4003 = vmatpush1.bf16.msra.mxu0 0
        %4004 = vmatprep.subr.bf16.mxu0 0
        %4005 = vmatpush1.bf16.msra.mxu0 0
        %4006 = vmatprep.subr.bf16.mxu0 0
        %4007 = vmatpush1.bf16.msra.mxu0 0
        %4008 = vmatprep.subr.bf16.mxu0 0
        %4009 = vmatpush1.bf16.msra.mxu0 0
        %4010 = vmatprep.subr.bf16.mxu0 0
        %4011 = vmatpush1.bf16.msra.mxu0 0
        %4012 = vmatprep.subr.bf16.mxu0 0
        %4013 = vmatpush1.bf16.msra.mxu0 0
        %4014 = vmatprep.subr.bf16.mxu0 0
        %4015 = vmatpush1.bf16.msra.mxu0 0
        %4016 = vmatprep.subr.bf16.mxu0 0
        %4017 = vmatpush1.bf16.msra.mxu0 0
        %4018 = vmatprep.mubr.bf16.mxu0 0
        %4019 = vmatmul.mubr.bf16.gmra.mrb[0].mxu0 %v3984
        %v4020 = vpop.f32.mrb[0].mxu0
        %v4021 = vadd.f32 %v2631, %v4020
        %v4022 = vpop.f32.mrb[0].mxu0
        %v4023 = vpop.f32.mrb[0].mxu0
        %v4024 = vpop.f32.mrb[0].mxu0
        %4025 = vdwg.mxu0
        %v4026 = vmax.f32 %v4021, 0.0
        %v4027 = vpack.c.bf16 %v4026, %v4026
        %v4029 = vsel %vm2720, %v4027, 0
        %4031 = vmatprep.subr.bf16.mxu0 0
        %4032 = vmatpush1.bf16.msra.mxu0 %v2712
        %4033 = vmatprep.subr.bf16.mxu0 0
        %4034 = vmatpush1.bf16.msra.mxu0 %v2713
        %4035 = vmatprep.subr.bf16.mxu0 0
        %4036 = vmatpush1.bf16.msra.mxu0 %v2714
        %4037 = vmatprep.subr.bf16.mxu0 0
        %4038 = vmatpush1.bf16.msra.mxu0 %v2715
        %4039 = vmatprep.subr.bf16.mxu0 0
        %4040 = vmatpush1.bf16.msra.mxu0 0
        %4041 = vmatprep.subr.bf16.mxu0 0
        %4042 = vmatpush1.bf16.msra.mxu0 0
        %4043 = vmatprep.subr.bf16.mxu0 0
        %4044 = vmatpush1.bf16.msra.mxu0 0
        %4045 = vmatprep.subr.bf16.mxu0 0
        %4046 = vmatpush1.bf16.msra.mxu0 0
        %4047 = vmatprep.subr.bf16.mxu0 0
        %4048 = vmatpush1.bf16.msra.mxu0 0
        %4049 = vmatprep.subr.bf16.mxu0 0
        %4050 = vmatpush1.bf16.msra.mxu0 0
        %4051 = vmatprep.subr.bf16.mxu0 0
        %4052 = vmatpush1.bf16.msra.mxu0 0
        %4053 = vmatprep.subr.bf16.mxu0 0
        %4054 = vmatpush1.bf16.msra.mxu0 0
        %4055 = vmatprep.subr.bf16.mxu0 0
        %4056 = vmatpush1.bf16.msra.mxu0 0
        %4057 = vmatprep.subr.bf16.mxu0 0
        %4058 = vmatpush1.bf16.msra.mxu0 0
        %4059 = vmatprep.subr.bf16.mxu0 0
        %4060 = vmatpush1.bf16.msra.mxu0 0
        %4061 = vmatprep.subr.bf16.mxu0 0
        %4062 = vmatpush1.bf16.msra.mxu0 0
        %4063 = vmatprep.mubr.bf16.mxu0 0
        %4064 = vmatmul.mubr.bf16.gmra.mrb[0].mxu0 %v4029
        %v4065 = vpop.f32.mrb[0].mxu0
        %v4066 = vadd.f32 %v2694, %v4065
        %v4067 = vpop.f32.mrb[0].mxu0
        %v4068 = vpop.f32.mrb[0].mxu0
        %v4069 = vpop.f32.mrb[0].mxu0
        %4070 = vdwg.mxu0
        %v4071 = vadd.f32 %v3981, %v4066
        %v4072 = vsel %vm1347, %v4071, 0.0
        %4073 = vadd.xlane.f32.xlu0 %v4072
        %v4074 = vpop.xlane.xlu0 %4073
        %v4075 = vmul.f32 %v4074, %v1926
        %v4076 = vsub.f32 %v4071, %v4075
        %v4077 = vmul.f32 %v4076, %v4076
        %v4078 = vsel %vm1347, %v4077, 0.0
        %4079 = vadd.xlane.f32.xlu0 %v4078
        %v4080 = vpop.xlane.xlu0 %4079
        %v4081 = vmul.f32 %v4080, %v1926
        %v4082 = vadd.f32 %v4081, 1e-06
        %v4083 = vrsqrt.pop %v4082
        %v4084 = vmul.f32 %v4076, %v4083
        %v4085 = vmul.f32 %v4084, %v2781
        %v4086 = vadd.f32 %v4085, %v2786
        %4087 = vst.msk [vmem:[%s2789] sm:$0xff] %vm1347, %v4086
        %s4088 = sand.u32 %s41, 1
        %s4089 = scalar_lea.sflag [#allocation29], %s4088
        %s4090 = sand.u32 %s570, 1
        %s4091 = smul.addr %s4090, 64
        %s4092 = scalar_lea.vmem [#allocation28], %s4091
        %s4093 = sand.u32 %s41, 1
        %s4094 = scalar_lea.sflag [#allocation29], %s4093
        %s4095 = sand.u32 %s596, 1
        %s4096 = smul.addr %s4095, 64
        %s4097 = scalar_lea.vmem [#allocation30], %s4096
        // Predicated region
        $region185: #{tpu_custom_call.1} parent=99 // pred_check
          %p4098 = pneg %p554
        $region186: #{tpu_custom_call.1} parent=99 // pred_check_branch
          %4100 = sbr.rel (%p4098) target = $region188
        $region187: #{tpu_custom_call.1} parent=99 // pred_region
          %s4102 = ssub.s32 256, 256
          %4103 = vsyncadd [#allocation5], %s4102
          %s4104 = sshll.u32 [#allocation27], 4
          %s4105 = int_to_ptr.vmem [resolvable:$true] %s4104
          %4110 = dma.vmem_to_hbm [thread:$0]  %s4105, 256, %s20, [#allocation5], 128, 128, 8
        $region188: #{tpu_custom_call.1} parent=99 // pred_fallthru
          _
        // Predicated region
        $region189: #{tpu_custom_call.1} parent=99 // pred_check
          %p4111 = pneg %p580
        $region190: #{tpu_custom_call.1} parent=99 // pred_check_branch
          %4113 = sbr.rel (%p4111) target = $region192
        $region191: #{tpu_custom_call.1} parent=99 // pred_region
          %s4115 = ssub.s32 1024, 1024
          %4116 = vsyncadd %s4089, %s4115
          %s4117 = smul.addr %s41, 8
          %s4118 = smul.addr %s4117, 128
          %s4119 = scalar_lea.hbm %s21, %s4118
          %s4120 = sshll.u32 %s4092, 4
          %s4121 = int_to_ptr.vmem [resolvable:$true] %s4120
          %4126 = dma.vmem_to_hbm [thread:$0]  %s4121, 1024, %s4119, %s4089, 128, 128, 8
        $region192: #{tpu_custom_call.1} parent=99 // pred_fallthru
          _
        // Predicated region
        $region193: #{tpu_custom_call.1} parent=99 // pred_check
          %p4127 = pneg %p606
        $region194: #{tpu_custom_call.1} parent=99 // pred_check_branch
          %4129 = sbr.rel (%p4127) target = $region196
        $region195: #{tpu_custom_call.1} parent=99 // pred_region
          %s4131 = ssub.s32 1024, 1024
          %4132 = vsyncadd %s4094, %s4131
          %s4133 = smul.addr %s41, 8
          %s4134 = smul.addr %s4133, 128
          %s4135 = scalar_lea.hbm %s22, %s4134
          %s4136 = sshll.u32 %s4097, 4
          %s4137 = int_to_ptr.vmem [resolvable:$true] %s4136
          %4142 = dma.vmem_to_hbm [thread:$0]  %s4137, 1024, %s4135, %s4094, 128, 128, 8
        $region196: #{tpu_custom_call.1} parent=99 // pred_fallthru
          _
        // Predicated region
        $region197: #{tpu_custom_call.1} parent=99 // pred_check
          %p4143 = pneg %p554
        $region198: #{tpu_custom_call.1} parent=99 // pred_check_branch
          %4145 = sbr.rel (%p4143) target = $region200
        $region199: #{tpu_custom_call.1} parent=99 // pred_region
          %4146 = dma.done [#allocation5], 256
        $region200: #{tpu_custom_call.1} parent=99 // pred_fallthru
          _
      $region100: #{tpu_custom_call.1} parent=5 // pred_fallthru
        _
      %p4147 = scmp.le.s32.totalorder 2, %s36
      // Predicated region
      $region201: #{tpu_custom_call.1} parent=5 // pred_check
        %p4148 = pneg %p4147
      $region202: #{tpu_custom_call.1} parent=5 // pred_check_branch
        %4150 = sbr.rel (%p4148) target = $region204
      $region203: #{tpu_custom_call.1} parent=5 // pred_region
        %s4151 = ssub.s32 %s36, 2
        // Predicated region
        $region205: #{tpu_custom_call.1} parent=203 // pred_check
          %p4152 = pneg %p586
        $region206: #{tpu_custom_call.1} parent=203 // pred_check_branch
          %4154 = sbr.rel (%p4152) target = $region208
        $region207: #{tpu_custom_call.1} parent=203 // pred_region
          %s4155 = sand.u32 %s42, 1
          %s4156 = scalar_lea.sflag [#allocation29], %s4155
          %s4157 = sand.u32 %s571, 1
          %s4158 = smul.addr %s4157, 64
          %s4159 = scalar_lea.vmem [#allocation28], %s4158
          %4160 = dma.done %s4156, 1024
        $region208: #{tpu_custom_call.1} parent=203 // pred_fallthru
          _
        // Predicated region
        $region209: #{tpu_custom_call.1} parent=203 // pred_check
          %p4161 = pneg %p612
        $region210: #{tpu_custom_call.1} parent=203 // pred_check_branch
          %4163 = sbr.rel (%p4161) target = $region212
        $region211: #{tpu_custom_call.1} parent=203 // pred_region
          %s4164 = sand.u32 %s42, 1
          %s4165 = scalar_lea.sflag [#allocation29], %s4164
          %s4166 = sand.u32 %s597, 1
          %s4167 = smul.addr %s4166, 64
          %s4168 = scalar_lea.vmem [#allocation30], %s4167
          %4169 = dma.done %s4165, 1024
        $region212: #{tpu_custom_call.1} parent=203 // pred_fallthru
          _
      $region204: #{tpu_custom_call.1} parent=5 // pred_fallthru
        _
    $region6: #{tpu_custom_call.1} parent=1 // loop_footer
      %s40 = sadd.s32 1, %s36
    $region7: #{tpu_custom_call.1} parent=1 // loop_footer_branch
      %35 = sbr.rel target = $region3
    $region8: #{tpu_custom_call.1} parent=1 // loop_exit
      _
    %4170 = vsyncpa [#allocation4], 1
    %s4171 = scalar_lea.sflag [#allocation4], 1
    %4172 = vsyncpa %s4171, 1
    %4173 = vsyncpa [#allocation7], 1
    %4174 = vsyncpa [#allocation10], 1
    %4175 = vsyncpa [#allocation5], 1
    %s4176 = scalar_lea.sflag [#allocation5], 1
    %4177 = vsyncpa %s4176, 1
    %4178 = vsyncpa [#allocation29], 1
    %s4179 = scalar_lea.sflag [#allocation29], 1
    %4180 = vsyncpa %s4179, 1

</llo_original>
